<compile_context>
chip_gen: v7x
topology: tpu7x:2x2x1
jax: 0.10.0
libtpu: 0.0.40
codegen_flags: <defaults>
</compile_context>

<pallas_src>
import jax
import jax.numpy as jnp
from jax.experimental import pallas as pl
from jax.experimental.pallas import tpu as pltpu

K = 8          # STNkd "k" (small for the demo; PyTorch default is 64)
N_PTS = 16     # number of points
BATCH = 2
OUT_PAD = 128  # lane-dense padded width for the K*K = 64 output columns


def stn_kernel(x_ref,
               w1_ref, b1_ref, w2_ref, b2_ref, w3_ref, b3_ref,
               w4_ref, b4_ref, w5_ref, b5_ref, w6_ref, b6_ref,
               iden_ref, out_ref):
    # x_ref: (B*N, K) f32 channels-last. Weights bf16, biases/iden f32.
    # out_ref: (B, OUT_PAD) f32 (lane-dense padded; real data in first K*K cols).
    B = out_ref.shape[0]
    BN = x_ref.shape[0]
    N = BN // B

    def mm(a, w_ref):
        # bf16 MXU matmul with f32 accumulation.
        return jnp.dot(a.astype(jnp.bfloat16), w_ref[...],
                       preferred_element_type=jnp.float32)

    x = x_ref[...]                                               # (B*N, K)

    # conv1/2/3 (+ folded BN) + ReLU — 1x1 convs == per-point matmuls with
    # batch and points folded into M.
    h = jnp.maximum(mm(x, w1_ref) + b1_ref[...], 0.0)            # (B*N, 64)
    h = jnp.maximum(mm(h, w2_ref) + b2_ref[...], 0.0)            # (B*N, 128)
    h = jnp.maximum(mm(h, w3_ref) + b3_ref[...], 0.0)            # (B*N, 1024)

    # Global max-pool over points (torch.max(x, 2)) per batch element,
    # stacked into a (B, 1024) matrix so the FC head is a real matmul.
    pooled = [jnp.max(h[b * N:(b + 1) * N, :], axis=0, keepdims=True)
              for b in range(B)]
    g = pooled[0] if B == 1 else jnp.concatenate(pooled, axis=0)  # (B, 1024)

    # fc1 + bn4 + relu ; fc2 + bn5 + relu ; fc3 + identity.
    g = jnp.maximum(mm(g, w4_ref) + b4_ref[...], 0.0)            # (B, 512)
    g = jnp.maximum(mm(g, w5_ref) + b5_ref[...], 0.0)            # (B, 256)
    out = mm(g, w6_ref) + b6_ref[...] + iden_ref[...]            # (B, OUT_PAD)

    out_ref[...] = out


def stnkd_forward(x_bcn, params):
    """x_bcn: (B, K, N) float32, PyTorch Conv1d layout. Returns (B, K, K)."""
    x = jnp.transpose(x_bcn, (0, 2, 1)).astype(jnp.float32)      # (B, N, K)
    B, N, Cin = x.shape
    x_flat = x.reshape(B * N, Cin)                               # fold batch into M

    n_in = 1 + len(params)
    in_specs = [pl.BlockSpec(memory_space=pltpu.MemorySpace.VMEM)
                for _ in range(n_in)]
    out_specs = pl.BlockSpec(memory_space=pltpu.MemorySpace.VMEM)

    out_pad = pl.pallas_call(
        stn_kernel,
        out_shape=jax.ShapeDtypeStruct((B, OUT_PAD), jnp.float32),
        in_specs=in_specs,
        out_specs=out_specs,
    )(x_flat, *params)
    return out_pad[:, :K * K].reshape(B, K, K)


# ---------------- deterministic parameter construction ----------------

def _init_linear(key, cin, cout, scale=0.1):
    kw, kb = jax.random.split(key)
    w = scale * jax.random.normal(kw, (cin, cout), jnp.float32)
    b = scale * jax.random.normal(kb, (1, cout), jnp.float32)
    return w, b


def _init_bn(key, c):
    kg, kb, km, kv = jax.random.split(key, 4)
    gamma = 1.0 + 0.1 * jax.random.normal(kg, (c,), jnp.float32)
    beta = 0.1 * jax.random.normal(kb, (c,), jnp.float32)
    mean = 0.1 * jax.random.normal(km, (c,), jnp.float32)
    var = jnp.abs(1.0 + 0.1 * jax.random.normal(kv, (c,), jnp.float32))
    return gamma, beta, mean, var


def _fold_bn(w, b, gamma, beta, mean, var, eps=1e-5):
    s = gamma / jnp.sqrt(var + eps)
    return w * s[None, :], (b - mean[None, :]) * s[None, :] + beta[None, :]


def make_params(key):
    keys = jax.random.split(key, 12)
    dims = [(K, 64), (64, 128), (128, 1024), (1024, 512), (512, 256), (256, K * K)]
    params = []
    for i, (cin, cout) in enumerate(dims):
        w, b = _init_linear(keys[2 * i], cin, cout)
        if i < 5:  # conv1-3 + fc1-2 have BatchNorm; fc3 does not
            g, bt, m, v = _init_bn(keys[2 * i + 1], cout)
            w, b = _fold_bn(w, b, g, bt, m, v)
        if i == 5:
            # Pad the head output width to a lane-dense OUT_PAD columns.
            w = jnp.pad(w, ((0, 0), (0, OUT_PAD - K * K)))
            b = jnp.pad(b, ((0, 0), (0, OUT_PAD - K * K)))
        params.extend([w.astype(jnp.bfloat16), b.astype(jnp.float32)])
    iden = jnp.eye(K, dtype=jnp.float32).reshape(1, K * K)
    iden = jnp.pad(iden, ((0, 0), (0, OUT_PAD - K * K)))
    params.append(iden)
    return params


def reference_forward(x_bcn, params):
    """Pure-JAX reference mirroring the kernel's math (BN folded, bf16 weights)."""
    (w1, b1, w2, b2, w3, b3, w4, b4, w5, b5, w6, b6, iden) = params
    x = jnp.transpose(x_bcn, (0, 2, 1)).astype(jnp.float32)      # (B, N, K)
    B, N, _ = x.shape

    def mm(a, w):
        return jnp.dot(a.astype(jnp.bfloat16), w,
                       preferred_element_type=jnp.float32)

    h = x.reshape(B * N, -1)
    h = jax.nn.relu(mm(h, w1) + b1)
    h = jax.nn.relu(mm(h, w2) + b2)
    h = jax.nn.relu(mm(h, w3) + b3)
    g = jnp.max(h.reshape(B, N, -1), axis=1)                      # (B, 1024)
    g = jax.nn.relu(mm(g, w4) + b4)
    g = jax.nn.relu(mm(g, w5) + b5)
    out = mm(g, w6) + b6 + iden
    return out[:, :K * K].reshape(B, K, K)


if __name__ == "__main__":
    key = jax.random.PRNGKey(0)
    k_x, k_p = jax.random.split(key)
    # PyTorch-style input: (batch, channels=k, num_points)
    x = jax.random.normal(k_x, (BATCH, K, N_PTS), jnp.float32)
    params = make_params(k_p)

    out = stnkd_forward(x, params)
    out = jax.block_until_ready(out)

    ref = reference_forward(x, params)
    assert out.shape == (BATCH, K, K)
    assert jnp.allclose(out, ref, atol=2e-3, rtol=2e-3), "mismatch vs JAX reference"
    print("KERNEL_OK")
</pallas_src>

<mosaic_0001>
module attributes {stable_mosaic.version = 11 : i64} {
  func.func @stn_kernel(%arg0: memref<32x8xf32, #tpu.memory_space<vmem>>, %arg1: memref<8x64xbf16, #tpu.memory_space<vmem>>, %arg2: memref<1x64xf32, #tpu.memory_space<vmem>>, %arg3: memref<64x128xbf16, #tpu.memory_space<vmem>>, %arg4: memref<1x128xf32, #tpu.memory_space<vmem>>, %arg5: memref<128x1024xbf16, #tpu.memory_space<vmem>>, %arg6: memref<1x1024xf32, #tpu.memory_space<vmem>>, %arg7: memref<1024x512xbf16, #tpu.memory_space<vmem>>, %arg8: memref<1x512xf32, #tpu.memory_space<vmem>>, %arg9: memref<512x256xbf16, #tpu.memory_space<vmem>>, %arg10: memref<1x256xf32, #tpu.memory_space<vmem>>, %arg11: memref<256x128xbf16, #tpu.memory_space<vmem>>, %arg12: memref<1x128xf32, #tpu.memory_space<vmem>>, %arg13: memref<1x128xf32, #tpu.memory_space<vmem>>, %arg14: memref<2x128xf32, #tpu.memory_space<vmem>>) attributes {dimension_semantics = [], scalar_prefetch = 0 : i64, scratch_operands = 0 : i64, tpu.core_type = #tpu.core_type<tc>} {
    %c0 = arith.constant 0 : index
    %c0_0 = arith.constant 0 : index
    %0 = vector.load %arg0[%c0, %c0_0] : memref<32x8xf32, #tpu.memory_space<vmem>>, vector<32x8xf32>
    %1 = arith.truncf %0 : vector<32x8xf32> to vector<32x8xbf16>
    %c0_1 = arith.constant 0 : index
    %c0_2 = arith.constant 0 : index
    %2 = vector.load %arg1[%c0_1, %c0_2] : memref<8x64xbf16, #tpu.memory_space<vmem>>, vector<8x64xbf16>
    %cst = arith.constant dense<0.000000e+00> : vector<32x64xf32>
    %3 = tpu.matmul %1, %2, %cst {dimension_numbers = #tpu.dot_dimension_numbers<[1], [0], [0], [1], [0, 0, 1, 1], [], []>} : vector<32x8xbf16>, vector<8x64xbf16>, vector<32x64xf32> -> vector<32x64xf32>
    %c0_3 = arith.constant 0 : index
    %c0_4 = arith.constant 0 : index
    %4 = vector.load %arg2[%c0_3, %c0_4] : memref<1x64xf32, #tpu.memory_space<vmem>>, vector<1x64xf32>
    %5 = vector.broadcast %4 : vector<1x64xf32> to vector<32x64xf32>
    %6 = arith.addf %3, %5 : vector<32x64xf32>
    %cst_5 = arith.constant 0.000000e+00 : f32
    %7 = vector.broadcast %cst_5 : f32 to vector<32x64xf32>
    %8 = arith.maximumf %6, %7 : vector<32x64xf32>
    %9 = arith.truncf %8 : vector<32x64xf32> to vector<32x64xbf16>
    %c0_6 = arith.constant 0 : index
    %c0_7 = arith.constant 0 : index
    %10 = vector.load %arg3[%c0_6, %c0_7] : memref<64x128xbf16, #tpu.memory_space<vmem>>, vector<64x128xbf16>
    %cst_8 = arith.constant dense<0.000000e+00> : vector<32x128xf32>
    %11 = tpu.matmul %9, %10, %cst_8 {dimension_numbers = #tpu.dot_dimension_numbers<[1], [0], [0], [1], [0, 0, 1, 1], [], []>} : vector<32x64xbf16>, vector<64x128xbf16>, vector<32x128xf32> -> vector<32x128xf32>
    %c0_9 = arith.constant 0 : index
    %c0_10 = arith.constant 0 : index
    %12 = vector.load %arg4[%c0_9, %c0_10] : memref<1x128xf32, #tpu.memory_space<vmem>>, vector<1x128xf32>
    %13 = vector.broadcast %12 : vector<1x128xf32> to vector<32x128xf32>
    %14 = arith.addf %11, %13 : vector<32x128xf32>
    %cst_11 = arith.constant 0.000000e+00 : f32
    %15 = vector.broadcast %cst_11 : f32 to vector<32x128xf32>
    %16 = arith.maximumf %14, %15 : vector<32x128xf32>
    %17 = arith.truncf %16 : vector<32x128xf32> to vector<32x128xbf16>
    %c0_12 = arith.constant 0 : index
    %c0_13 = arith.constant 0 : index
    %18 = vector.load %arg5[%c0_12, %c0_13] : memref<128x1024xbf16, #tpu.memory_space<vmem>>, vector<128x1024xbf16>
    %cst_14 = arith.constant dense<0.000000e+00> : vector<32x1024xf32>
    %19 = tpu.matmul %17, %18, %cst_14 {dimension_numbers = #tpu.dot_dimension_numbers<[1], [0], [0], [1], [0, 0, 1, 1], [], []>} : vector<32x128xbf16>, vector<128x1024xbf16>, vector<32x1024xf32> -> vector<32x1024xf32>
    %c0_15 = arith.constant 0 : index
    %c0_16 = arith.constant 0 : index
    %20 = vector.load %arg6[%c0_15, %c0_16] : memref<1x1024xf32, #tpu.memory_space<vmem>>, vector<1x1024xf32>
    %21 = vector.broadcast %20 : vector<1x1024xf32> to vector<32x1024xf32>
    %22 = arith.addf %19, %21 : vector<32x1024xf32>
    %cst_17 = arith.constant 0.000000e+00 : f32
    %23 = vector.broadcast %cst_17 : f32 to vector<32x1024xf32>
    %24 = arith.maximumf %22, %23 : vector<32x1024xf32>
    %25 = vector.extract_strided_slice %24 {offsets = [0, 0], sizes = [16, 1024], strides = [1, 1]} : vector<32x1024xf32> to vector<16x1024xf32>
    %cst_18 = arith.constant dense<0xFF800000> : vector<1024xf32>
    %26 = vector.multi_reduction <maximumf>, %25, %cst_18 [0] : vector<16x1024xf32> to vector<1024xf32>
    %27 = vector.shape_cast %26 : vector<1024xf32> to vector<1x1024xf32>
    %28 = vector.extract_strided_slice %24 {offsets = [16, 0], sizes = [16, 1024], strides = [1, 1]} : vector<32x1024xf32> to vector<16x1024xf32>
    %cst_19 = arith.constant dense<0xFF800000> : vector<1024xf32>
    %29 = vector.multi_reduction <maximumf>, %28, %cst_19 [0] : vector<16x1024xf32> to vector<1024xf32>
    %30 = vector.shape_cast %29 : vector<1024xf32> to vector<1x1024xf32>
    %31 = tpu.concatenate %27, %30 in 0 : vector<1x1024xf32>, vector<1x1024xf32> -> vector<2x1024xf32>
    %32 = arith.truncf %31 : vector<2x1024xf32> to vector<2x1024xbf16>
    %c0_20 = arith.constant 0 : index
    %c0_21 = arith.constant 0 : index
    %33 = vector.load %arg7[%c0_20, %c0_21] : memref<1024x512xbf16, #tpu.memory_space<vmem>>, vector<1024x512xbf16>
    %cst_22 = arith.constant dense<0.000000e+00> : vector<2x512xf32>
    %34 = tpu.matmul %32, %33, %cst_22 {dimension_numbers = #tpu.dot_dimension_numbers<[1], [0], [0], [1], [0, 0, 1, 1], [], []>} : vector<2x1024xbf16>, vector<1024x512xbf16>, vector<2x512xf32> -> vector<2x512xf32>
    %c0_23 = arith.constant 0 : index
    %c0_24 = arith.constant 0 : index
    %35 = vector.load %arg8[%c0_23, %c0_24] : memref<1x512xf32, #tpu.memory_space<vmem>>, vector<1x512xf32>
    %36 = vector.broadcast %35 : vector<1x512xf32> to vector<2x512xf32>
    %37 = arith.addf %34, %36 : vector<2x512xf32>
    %cst_25 = arith.constant 0.000000e+00 : f32
    %38 = vector.broadcast %cst_25 : f32 to vector<2x512xf32>
    %39 = arith.maximumf %37, %38 : vector<2x512xf32>
    %40 = arith.truncf %39 : vector<2x512xf32> to vector<2x512xbf16>
    %c0_26 = arith.constant 0 : index
    %c0_27 = arith.constant 0 : index
    %41 = vector.load %arg9[%c0_26, %c0_27] : memref<512x256xbf16, #tpu.memory_space<vmem>>, vector<512x256xbf16>
    %cst_28 = arith.constant dense<0.000000e+00> : vector<2x256xf32>
    %42 = tpu.matmul %40, %41, %cst_28 {dimension_numbers = #tpu.dot_dimension_numbers<[1], [0], [0], [1], [0, 0, 1, 1], [], []>} : vector<2x512xbf16>, vector<512x256xbf16>, vector<2x256xf32> -> vector<2x256xf32>
    %c0_29 = arith.constant 0 : index
    %c0_30 = arith.constant 0 : index
    %43 = vector.load %arg10[%c0_29, %c0_30] : memref<1x256xf32, #tpu.memory_space<vmem>>, vector<1x256xf32>
    %44 = vector.broadcast %43 : vector<1x256xf32> to vector<2x256xf32>
    %45 = arith.addf %42, %44 : vector<2x256xf32>
    %cst_31 = arith.constant 0.000000e+00 : f32
    %46 = vector.broadcast %cst_31 : f32 to vector<2x256xf32>
    %47 = arith.maximumf %45, %46 : vector<2x256xf32>
    %48 = arith.truncf %47 : vector<2x256xf32> to vector<2x256xbf16>
    %c0_32 = arith.constant 0 : index
    %c0_33 = arith.constant 0 : index
    %49 = vector.load %arg11[%c0_32, %c0_33] : memref<256x128xbf16, #tpu.memory_space<vmem>>, vector<256x128xbf16>
    %cst_34 = arith.constant dense<0.000000e+00> : vector<2x128xf32>
    %50 = tpu.matmul %48, %49, %cst_34 {dimension_numbers = #tpu.dot_dimension_numbers<[1], [0], [0], [1], [0, 0, 1, 1], [], []>} : vector<2x256xbf16>, vector<256x128xbf16>, vector<2x128xf32> -> vector<2x128xf32>
    %c0_35 = arith.constant 0 : index
    %c0_36 = arith.constant 0 : index
    %51 = vector.load %arg12[%c0_35, %c0_36] : memref<1x128xf32, #tpu.memory_space<vmem>>, vector<1x128xf32>
    %52 = vector.broadcast %51 : vector<1x128xf32> to vector<2x128xf32>
    %53 = arith.addf %50, %52 : vector<2x128xf32>
    %c0_37 = arith.constant 0 : index
    %c0_38 = arith.constant 0 : index
    %54 = vector.load %arg13[%c0_37, %c0_38] : memref<1x128xf32, #tpu.memory_space<vmem>>, vector<1x128xf32>
    %55 = vector.broadcast %54 : vector<1x128xf32> to vector<2x128xf32>
    %56 = arith.addf %53, %55 : vector<2x128xf32>
    %c0_39 = arith.constant 0 : index
    %c0_40 = arith.constant 0 : index
    %57 = vector.load %arg14[%c0_39, %c0_40] : memref<2x128xf32, #tpu.memory_space<vmem>>, vector<2x128xf32>
    tpu.vector_store %arg14[%c0_39, %c0_40], %56 {strides = array<i32>} : memref<2x128xf32, #tpu.memory_space<vmem>>, vector<2x128xf32>,
    return
  }
}

</mosaic_0001>

<llo_original>
// kernel: tpu_custom_call.1
$region0: #{tpu_custom_call.1}
  #allocation0 [shape = 'u32[]', space=smem, size = 0x4, offset = 0x4, fixed_abs, tag = 'smem constant byte address 0x4 - core index']
  #allocation1 [shape = 'u32[144,128]{1,0:T(1,128)}', space=vmem, size = 0x12000, scoped, tag = 'internal scratch']
  %s0 = inlined_call_operand.vmem [shape: f32[32,8], index: 0, kind: input, shape index: {}]
  %s1 = inlined_call_operand.vmem [shape: bf16[8,64], index: 1, kind: input, shape index: {}]
  %s2 = inlined_call_operand.vmem [shape: f32[1,64], index: 2, kind: input, shape index: {}]
  %s3 = inlined_call_operand.vmem [shape: bf16[64,128], index: 3, kind: input, shape index: {}]
  %s4 = inlined_call_operand.vmem [shape: f32[1,128], index: 4, kind: input, shape index: {}]
  %s5 = inlined_call_operand.hbm [shape: bf16[128,1024], index: 5, kind: input, shape index: {}]
  %s6 = inlined_call_operand.vmem [shape: f32[1,1024], index: 6, kind: input, shape index: {}]
  %s7 = inlined_call_operand.hbm [shape: bf16[1024,512], index: 7, kind: input, shape index: {}]
  %s8 = inlined_call_operand.vmem [shape: f32[1,512], index: 8, kind: input, shape index: {}]
  %s9 = inlined_call_operand.hbm [shape: bf16[512,256], index: 9, kind: input, shape index: {}]
  %s10 = inlined_call_operand.vmem [shape: f32[1,256], index: 10, kind: input, shape index: {}]
  %s11 = inlined_call_operand.hbm [shape: bf16[256,128], index: 11, kind: input, shape index: {}]
  %s12 = inlined_call_operand.vmem [shape: f32[1,128], index: 12, kind: input, shape index: {}]
  %s13 = inlined_call_operand.vmem [shape: f32[1,128], index: 13, kind: input, shape index: {}]
  %s14 = inlined_call_operand.hbm [shape: f32[2,128], index: 14, kind: output, shape index: {}]
  %s15 = sld [smem:[#allocation0]]
  $region82: #{tpu_custom_call.1} parent=0
    _
  %s17 = ssub.s32 1, %s15
  %s18 = scalar_select 0, %s17, %s15
  $region1: #{tpu_custom_call.1} parent=0
    #allocation2 [shape = 'u8[262144]{0}', space=vmem, size = 0x40000, scoped, tag = 'input window, operand 5, single buffered']
    #allocation3 [shape = 's32[1]{0}', space=sflag, size = 0x4, scoped, tag = 'scoped memory for tpu_custom_call.1']
    #allocation4 [shape = 's32[1]{0}', space=sflag, size = 0x4, scoped, tag = 'scoped memory for tpu_custom_call.1']
    #allocation5 [shape = 'u8[1048576]{0}', space=vmem, size = 0x100000, scoped, tag = 'input window, operand 7, single buffered']
    #allocation6 [shape = 's32[1]{0}', space=sflag, size = 0x4, scoped, tag = 'scoped memory for tpu_custom_call.1']
    #allocation7 [shape = 'u8[262144]{0}', space=vmem, size = 0x40000, scoped, tag = 'input window, operand 9, single buffered']
    #allocation8 [shape = 'u8[65536]{0}', space=vmem, size = 0x10000, scoped, tag = 'input window, operand 11, single buffered']
    #allocation9 [shape = 's32[1]{0}', space=sflag, size = 0x4, scoped, tag = 'scoped memory for tpu_custom_call.1']
    #allocation10 [shape = 'u8[1024]{0}', space=vmem, size = 0x400, scoped, tag = 'output window, operand 0, single buffered']
    %19 = vsyncpa [#allocation3], 0
    %20 = vsyncpa [#allocation6], 0
    %21 = vsyncpa [#allocation9], 0
    %22 = vsyncpa [#allocation4], 0
    // Predicated region
    $region2: #{tpu_custom_call.1} parent=1 // pred_check
      _
    $region3: #{tpu_custom_call.1} parent=1 // pred_check_branch
      %24 = sbr.rel (0) target = $region5
    $region4: #{tpu_custom_call.1} parent=1 // pred_region
      _
    $region5: #{tpu_custom_call.1} parent=1 // pred_fallthru
      _
    // Predicated region
    $region6: #{tpu_custom_call.1} parent=1 // pred_check
      _
    $region7: #{tpu_custom_call.1} parent=1 // pred_check_branch
      %26 = sbr.rel (0) target = $region9
    $region8: #{tpu_custom_call.1} parent=1 // pred_region
      _
    $region9: #{tpu_custom_call.1} parent=1 // pred_fallthru
      _
    // Predicated region
    $region10: #{tpu_custom_call.1} parent=1 // pred_check
      _
    $region11: #{tpu_custom_call.1} parent=1 // pred_check_branch
      %28 = sbr.rel (0) target = $region13
    $region12: #{tpu_custom_call.1} parent=1 // pred_region
      _
    $region13: #{tpu_custom_call.1} parent=1 // pred_fallthru
      _
    // Predicated region
    $region14: #{tpu_custom_call.1} parent=1 // pred_check
      _
    $region15: #{tpu_custom_call.1} parent=1 // pred_check_branch
      %30 = sbr.rel (0) target = $region17
    $region16: #{tpu_custom_call.1} parent=1 // pred_region
      _
    $region17: #{tpu_custom_call.1} parent=1 // pred_fallthru
      _
    // Predicated region
    $region18: #{tpu_custom_call.1} parent=1 // pred_check
      _
    $region19: #{tpu_custom_call.1} parent=1 // pred_check_branch
      %32 = sbr.rel (0) target = $region21
    $region20: #{tpu_custom_call.1} parent=1 // pred_region
      _
    $region21: #{tpu_custom_call.1} parent=1 // pred_fallthru
      _
    // Predicated region
    $region22: #{tpu_custom_call.1} parent=1 // pred_check
      _
    $region23: #{tpu_custom_call.1} parent=1 // pred_check_branch
      %34 = sbr.rel (0) target = $region25
    $region24: #{tpu_custom_call.1} parent=1 // pred_region
      %s36 = ssub.s32 8192, 8192
      %37 = vsyncadd [#allocation3], %s36
      %s38 = sshll.u32 [#allocation2], 4
      %s39 = int_to_ptr.vmem [resolvable:$true] %s38
      %44 = dma.hbm_to_vmem [thread:$0]  %s5, 8192, %s39, [#allocation3], 512, 512, 32
    $region25: #{tpu_custom_call.1} parent=1 // pred_fallthru
      _
    // Predicated region
    $region26: #{tpu_custom_call.1} parent=1 // pred_check
      _
    $region27: #{tpu_custom_call.1} parent=1 // pred_check_branch
      %46 = sbr.rel (0) target = $region29
    $region28: #{tpu_custom_call.1} parent=1 // pred_region
      _
    $region29: #{tpu_custom_call.1} parent=1 // pred_fallthru
      _
    // Predicated region
    $region30: #{tpu_custom_call.1} parent=1 // pred_check
      _
    $region31: #{tpu_custom_call.1} parent=1 // pred_check_branch
      %48 = sbr.rel (0) target = $region33
    $region32: #{tpu_custom_call.1} parent=1 // pred_region
      %s50 = ssub.s32 32768, 32768
      %51 = vsyncadd [#allocation6], %s50
      %s52 = sshll.u32 [#allocation5], 4
      %s53 = int_to_ptr.vmem [resolvable:$true] %s52
      %58 = dma.hbm_to_vmem [thread:$0]  %s7, 32768, %s53, [#allocation6], 256, 256, 16
    $region33: #{tpu_custom_call.1} parent=1 // pred_fallthru
      _
    // Predicated region
    $region34: #{tpu_custom_call.1} parent=1 // pred_check
      _
    $region35: #{tpu_custom_call.1} parent=1 // pred_check_branch
      %60 = sbr.rel (0) target = $region37
    $region36: #{tpu_custom_call.1} parent=1 // pred_region
      _
    $region37: #{tpu_custom_call.1} parent=1 // pred_fallthru
      _
    // Predicated region
    $region38: #{tpu_custom_call.1} parent=1 // pred_check
      _
    $region39: #{tpu_custom_call.1} parent=1 // pred_check_branch
      %62 = sbr.rel (0) target = $region41
    $region40: #{tpu_custom_call.1} parent=1 // pred_region
      %s64 = ssub.s32 8192, 8192
      %65 = vsyncadd [#allocation6], %s64
      %s66 = sshll.u32 [#allocation7], 4
      %s67 = int_to_ptr.vmem [resolvable:$true] %s66
      %72 = dma.hbm_to_vmem [thread:$0]  %s9, 8192, %s67, [#allocation6], 128, 128, 8
    $region41: #{tpu_custom_call.1} parent=1 // pred_fallthru
      _
    // Predicated region
    $region42: #{tpu_custom_call.1} parent=1 // pred_check
      _
    $region43: #{tpu_custom_call.1} parent=1 // pred_check_branch
      %74 = sbr.rel (0) target = $region45
    $region44: #{tpu_custom_call.1} parent=1 // pred_region
      _
    $region45: #{tpu_custom_call.1} parent=1 // pred_fallthru
      _
    // Predicated region
    $region46: #{tpu_custom_call.1} parent=1 // pred_check
      _
    $region47: #{tpu_custom_call.1} parent=1 // pred_check_branch
      %76 = sbr.rel (0) target = $region49
    $region48: #{tpu_custom_call.1} parent=1 // pred_region
      %s78 = ssub.s32 2048, 2048
      %79 = vsyncadd [#allocation9], %s78
      %s80 = sshll.u32 [#allocation8], 4
      %s81 = int_to_ptr.vmem [resolvable:$true] %s80
      %86 = dma.hbm_to_vmem [thread:$0]  %s11, 2048, %s81, [#allocation9], 64, 64, 4
    $region49: #{tpu_custom_call.1} parent=1 // pred_fallthru
      _
    // Predicated region
    $region50: #{tpu_custom_call.1} parent=1 // pred_check
      _
    $region51: #{tpu_custom_call.1} parent=1 // pred_check_branch
      %88 = sbr.rel (0) target = $region53
    $region52: #{tpu_custom_call.1} parent=1 // pred_region
      _
    $region53: #{tpu_custom_call.1} parent=1 // pred_fallthru
      _
    // Predicated region
    $region54: #{tpu_custom_call.1} parent=1 // pred_check
      _
    $region55: #{tpu_custom_call.1} parent=1 // pred_check_branch
      %90 = sbr.rel (0) target = $region57
    $region56: #{tpu_custom_call.1} parent=1 // pred_region
      _
    $region57: #{tpu_custom_call.1} parent=1 // pred_fallthru
      _
    // Predicated region
    $region58: #{tpu_custom_call.1} parent=1 // pred_check
      _
    $region59: #{tpu_custom_call.1} parent=1 // pred_check_branch
      %92 = sbr.rel (0) target = $region61
    $region60: #{tpu_custom_call.1} parent=1 // pred_region
      %93 = dma.done [#allocation3], 8192
    $region61: #{tpu_custom_call.1} parent=1 // pred_fallthru
      _
    // Predicated region
    $region62: #{tpu_custom_call.1} parent=1 // pred_check
      _
    $region63: #{tpu_custom_call.1} parent=1 // pred_check_branch
      %95 = sbr.rel (0) target = $region65
    $region64: #{tpu_custom_call.1} parent=1 // pred_region
      %96 = dma.done [#allocation6], 32768
    $region65: #{tpu_custom_call.1} parent=1 // pred_fallthru
      _
    // Predicated region
    $region66: #{tpu_custom_call.1} parent=1 // pred_check
      _
    $region67: #{tpu_custom_call.1} parent=1 // pred_check_branch
      %98 = sbr.rel (0) target = $region69
    $region68: #{tpu_custom_call.1} parent=1 // pred_region
      %99 = dma.done [#allocation6], 8192
    $region69: #{tpu_custom_call.1} parent=1 // pred_fallthru
      _
    // Predicated region
    $region70: #{tpu_custom_call.1} parent=1 // pred_check
      _
    $region71: #{tpu_custom_call.1} parent=1 // pred_check_branch
      %101 = sbr.rel (0) target = $region73
    $region72: #{tpu_custom_call.1} parent=1 // pred_region
      %102 = dma.done [#allocation9], 2048
    $region73: #{tpu_custom_call.1} parent=1 // pred_fallthru
      _
    %v104 = vld [vmem:[%s0] sm:$0xff]
    %v105 = vld [vmem:[%s0 + $0x8] sm:$0xff]
    %v106 = vld [vmem:[%s0 + $0x10] sm:$0xff]
    %v107 = vld [vmem:[%s0 + $0x18] sm:$0xff]
    %v108 = vpack.c.bf16 %v105, %v104
    %v109 = vpack.c.bf16 %v107, %v106
    %v110 = vld [vmem:[%s1] sm:$0xf]
    %v111 = vld [vmem:[%s2] sm:$0x1]
    %v113 = vlaneseq
    %v114 = vshrl.u32 %v113, 7
    %v115 = vsub.s32 0, %v114
    %v116 = vrot.slane %v111, %v115
    %vm118 = vcmask 64512
    %v120 = vsel %vm118, %v108, 0
    %v123 = vsel %vm118, %v109, 0
    %vm125 = vcmask 1043456
    %v127 = vsel %vm125, %v110, 0
    %129 = vmatprep.subr.bf16.mxu0 0
    %130 = vmatpush1.bf16.msra.mxu0 %v127
    %131 = vmatprep.subr.bf16.mxu0 0
    %132 = vmatpush1.bf16.msra.mxu0 0
    %133 = vmatprep.subr.bf16.mxu0 0
    %134 = vmatpush1.bf16.msra.mxu0 0
    %135 = vmatprep.subr.bf16.mxu0 0
    %136 = vmatpush1.bf16.msra.mxu0 0
    %137 = vmatprep.subr.bf16.mxu0 0
    %138 = vmatpush1.bf16.msra.mxu0 0
    %139 = vmatprep.subr.bf16.mxu0 0
    %140 = vmatpush1.bf16.msra.mxu0 0
    %141 = vmatprep.subr.bf16.mxu0 0
    %142 = vmatpush1.bf16.msra.mxu0 0
    %143 = vmatprep.subr.bf16.mxu0 0
    %144 = vmatpush1.bf16.msra.mxu0 0
    %145 = vmatprep.subr.bf16.mxu0 0
    %146 = vmatpush1.bf16.msra.mxu0 0
    %147 = vmatprep.subr.bf16.mxu0 0
    %148 = vmatpush1.bf16.msra.mxu0 0
    %149 = vmatprep.subr.bf16.mxu0 0
    %150 = vmatpush1.bf16.msra.mxu0 0
    %151 = vmatprep.subr.bf16.mxu0 0
    %152 = vmatpush1.bf16.msra.mxu0 0
    %153 = vmatprep.subr.bf16.mxu0 0
    %154 = vmatpush1.bf16.msra.mxu0 0
    %155 = vmatprep.subr.bf16.mxu0 0
    %156 = vmatpush1.bf16.msra.mxu0 0
    %157 = vmatprep.subr.bf16.mxu0 0
    %158 = vmatpush1.bf16.msra.mxu0 0
    %159 = vmatprep.subr.bf16.mxu0 0
    %160 = vmatpush1.bf16.msra.mxu0 0
    %161 = vmatprep.mubr.bf16.mxu0 0
    %162 = vmatmul.mubr.bf16.gmra.mrb[0].mxu0 %v120
    %v163 = vpop.f32.mrb[0].mxu0
    %v164 = vadd.f32 %v116, %v163
    %v165 = vpop.f32.mrb[0].mxu0
    %v166 = vpop.f32.mrb[0].mxu0
    %v167 = vadd.f32 %v116, %v166
    %v168 = vpop.f32.mrb[0].mxu0
    %169 = vmatprep.mubr.bf16.mxu0 0
    %170 = vmatmul.mubr.bf16.gmra.mrb[0].mxu0 %v123
    %v171 = vpop.f32.mrb[0].mxu0
    %v172 = vadd.f32 %v116, %v171
    %v173 = vpop.f32.mrb[0].mxu0
    %v174 = vpop.f32.mrb[0].mxu0
    %v175 = vadd.f32 %v116, %v174
    %v176 = vpop.f32.mrb[0].mxu0
    %177 = vdwg.mxu0
    %v178 = vmax.f32 %v164, 0.0
    %v179 = vmax.f32 %v167, 0.0
    %v180 = vmax.f32 %v172, 0.0
    %v181 = vmax.f32 %v175, 0.0
    %v182 = vpack.c.bf16 %v179, %v178
    %v183 = vpack.c.bf16 %v181, %v180
    %v184 = vld [vmem:[%s3] sm:$0xf]
    %v185 = vld [vmem:[%s3 + $0x4] sm:$0xf]
    %v186 = vld [vmem:[%s3 + $0x8] sm:$0xf]
    %v187 = vld [vmem:[%s3 + $0xc] sm:$0xf]
    %v188 = vld [vmem:[%s3 + $0x10] sm:$0xf]
    %v189 = vld [vmem:[%s3 + $0x14] sm:$0xf]
    %v190 = vld [vmem:[%s3 + $0x18] sm:$0xf]
    %v191 = vld [vmem:[%s3 + $0x1c] sm:$0xf]
    %v192 = vld [vmem:[%s4] sm:$0x1]
    %v194 = vlaneseq
    %v195 = vshrl.u32 %v194, 7
    %v196 = vsub.s32 0, %v195
    %v197 = vrot.slane %v192, %v196
    %v207 = vunpack.c.l.b16 %v184
    %v208 = vunpack.c.l.b16 %v185
    %v209 = vunpack.c.l.b16 %v186
    %v210 = vunpack.c.l.b16 %v187
    %v211 = vunpack.c.l.b16 %v188
    %v212 = vunpack.c.l.b16 %v189
    %v213 = vunpack.c.l.b16 %v190
    %v214 = vunpack.c.l.b16 %v191
    %v215 = vpack.c.b16 %v208, %v207
    %v216 = vpack.c.b16 %v210, %v209
    %v217 = vpack.c.b16 %v212, %v211
    %v218 = vpack.c.b16 %v214, %v213
    %vm223 = vcmask 523264
    %v225 = vsel %vm223, %v182, 0
    %v228 = vsel %vm223, %v183, 0
    %230 = vmatprep.subr.bf16.mxu0 0
    %231 = vmatpush1.bf16.msra.mxu0 %v215
    %232 = vmatprep.subr.bf16.mxu0 0
    %233 = vmatpush1.bf16.msra.mxu0 %v216
    %234 = vmatprep.subr.bf16.mxu0 0
    %235 = vmatpush1.bf16.msra.mxu0 %v217
    %236 = vmatprep.subr.bf16.mxu0 0
    %237 = vmatpush1.bf16.msra.mxu0 %v218
    %238 = vmatprep.subr.bf16.mxu0 0
    %239 = vmatpush1.bf16.msra.mxu0 0
    %240 = vmatprep.subr.bf16.mxu0 0
    %241 = vmatpush1.bf16.msra.mxu0 0
    %242 = vmatprep.subr.bf16.mxu0 0
    %243 = vmatpush1.bf16.msra.mxu0 0
    %244 = vmatprep.subr.bf16.mxu0 0
    %245 = vmatpush1.bf16.msra.mxu0 0
    %246 = vmatprep.subr.bf16.mxu0 0
    %247 = vmatpush1.bf16.msra.mxu0 0
    %248 = vmatprep.subr.bf16.mxu0 0
    %249 = vmatpush1.bf16.msra.mxu0 0
    %250 = vmatprep.subr.bf16.mxu0 0
    %251 = vmatpush1.bf16.msra.mxu0 0
    %252 = vmatprep.subr.bf16.mxu0 0
    %253 = vmatpush1.bf16.msra.mxu0 0
    %254 = vmatprep.subr.bf16.mxu0 0
    %255 = vmatpush1.bf16.msra.mxu0 0
    %256 = vmatprep.subr.bf16.mxu0 0
    %257 = vmatpush1.bf16.msra.mxu0 0
    %258 = vmatprep.subr.bf16.mxu0 0
    %259 = vmatpush1.bf16.msra.mxu0 0
    %260 = vmatprep.subr.bf16.mxu0 0
    %261 = vmatpush1.bf16.msra.mxu0 0
    %262 = vmatprep.mubr.bf16.mxu0 0
    %263 = vmatmul.mubr.bf16.gmra.mrb[0].mxu0 %v225
    %v264 = vpop.f32.mrb[0].mxu0
    %v265 = vadd.f32 %v197, %v264
    %v266 = vpop.f32.mrb[0].mxu0
    %v267 = vpop.f32.mrb[0].mxu0
    %v268 = vadd.f32 %v197, %v267
    %v269 = vpop.f32.mrb[0].mxu0
    %270 = vmatprep.mubr.bf16.mxu0 0
    %271 = vmatmul.mubr.bf16.gmra.mrb[0].mxu0 %v228
    %v272 = vpop.f32.mrb[0].mxu0
    %v273 = vadd.f32 %v197, %v272
    %v274 = vpop.f32.mrb[0].mxu0
    %v275 = vpop.f32.mrb[0].mxu0
    %v276 = vadd.f32 %v197, %v275
    %v277 = vpop.f32.mrb[0].mxu0
    %278 = vdwg.mxu0
    %v279 = vmax.f32 %v265, 0.0
    %v280 = vmax.f32 %v268, 0.0
    %v281 = vmax.f32 %v273, 0.0
    %v282 = vmax.f32 %v276, 0.0
    %v283 = vpack.c.bf16 %v280, %v279
    %v284 = vpack.c.bf16 %v282, %v281
    %v285 = vld [vmem:[#allocation2] sm:$0xff]
    %v286 = vld [vmem:[#allocation2 + $0x8] sm:$0xff]
    %v287 = vld [vmem:[#allocation2 + $0x10] sm:$0xff]
    %v288 = vld [vmem:[#allocation2 + $0x18] sm:$0xff]
    %v289 = vld [vmem:[#allocation2 + $0x20] sm:$0xff]
    %v290 = vld [vmem:[#allocation2 + $0x28] sm:$0xff]
    %v291 = vld [vmem:[#allocation2 + $0x30] sm:$0xff]
    %v292 = vld [vmem:[#allocation2 + $0x38] sm:$0xff]
    %v293 = vld [vmem:[#allocation2 + $0x40] sm:$0xff]
    %v294 = vld [vmem:[#allocation2 + $0x48] sm:$0xff]
    %v295 = vld [vmem:[#allocation2 + $0x50] sm:$0xff]
    %v296 = vld [vmem:[#allocation2 + $0x58] sm:$0xff]
    %v297 = vld [vmem:[#allocation2 + $0x60] sm:$0xff]
    %v298 = vld [vmem:[#allocation2 + $0x68] sm:$0xff]
    %v299 = vld [vmem:[#allocation2 + $0x70] sm:$0xff]
    %v300 = vld [vmem:[#allocation2 + $0x78] sm:$0xff]
    %v301 = vld [vmem:[#allocation2 + $0x80] sm:$0xff]
    %v302 = vld [vmem:[#allocation2 + $0x88] sm:$0xff]
    %v303 = vld [vmem:[#allocation2 + $0x90] sm:$0xff]
    %v304 = vld [vmem:[#allocation2 + $0x98] sm:$0xff]
    %v305 = vld [vmem:[#allocation2 + $0xa0] sm:$0xff]
    %v306 = vld [vmem:[#allocation2 + $0xa8] sm:$0xff]
    %v307 = vld [vmem:[#allocation2 + $0xb0] sm:$0xff]
    %v308 = vld [vmem:[#allocation2 + $0xb8] sm:$0xff]
    %v309 = vld [vmem:[#allocation2 + $0xc0] sm:$0xff]
    %v310 = vld [vmem:[#allocation2 + $0xc8] sm:$0xff]
    %v311 = vld [vmem:[#allocation2 + $0xd0] sm:$0xff]
    %v312 = vld [vmem:[#allocation2 + $0xd8] sm:$0xff]
    %v313 = vld [vmem:[#allocation2 + $0xe0] sm:$0xff]
    %v314 = vld [vmem:[#allocation2 + $0xe8] sm:$0xff]
    %v315 = vld [vmem:[#allocation2 + $0xf0] sm:$0xff]
    %v316 = vld [vmem:[#allocation2 + $0xf8] sm:$0xff]
    %v317 = vld [vmem:[#allocation2 + $0x100] sm:$0xff]
    %v318 = vld [vmem:[#allocation2 + $0x108] sm:$0xff]
    %v319 = vld [vmem:[#allocation2 + $0x110] sm:$0xff]
    %v320 = vld [vmem:[#allocation2 + $0x118] sm:$0xff]
    %v321 = vld [vmem:[#allocation2 + $0x120] sm:$0xff]
    %v322 = vld [vmem:[#allocation2 + $0x128] sm:$0xff]
    %v323 = vld [vmem:[#allocation2 + $0x130] sm:$0xff]
    %v324 = vld [vmem:[#allocation2 + $0x138] sm:$0xff]
    %v325 = vld [vmem:[#allocation2 + $0x140] sm:$0xff]
    %v326 = vld [vmem:[#allocation2 + $0x148] sm:$0xff]
    %v327 = vld [vmem:[#allocation2 + $0x150] sm:$0xff]
    %v328 = vld [vmem:[#allocation2 + $0x158] sm:$0xff]
    %v329 = vld [vmem:[#allocation2 + $0x160] sm:$0xff]
    %v330 = vld [vmem:[#allocation2 + $0x168] sm:$0xff]
    %v331 = vld [vmem:[#allocation2 + $0x170] sm:$0xff]
    %v332 = vld [vmem:[#allocation2 + $0x178] sm:$0xff]
    %v333 = vld [vmem:[#allocation2 + $0x180] sm:$0xff]
    %v334 = vld [vmem:[#allocation2 + $0x188] sm:$0xff]
    %v335 = vld [vmem:[#allocation2 + $0x190] sm:$0xff]
    %v336 = vld [vmem:[#allocation2 + $0x198] sm:$0xff]
    %v337 = vld [vmem:[#allocation2 + $0x1a0] sm:$0xff]
    %v338 = vld [vmem:[#allocation2 + $0x1a8] sm:$0xff]
    %v339 = vld [vmem:[#allocation2 + $0x1b0] sm:$0xff]
    %v340 = vld [vmem:[#allocation2 + $0x1b8] sm:$0xff]
    %v341 = vld [vmem:[#allocation2 + $0x1c0] sm:$0xff]
    %v342 = vld [vmem:[#allocation2 + $0x1c8] sm:$0xff]
    %v343 = vld [vmem:[#allocation2 + $0x1d0] sm:$0xff]
    %v344 = vld [vmem:[#allocation2 + $0x1d8] sm:$0xff]
    %v345 = vld [vmem:[#allocation2 + $0x1e0] sm:$0xff]
    %v346 = vld [vmem:[#allocation2 + $0x1e8] sm:$0xff]
    %v347 = vld [vmem:[#allocation2 + $0x1f0] sm:$0xff]
    %v348 = vld [vmem:[#allocation2 + $0x1f8] sm:$0xff]
    %v349 = vld [vmem:[%s6] sm:$0xff]
    %v351 = vlaneseq
    %v352 = vshrl.u32 %v351, 7
    %v353 = vsub.s32 0, %v352
    %v354 = vrot.slane %v349, %v353
    %v355 = vlaneseq
    %v356 = vshrl.u32 %v355, 7
    %v357 = vsub.s32 1, %v356
    %v358 = vrot.slane %v349, %v357
    %v359 = vlaneseq
    %v360 = vshrl.u32 %v359, 7
    %v361 = vsub.s32 2, %v360
    %v362 = vrot.slane %v349, %v361
    %v363 = vlaneseq
    %v364 = vshrl.u32 %v363, 7
    %v365 = vsub.s32 3, %v364
    %v366 = vrot.slane %v349, %v365
    %v367 = vlaneseq
    %v368 = vshrl.u32 %v367, 7
    %v369 = vsub.s32 4, %v368
    %v370 = vrot.slane %v349, %v369
    %v371 = vlaneseq
    %v372 = vshrl.u32 %v371, 7
    %v373 = vsub.s32 5, %v372
    %v374 = vrot.slane %v349, %v373
    %v375 = vlaneseq
    %v376 = vshrl.u32 %v375, 7
    %v377 = vsub.s32 6, %v376
    %v378 = vrot.slane %v349, %v377
    %v379 = vlaneseq
    %v380 = vshrl.u32 %v379, 7
    %v381 = vsub.s32 7, %v380
    %v382 = vrot.slane %v349, %v381
    %v455 = vunpack.c.l.b16 %v285
    %v456 = vunpack.c.h.b16 %v285
    %v457 = vunpack.c.l.b16 %v286
    %v458 = vunpack.c.h.b16 %v286
    %v459 = vunpack.c.l.b16 %v287
    %v460 = vunpack.c.h.b16 %v287
    %v461 = vunpack.c.l.b16 %v288
    %v462 = vunpack.c.h.b16 %v288
    %v463 = vunpack.c.l.b16 %v289
    %v464 = vunpack.c.h.b16 %v289
    %v465 = vunpack.c.l.b16 %v290
    %v466 = vunpack.c.h.b16 %v290
    %v467 = vunpack.c.l.b16 %v291
    %v468 = vunpack.c.h.b16 %v291
    %v469 = vunpack.c.l.b16 %v292
    %v470 = vunpack.c.h.b16 %v292
    %v471 = vunpack.c.l.b16 %v293
    %v472 = vunpack.c.h.b16 %v293
    %v473 = vunpack.c.l.b16 %v294
    %v474 = vunpack.c.h.b16 %v294
    %v475 = vunpack.c.l.b16 %v295
    %v476 = vunpack.c.h.b16 %v295
    %v477 = vunpack.c.l.b16 %v296
    %v478 = vunpack.c.h.b16 %v296
    %v479 = vunpack.c.l.b16 %v297
    %v480 = vunpack.c.h.b16 %v297
    %v481 = vunpack.c.l.b16 %v298
    %v482 = vunpack.c.h.b16 %v298
    %v483 = vunpack.c.l.b16 %v299
    %v484 = vunpack.c.h.b16 %v299
    %v485 = vunpack.c.l.b16 %v300
    %v486 = vunpack.c.h.b16 %v300
    %v487 = vunpack.c.l.b16 %v301
    %v488 = vunpack.c.h.b16 %v301
    %v489 = vunpack.c.l.b16 %v302
    %v490 = vunpack.c.h.b16 %v302
    %v491 = vunpack.c.l.b16 %v303
    %v492 = vunpack.c.h.b16 %v303
    %v493 = vunpack.c.l.b16 %v304
    %v494 = vunpack.c.h.b16 %v304
    %v495 = vunpack.c.l.b16 %v305
    %v496 = vunpack.c.h.b16 %v305
    %v497 = vunpack.c.l.b16 %v306
    %v498 = vunpack.c.h.b16 %v306
    %v499 = vunpack.c.l.b16 %v307
    %v500 = vunpack.c.h.b16 %v307
    %v501 = vunpack.c.l.b16 %v308
    %v502 = vunpack.c.h.b16 %v308
    %v503 = vunpack.c.l.b16 %v309
    %v504 = vunpack.c.h.b16 %v309
    %v505 = vunpack.c.l.b16 %v310
    %v506 = vunpack.c.h.b16 %v310
    %v507 = vunpack.c.l.b16 %v311
    %v508 = vunpack.c.h.b16 %v311
    %v509 = vunpack.c.l.b16 %v312
    %v510 = vunpack.c.h.b16 %v312
    %v511 = vunpack.c.l.b16 %v313
    %v512 = vunpack.c.h.b16 %v313
    %v513 = vunpack.c.l.b16 %v314
    %v514 = vunpack.c.h.b16 %v314
    %v515 = vunpack.c.l.b16 %v315
    %v516 = vunpack.c.h.b16 %v315
    %v517 = vunpack.c.l.b16 %v316
    %v518 = vunpack.c.h.b16 %v316
    %v519 = vunpack.c.l.b16 %v317
    %v520 = vunpack.c.h.b16 %v317
    %v521 = vunpack.c.l.b16 %v318
    %v522 = vunpack.c.h.b16 %v318
    %v523 = vunpack.c.l.b16 %v319
    %v524 = vunpack.c.h.b16 %v319
    %v525 = vunpack.c.l.b16 %v320
    %v526 = vunpack.c.h.b16 %v320
    %v527 = vunpack.c.l.b16 %v321
    %v528 = vunpack.c.h.b16 %v321
    %v529 = vunpack.c.l.b16 %v322
    %v530 = vunpack.c.h.b16 %v322
    %v531 = vunpack.c.l.b16 %v323
    %v532 = vunpack.c.h.b16 %v323
    %v533 = vunpack.c.l.b16 %v324
    %v534 = vunpack.c.h.b16 %v324
    %v535 = vunpack.c.l.b16 %v325
    %v536 = vunpack.c.h.b16 %v325
    %v537 = vunpack.c.l.b16 %v326
    %v538 = vunpack.c.h.b16 %v326
    %v539 = vunpack.c.l.b16 %v327
    %v540 = vunpack.c.h.b16 %v327
    %v541 = vunpack.c.l.b16 %v328
    %v542 = vunpack.c.h.b16 %v328
    %v543 = vunpack.c.l.b16 %v329
    %v544 = vunpack.c.h.b16 %v329
    %v545 = vunpack.c.l.b16 %v330
    %v546 = vunpack.c.h.b16 %v330
    %v547 = vunpack.c.l.b16 %v331
    %v548 = vunpack.c.h.b16 %v331
    %v549 = vunpack.c.l.b16 %v332
    %v550 = vunpack.c.h.b16 %v332
    %v551 = vunpack.c.l.b16 %v333
    %v552 = vunpack.c.h.b16 %v333
    %v553 = vunpack.c.l.b16 %v334
    %v554 = vunpack.c.h.b16 %v334
    %v555 = vunpack.c.l.b16 %v335
    %v556 = vunpack.c.h.b16 %v335
    %v557 = vunpack.c.l.b16 %v336
    %v558 = vunpack.c.h.b16 %v336
    %v559 = vunpack.c.l.b16 %v337
    %v560 = vunpack.c.h.b16 %v337
    %v561 = vunpack.c.l.b16 %v338
    %v562 = vunpack.c.h.b16 %v338
    %v563 = vunpack.c.l.b16 %v339
    %v564 = vunpack.c.h.b16 %v339
    %v565 = vunpack.c.l.b16 %v340
    %v566 = vunpack.c.h.b16 %v340
    %v567 = vunpack.c.l.b16 %v341
    %v568 = vunpack.c.h.b16 %v341
    %v569 = vunpack.c.l.b16 %v342
    %v570 = vunpack.c.h.b16 %v342
    %v571 = vunpack.c.l.b16 %v343
    %v572 = vunpack.c.h.b16 %v343
    %v573 = vunpack.c.l.b16 %v344
    %v574 = vunpack.c.h.b16 %v344
    %v575 = vunpack.c.l.b16 %v345
    %v576 = vunpack.c.h.b16 %v345
    %v577 = vunpack.c.l.b16 %v346
    %v578 = vunpack.c.h.b16 %v346
    %v579 = vunpack.c.l.b16 %v347
    %v580 = vunpack.c.h.b16 %v347
    %v581 = vunpack.c.l.b16 %v348
    %v582 = vunpack.c.h.b16 %v348
    %v583 = vpack.c.b16 %v463, %v455
    %v584 = vpack.c.b16 %v464, %v456
    %v585 = vpack.c.b16 %v465, %v457
    %v586 = vpack.c.b16 %v466, %v458
    %v587 = vpack.c.b16 %v467, %v459
    %v588 = vpack.c.b16 %v468, %v460
    %v589 = vpack.c.b16 %v469, %v461
    %v590 = vpack.c.b16 %v470, %v462
    %v591 = vpack.c.b16 %v479, %v471
    %v592 = vpack.c.b16 %v480, %v472
    %v593 = vpack.c.b16 %v481, %v473
    %v594 = vpack.c.b16 %v482, %v474
    %v595 = vpack.c.b16 %v483, %v475
    %v596 = vpack.c.b16 %v484, %v476
    %v597 = vpack.c.b16 %v485, %v477
    %v598 = vpack.c.b16 %v486, %v478
    %v599 = vpack.c.b16 %v495, %v487
    %v600 = vpack.c.b16 %v496, %v488
    %v601 = vpack.c.b16 %v497, %v489
    %v602 = vpack.c.b16 %v498, %v490
    %v603 = vpack.c.b16 %v499, %v491
    %v604 = vpack.c.b16 %v500, %v492
    %v605 = vpack.c.b16 %v501, %v493
    %v606 = vpack.c.b16 %v502, %v494
    %v607 = vpack.c.b16 %v511, %v503
    %v608 = vpack.c.b16 %v512, %v504
    %v609 = vpack.c.b16 %v513, %v505
    %v610 = vpack.c.b16 %v514, %v506
    %v611 = vpack.c.b16 %v515, %v507
    %v612 = vpack.c.b16 %v516, %v508
    %v613 = vpack.c.b16 %v517, %v509
    %v614 = vpack.c.b16 %v518, %v510
    %v615 = vpack.c.b16 %v527, %v519
    %v616 = vpack.c.b16 %v528, %v520
    %v617 = vpack.c.b16 %v529, %v521
    %v618 = vpack.c.b16 %v530, %v522
    %v619 = vpack.c.b16 %v531, %v523
    %v620 = vpack.c.b16 %v532, %v524
    %v621 = vpack.c.b16 %v533, %v525
    %v622 = vpack.c.b16 %v534, %v526
    %v623 = vpack.c.b16 %v543, %v535
    %v624 = vpack.c.b16 %v544, %v536
    %v625 = vpack.c.b16 %v545, %v537
    %v626 = vpack.c.b16 %v546, %v538
    %v627 = vpack.c.b16 %v547, %v539
    %v628 = vpack.c.b16 %v548, %v540
    %v629 = vpack.c.b16 %v549, %v541
    %v630 = vpack.c.b16 %v550, %v542
    %v631 = vpack.c.b16 %v559, %v551
    %v632 = vpack.c.b16 %v560, %v552
    %v633 = vpack.c.b16 %v561, %v553
    %v634 = vpack.c.b16 %v562, %v554
    %v635 = vpack.c.b16 %v563, %v555
    %v636 = vpack.c.b16 %v564, %v556
    %v637 = vpack.c.b16 %v565, %v557
    %v638 = vpack.c.b16 %v566, %v558
    %v639 = vpack.c.b16 %v575, %v567
    %v640 = vpack.c.b16 %v576, %v568
    %v641 = vpack.c.b16 %v577, %v569
    %v642 = vpack.c.b16 %v578, %v570
    %v643 = vpack.c.b16 %v579, %v571
    %v644 = vpack.c.b16 %v580, %v572
    %v645 = vpack.c.b16 %v581, %v573
    %v646 = vpack.c.b16 %v582, %v574
    %711 = vmatprep.subr.bf16.mxu0 %v584
    %712 = vmatpush1.bf16.msra.mxu0 %v583
    %713 = vmatprep.subr.bf16.mxu0 %v592
    %714 = vmatpush1.bf16.msra.mxu0 %v591
    %715 = vmatprep.subr.bf16.mxu0 %v600
    %716 = vmatpush1.bf16.msra.mxu0 %v599
    %717 = vmatprep.subr.bf16.mxu0 %v608
    %718 = vmatpush1.bf16.msra.mxu0 %v607
    %719 = vmatprep.subr.bf16.mxu0 %v616
    %720 = vmatpush1.bf16.msra.mxu0 %v615
    %721 = vmatprep.subr.bf16.mxu0 %v624
    %722 = vmatpush1.bf16.msra.mxu0 %v623
    %723 = vmatprep.subr.bf16.mxu0 %v632
    %724 = vmatpush1.bf16.msra.mxu0 %v631
    %725 = vmatprep.subr.bf16.mxu0 %v640
    %726 = vmatpush1.bf16.msra.mxu0 %v639
    %727 = vmatprep.subr.bf16.mxu0 0
    %728 = vmatpush1.bf16.msra.mxu0 0
    %729 = vmatprep.subr.bf16.mxu0 0
    %730 = vmatpush1.bf16.msra.mxu0 0
    %731 = vmatprep.subr.bf16.mxu0 0
    %732 = vmatpush1.bf16.msra.mxu0 0
    %733 = vmatprep.subr.bf16.mxu0 0
    %734 = vmatpush1.bf16.msra.mxu0 0
    %735 = vmatprep.subr.bf16.mxu0 0
    %736 = vmatpush1.bf16.msra.mxu0 0
    %737 = vmatprep.subr.bf16.mxu0 0
    %738 = vmatpush1.bf16.msra.mxu0 0
    %739 = vmatprep.subr.bf16.mxu0 0
    %740 = vmatpush1.bf16.msra.mxu0 0
    %741 = vmatprep.subr.bf16.mxu0 0
    %742 = vmatpush1.bf16.msra.mxu0 0
    %743 = vmatprep.mubr.bf16.mxu0 0
    %744 = vmatmul.mubr.bf16.gmra.mrb[0].mxu0 %v283
    %v745 = vpop.f32.mrb[0].mxu0
    %v746 = vadd.f32 %v354, %v745
    %v747 = vpop.f32.mrb[0].mxu0
    %v748 = vadd.f32 %v358, %v747
    %v749 = vpop.f32.mrb[0].mxu0
    %v750 = vadd.f32 %v354, %v749
    %v751 = vpop.f32.mrb[0].mxu0
    %v752 = vadd.f32 %v358, %v751
    %753 = vmatprep.mubr.bf16.mxu0 0
    %754 = vmatmul.mubr.bf16.gmra.mrb[0].mxu0 %v284
    %v755 = vpop.f32.mrb[0].mxu0
    %v756 = vadd.f32 %v354, %v755
    %v757 = vpop.f32.mrb[0].mxu0
    %v758 = vadd.f32 %v358, %v757
    %v759 = vpop.f32.mrb[0].mxu0
    %v760 = vadd.f32 %v354, %v759
    %v761 = vpop.f32.mrb[0].mxu0
    %v762 = vadd.f32 %v358, %v761
    %763 = vdwg.mxu0
    %764 = vmatprep.subr.bf16.mxu0 %v586
    %765 = vmatpush1.bf16.msra.mxu0 %v585
    %766 = vmatprep.subr.bf16.mxu0 %v594
    %767 = vmatpush1.bf16.msra.mxu0 %v593
    %768 = vmatprep.subr.bf16.mxu0 %v602
    %769 = vmatpush1.bf16.msra.mxu0 %v601
    %770 = vmatprep.subr.bf16.mxu0 %v610
    %771 = vmatpush1.bf16.msra.mxu0 %v609
    %772 = vmatprep.subr.bf16.mxu0 %v618
    %773 = vmatpush1.bf16.msra.mxu0 %v617
    %774 = vmatprep.subr.bf16.mxu0 %v626
    %775 = vmatpush1.bf16.msra.mxu0 %v625
    %776 = vmatprep.subr.bf16.mxu0 %v634
    %777 = vmatpush1.bf16.msra.mxu0 %v633
    %778 = vmatprep.subr.bf16.mxu0 %v642
    %779 = vmatpush1.bf16.msra.mxu0 %v641
    %780 = vmatprep.subr.bf16.mxu0 0
    %781 = vmatpush1.bf16.msra.mxu0 0
    %782 = vmatprep.subr.bf16.mxu0 0
    %783 = vmatpush1.bf16.msra.mxu0 0
    %784 = vmatprep.subr.bf16.mxu0 0
    %785 = vmatpush1.bf16.msra.mxu0 0
    %786 = vmatprep.subr.bf16.mxu0 0
    %787 = vmatpush1.bf16.msra.mxu0 0
    %788 = vmatprep.subr.bf16.mxu0 0
    %789 = vmatpush1.bf16.msra.mxu0 0
    %790 = vmatprep.subr.bf16.mxu0 0
    %791 = vmatpush1.bf16.msra.mxu0 0
    %792 = vmatprep.subr.bf16.mxu0 0
    %793 = vmatpush1.bf16.msra.mxu0 0
    %794 = vmatprep.subr.bf16.mxu0 0
    %795 = vmatpush1.bf16.msra.mxu0 0
    %796 = vmatprep.mubr.bf16.mxu0 0
    %797 = vmatmul.mubr.bf16.gmra.mrb[0].mxu0 %v283
    %v798 = vpop.f32.mrb[0].mxu0
    %v799 = vadd.f32 %v362, %v798
    %v800 = vpop.f32.mrb[0].mxu0
    %v801 = vadd.f32 %v366, %v800
    %v802 = vpop.f32.mrb[0].mxu0
    %v803 = vadd.f32 %v362, %v802
    %v804 = vpop.f32.mrb[0].mxu0
    %v805 = vadd.f32 %v366, %v804
    %806 = vmatprep.mubr.bf16.mxu0 0
    %807 = vmatmul.mubr.bf16.gmra.mrb[0].mxu0 %v284
    %v808 = vpop.f32.mrb[0].mxu0
    %v809 = vadd.f32 %v362, %v808
    %v810 = vpop.f32.mrb[0].mxu0
    %v811 = vadd.f32 %v366, %v810
    %v812 = vpop.f32.mrb[0].mxu0
    %v813 = vadd.f32 %v362, %v812
    %v814 = vpop.f32.mrb[0].mxu0
    %v815 = vadd.f32 %v366, %v814
    %816 = vdwg.mxu0
    %817 = vmatprep.subr.bf16.mxu0 %v588
    %818 = vmatpush1.bf16.msra.mxu0 %v587
    %819 = vmatprep.subr.bf16.mxu0 %v596
    %820 = vmatpush1.bf16.msra.mxu0 %v595
    %821 = vmatprep.subr.bf16.mxu0 %v604
    %822 = vmatpush1.bf16.msra.mxu0 %v603
    %823 = vmatprep.subr.bf16.mxu0 %v612
    %824 = vmatpush1.bf16.msra.mxu0 %v611
    %825 = vmatprep.subr.bf16.mxu0 %v620
    %826 = vmatpush1.bf16.msra.mxu0 %v619
    %827 = vmatprep.subr.bf16.mxu0 %v628
    %828 = vmatpush1.bf16.msra.mxu0 %v627
    %829 = vmatprep.subr.bf16.mxu0 %v636
    %830 = vmatpush1.bf16.msra.mxu0 %v635
    %831 = vmatprep.subr.bf16.mxu0 %v644
    %832 = vmatpush1.bf16.msra.mxu0 %v643
    %833 = vmatprep.subr.bf16.mxu0 0
    %834 = vmatpush1.bf16.msra.mxu0 0
    %835 = vmatprep.subr.bf16.mxu0 0
    %836 = vmatpush1.bf16.msra.mxu0 0
    %837 = vmatprep.subr.bf16.mxu0 0
    %838 = vmatpush1.bf16.msra.mxu0 0
    %839 = vmatprep.subr.bf16.mxu0 0
    %840 = vmatpush1.bf16.msra.mxu0 0
    %841 = vmatprep.subr.bf16.mxu0 0
    %842 = vmatpush1.bf16.msra.mxu0 0
    %843 = vmatprep.subr.bf16.mxu0 0
    %844 = vmatpush1.bf16.msra.mxu0 0
    %845 = vmatprep.subr.bf16.mxu0 0
    %846 = vmatpush1.bf16.msra.mxu0 0
    %847 = vmatprep.subr.bf16.mxu0 0
    %848 = vmatpush1.bf16.msra.mxu0 0
    %849 = vmatprep.mubr.bf16.mxu0 0
    %850 = vmatmul.mubr.bf16.gmra.mrb[0].mxu0 %v283
    %v851 = vpop.f32.mrb[0].mxu0
    %v852 = vadd.f32 %v370, %v851
    %v853 = vpop.f32.mrb[0].mxu0
    %v854 = vadd.f32 %v374, %v853
    %v855 = vpop.f32.mrb[0].mxu0
    %v856 = vadd.f32 %v370, %v855
    %v857 = vpop.f32.mrb[0].mxu0
    %v858 = vadd.f32 %v374, %v857
    %859 = vmatprep.mubr.bf16.mxu0 0
    %860 = vmatmul.mubr.bf16.gmra.mrb[0].mxu0 %v284
    %v861 = vpop.f32.mrb[0].mxu0
    %v862 = vadd.f32 %v370, %v861
    %v863 = vpop.f32.mrb[0].mxu0
    %v864 = vadd.f32 %v374, %v863
    %v865 = vpop.f32.mrb[0].mxu0
    %v866 = vadd.f32 %v370, %v865
    %v867 = vpop.f32.mrb[0].mxu0
    %v868 = vadd.f32 %v374, %v867
    %869 = vdwg.mxu0
    %870 = vmatprep.subr.bf16.mxu0 %v590
    %871 = vmatpush1.bf16.msra.mxu0 %v589
    %872 = vmatprep.subr.bf16.mxu0 %v598
    %873 = vmatpush1.bf16.msra.mxu0 %v597
    %874 = vmatprep.subr.bf16.mxu0 %v606
    %875 = vmatpush1.bf16.msra.mxu0 %v605
    %876 = vmatprep.subr.bf16.mxu0 %v614
    %877 = vmatpush1.bf16.msra.mxu0 %v613
    %878 = vmatprep.subr.bf16.mxu0 %v622
    %879 = vmatpush1.bf16.msra.mxu0 %v621
    %880 = vmatprep.subr.bf16.mxu0 %v630
    %881 = vmatpush1.bf16.msra.mxu0 %v629
    %882 = vmatprep.subr.bf16.mxu0 %v638
    %883 = vmatpush1.bf16.msra.mxu0 %v637
    %884 = vmatprep.subr.bf16.mxu0 %v646
    %885 = vmatpush1.bf16.msra.mxu0 %v645
    %886 = vmatprep.subr.bf16.mxu0 0
    %887 = vmatpush1.bf16.msra.mxu0 0
    %888 = vmatprep.subr.bf16.mxu0 0
    %889 = vmatpush1.bf16.msra.mxu0 0
    %890 = vmatprep.subr.bf16.mxu0 0
    %891 = vmatpush1.bf16.msra.mxu0 0
    %892 = vmatprep.subr.bf16.mxu0 0
    %893 = vmatpush1.bf16.msra.mxu0 0
    %894 = vmatprep.subr.bf16.mxu0 0
    %895 = vmatpush1.bf16.msra.mxu0 0
    %896 = vmatprep.subr.bf16.mxu0 0
    %897 = vmatpush1.bf16.msra.mxu0 0
    %898 = vmatprep.subr.bf16.mxu0 0
    %899 = vmatpush1.bf16.msra.mxu0 0
    %900 = vmatprep.subr.bf16.mxu0 0
    %901 = vmatpush1.bf16.msra.mxu0 0
    %902 = vmatprep.mubr.bf16.mxu0 0
    %903 = vmatmul.mubr.bf16.gmra.mrb[0].mxu0 %v283
    %v904 = vpop.f32.mrb[0].mxu0
    %v905 = vadd.f32 %v378, %v904
    %v906 = vpop.f32.mrb[0].mxu0
    %v907 = vadd.f32 %v382, %v906
    %v908 = vpop.f32.mrb[0].mxu0
    %v909 = vadd.f32 %v378, %v908
    %v910 = vpop.f32.mrb[0].mxu0
    %v911 = vadd.f32 %v382, %v910
    %912 = vmatprep.mubr.bf16.mxu0 0
    %913 = vmatmul.mubr.bf16.gmra.mrb[0].mxu0 %v284
    %v914 = vpop.f32.mrb[0].mxu0
    %v915 = vadd.f32 %v378, %v914
    %v916 = vpop.f32.mrb[0].mxu0
    %v917 = vadd.f32 %v382, %v916
    %v918 = vpop.f32.mrb[0].mxu0
    %v919 = vadd.f32 %v378, %v918
    %v920 = vpop.f32.mrb[0].mxu0
    %v921 = vadd.f32 %v382, %v920
    %922 = vdwg.mxu0
    %v923 = vmax.f32 %v746, 0.0
    %v924 = vmax.f32 %v748, 0.0
    %v925 = vmax.f32 %v799, 0.0
    %v926 = vmax.f32 %v801, 0.0
    %v927 = vmax.f32 %v852, 0.0
    %v928 = vmax.f32 %v854, 0.0
    %v929 = vmax.f32 %v905, 0.0
    %v930 = vmax.f32 %v907, 0.0
    %v931 = vmax.f32 %v750, 0.0
    %v932 = vmax.f32 %v752, 0.0
    %v933 = vmax.f32 %v803, 0.0
    %v934 = vmax.f32 %v805, 0.0
    %v935 = vmax.f32 %v856, 0.0
    %v936 = vmax.f32 %v858, 0.0
    %v937 = vmax.f32 %v909, 0.0
    %v938 = vmax.f32 %v911, 0.0
    %v939 = vmax.f32 %v756, 0.0
    %v940 = vmax.f32 %v758, 0.0
    %v941 = vmax.f32 %v809, 0.0
    %v942 = vmax.f32 %v811, 0.0
    %v943 = vmax.f32 %v862, 0.0
    %v944 = vmax.f32 %v864, 0.0
    %v945 = vmax.f32 %v915, 0.0
    %v946 = vmax.f32 %v917, 0.0
    %v947 = vmax.f32 %v760, 0.0
    %v948 = vmax.f32 %v762, 0.0
    %v949 = vmax.f32 %v813, 0.0
    %v950 = vmax.f32 %v815, 0.0
    %v951 = vmax.f32 %v866, 0.0
    %v952 = vmax.f32 %v868, 0.0
    %v953 = vmax.f32 %v919, 0.0
    %v954 = vmax.f32 %v921, 0.0
    %v955 = vmax.f32 %v923, %v931
    %v956 = vrot.slane %v955, 4
    %v957 = vmax.f32 %v955, %v956
    %v958 = vrot.slane %v957, 2
    %v959 = vmax.f32 %v957, %v958
    %v960 = vrot.slane %v959, 1
    %v961 = vmax.f32 %v959, %v960
    %v962 = vmax.f32 %v924, %v932
    %v963 = vrot.slane %v962, 4
    %v964 = vmax.f32 %v962, %v963
    %v965 = vrot.slane %v964, 2
    %v966 = vmax.f32 %v964, %v965
    %v967 = vrot.slane %v966, 1
    %v968 = vmax.f32 %v966, %v967
    %v969 = vmax.f32 %v925, %v933
    %v970 = vrot.slane %v969, 4
    %v971 = vmax.f32 %v969, %v970
    %v972 = vrot.slane %v971, 2
    %v973 = vmax.f32 %v971, %v972
    %v974 = vrot.slane %v973, 1
    %v975 = vmax.f32 %v973, %v974
    %v976 = vmax.f32 %v926, %v934
    %v977 = vrot.slane %v976, 4
    %v978 = vmax.f32 %v976, %v977
    %v979 = vrot.slane %v978, 2
    %v980 = vmax.f32 %v978, %v979
    %v981 = vrot.slane %v980, 1
    %v982 = vmax.f32 %v980, %v981
    %v983 = vmax.f32 %v927, %v935
    %v984 = vrot.slane %v983, 4
    %v985 = vmax.f32 %v983, %v984
    %v986 = vrot.slane %v985, 2
    %v987 = vmax.f32 %v985, %v986
    %v988 = vrot.slane %v987, 1
    %v989 = vmax.f32 %v987, %v988
    %v990 = vmax.f32 %v928, %v936
    %v991 = vrot.slane %v990, 4
    %v992 = vmax.f32 %v990, %v991
    %v993 = vrot.slane %v992, 2
    %v994 = vmax.f32 %v992, %v993
    %v995 = vrot.slane %v994, 1
    %v996 = vmax.f32 %v994, %v995
    %v997 = vmax.f32 %v929, %v937
    %v998 = vrot.slane %v997, 4
    %v999 = vmax.f32 %v997, %v998
    %v1000 = vrot.slane %v999, 2
    %v1001 = vmax.f32 %v999, %v1000
    %v1002 = vrot.slane %v1001, 1
    %v1003 = vmax.f32 %v1001, %v1002
    %v1004 = vmax.f32 %v930, %v938
    %v1005 = vrot.slane %v1004, 4
    %v1006 = vmax.f32 %v1004, %v1005
    %v1007 = vrot.slane %v1006, 2
    %v1008 = vmax.f32 %v1006, %v1007
    %v1009 = vrot.slane %v1008, 1
    %v1010 = vmax.f32 %v1008, %v1009
    %v1011 = vmax.f32 %v939, %v947
    %v1012 = vrot.slane %v1011, 4
    %v1013 = vmax.f32 %v1011, %v1012
    %v1014 = vrot.slane %v1013, 2
    %v1015 = vmax.f32 %v1013, %v1014
    %v1016 = vrot.slane %v1015, 1
    %v1017 = vmax.f32 %v1015, %v1016
    %v1018 = vmax.f32 %v940, %v948
    %v1019 = vrot.slane %v1018, 4
    %v1020 = vmax.f32 %v1018, %v1019
    %v1021 = vrot.slane %v1020, 2
    %v1022 = vmax.f32 %v1020, %v1021
    %v1023 = vrot.slane %v1022, 1
    %v1024 = vmax.f32 %v1022, %v1023
    %v1025 = vmax.f32 %v941, %v949
    %v1026 = vrot.slane %v1025, 4
    %v1027 = vmax.f32 %v1025, %v1026
    %v1028 = vrot.slane %v1027, 2
    %v1029 = vmax.f32 %v1027, %v1028
    %v1030 = vrot.slane %v1029, 1
    %v1031 = vmax.f32 %v1029, %v1030
    %v1032 = vmax.f32 %v942, %v950
    %v1033 = vrot.slane %v1032, 4
    %v1034 = vmax.f32 %v1032, %v1033
    %v1035 = vrot.slane %v1034, 2
    %v1036 = vmax.f32 %v1034, %v1035
    %v1037 = vrot.slane %v1036, 1
    %v1038 = vmax.f32 %v1036, %v1037
    %v1039 = vmax.f32 %v943, %v951
    %v1040 = vrot.slane %v1039, 4
    %v1041 = vmax.f32 %v1039, %v1040
    %v1042 = vrot.slane %v1041, 2
    %v1043 = vmax.f32 %v1041, %v1042
    %v1044 = vrot.slane %v1043, 1
    %v1045 = vmax.f32 %v1043, %v1044
    %v1046 = vmax.f32 %v944, %v952
    %v1047 = vrot.slane %v1046, 4
    %v1048 = vmax.f32 %v1046, %v1047
    %v1049 = vrot.slane %v1048, 2
    %v1050 = vmax.f32 %v1048, %v1049
    %v1051 = vrot.slane %v1050, 1
    %v1052 = vmax.f32 %v1050, %v1051
    %v1053 = vmax.f32 %v945, %v953
    %v1054 = vrot.slane %v1053, 4
    %v1055 = vmax.f32 %v1053, %v1054
    %v1056 = vrot.slane %v1055, 2
    %v1057 = vmax.f32 %v1055, %v1056
    %v1058 = vrot.slane %v1057, 1
    %v1059 = vmax.f32 %v1057, %v1058
    %v1060 = vmax.f32 %v946, %v954
    %v1061 = vrot.slane %v1060, 4
    %v1062 = vmax.f32 %v1060, %v1061
    %v1063 = vrot.slane %v1062, 2
    %v1064 = vmax.f32 %v1062, %v1063
    %v1065 = vrot.slane %v1064, 1
    %v1066 = vmax.f32 %v1064, %v1065
    %vm1067 = vcmask 1040384
    %v1068 = vsel %vm1067, %v961, %v1017
    %v1069 = vsel %vm1067, %v968, %v1024
    %v1070 = vsel %vm1067, %v975, %v1031
    %v1071 = vsel %vm1067, %v982, %v1038
    %v1072 = vsel %vm1067, %v989, %v1045
    %v1073 = vsel %vm1067, %v996, %v1052
    %v1074 = vsel %vm1067, %v1003, %v1059
    %v1075 = vsel %vm1067, %v1010, %v1066
    %v1076 = vpack.c.bf16 %v1068, %v1068
    %v1077 = vpack.c.bf16 %v1069, %v1069
    %v1078 = vpack.c.bf16 %v1070, %v1070
    %v1079 = vpack.c.bf16 %v1071, %v1071
    %v1080 = vpack.c.bf16 %v1072, %v1072
    %v1081 = vpack.c.bf16 %v1073, %v1073
    %v1082 = vpack.c.bf16 %v1074, %v1074
    %v1083 = vpack.c.bf16 %v1075, %v1075
    %v1084 = vld [vmem:[#allocation5] sm:$0xff]
    %v1085 = vld [vmem:[#allocation5 + $0x8] sm:$0xff]
    %v1086 = vld [vmem:[#allocation5 + $0x10] sm:$0xff]
    %v1087 = vld [vmem:[#allocation5 + $0x18] sm:$0xff]
    %v1088 = vld [vmem:[#allocation5 + $0x20] sm:$0xff]
    %v1089 = vld [vmem:[#allocation5 + $0x28] sm:$0xff]
    %v1090 = vld [vmem:[#allocation5 + $0x30] sm:$0xff]
    %v1091 = vld [vmem:[#allocation5 + $0x38] sm:$0xff]
    %v1092 = vld [vmem:[#allocation5 + $0x40] sm:$0xff]
    %v1093 = vld [vmem:[#allocation5 + $0x48] sm:$0xff]
    %v1094 = vld [vmem:[#allocation5 + $0x50] sm:$0xff]
    %v1095 = vld [vmem:[#allocation5 + $0x58] sm:$0xff]
    %v1096 = vld [vmem:[#allocation5 + $0x60] sm:$0xff]
    %v1097 = vld [vmem:[#allocation5 + $0x68] sm:$0xff]
    %v1098 = vld [vmem:[#allocation5 + $0x70] sm:$0xff]
    %v1099 = vld [vmem:[#allocation5 + $0x78] sm:$0xff]
    %v1100 = vld [vmem:[#allocation5 + $0x80] sm:$0xff]
    %v1101 = vld [vmem:[#allocation5 + $0x88] sm:$0xff]
    %v1102 = vld [vmem:[#allocation5 + $0x90] sm:$0xff]
    %v1103 = vld [vmem:[#allocation5 + $0x98] sm:$0xff]
    %v1104 = vld [vmem:[#allocation5 + $0xa0] sm:$0xff]
    %v1105 = vld [vmem:[#allocation5 + $0xa8] sm:$0xff]
    %v1106 = vld [vmem:[#allocation5 + $0xb0] sm:$0xff]
    %v1107 = vld [vmem:[#allocation5 + $0xb8] sm:$0xff]
    %v1108 = vld [vmem:[#allocation5 + $0xc0] sm:$0xff]
    %v1109 = vld [vmem:[#allocation5 + $0xc8] sm:$0xff]
    %v1110 = vld [vmem:[#allocation5 + $0xd0] sm:$0xff]
    %v1111 = vld [vmem:[#allocation5 + $0xd8] sm:$0xff]
    %v1112 = vld [vmem:[#allocation5 + $0xe0] sm:$0xff]
    %v1113 = vld [vmem:[#allocation5 + $0xe8] sm:$0xff]
    %v1114 = vld [vmem:[#allocation5 + $0xf0] sm:$0xff]
    %v1115 = vld [vmem:[#allocation5 + $0xf8] sm:$0xff]
    %v1116 = vld [vmem:[#allocation5 + $0x100] sm:$0xff]
    %v1117 = vld [vmem:[#allocation5 + $0x108] sm:$0xff]
    %v1118 = vld [vmem:[#allocation5 + $0x110] sm:$0xff]
    %v1119 = vld [vmem:[#allocation5 + $0x118] sm:$0xff]
    %v1120 = vld [vmem:[#allocation5 + $0x120] sm:$0xff]
    %v1121 = vld [vmem:[#allocation5 + $0x128] sm:$0xff]
    %v1122 = vld [vmem:[#allocation5 + $0x130] sm:$0xff]
    %v1123 = vld [vmem:[#allocation5 + $0x138] sm:$0xff]
    %v1124 = vld [vmem:[#allocation5 + $0x140] sm:$0xff]
    %v1125 = vld [vmem:[#allocation5 + $0x148] sm:$0xff]
    %v1126 = vld [vmem:[#allocation5 + $0x150] sm:$0xff]
    %v1127 = vld [vmem:[#allocation5 + $0x158] sm:$0xff]
    %v1128 = vld [vmem:[#allocation5 + $0x160] sm:$0xff]
    %v1129 = vld [vmem:[#allocation5 + $0x168] sm:$0xff]
    %v1130 = vld [vmem:[#allocation5 + $0x170] sm:$0xff]
    %v1131 = vld [vmem:[#allocation5 + $0x178] sm:$0xff]
    %v1132 = vld [vmem:[#allocation5 + $0x180] sm:$0xff]
    %v1133 = vld [vmem:[#allocation5 + $0x188] sm:$0xff]
    %v1134 = vld [vmem:[#allocation5 + $0x190] sm:$0xff]
    %v1135 = vld [vmem:[#allocation5 + $0x198] sm:$0xff]
    %v1136 = vld [vmem:[#allocation5 + $0x1a0] sm:$0xff]
    %v1137 = vld [vmem:[#allocation5 + $0x1a8] sm:$0xff]
    %v1138 = vld [vmem:[#allocation5 + $0x1b0] sm:$0xff]
    %v1139 = vld [vmem:[#allocation5 + $0x1b8] sm:$0xff]
    %v1140 = vld [vmem:[#allocation5 + $0x1c0] sm:$0xff]
    %v1141 = vld [vmem:[#allocation5 + $0x1c8] sm:$0xff]
    %v1142 = vld [vmem:[#allocation5 + $0x1d0] sm:$0xff]
    %v1143 = vld [vmem:[#allocation5 + $0x1d8] sm:$0xff]
    %v1144 = vld [vmem:[#allocation5 + $0x1e0] sm:$0xff]
    %v1145 = vld [vmem:[#allocation5 + $0x1e8] sm:$0xff]
    %v1146 = vld [vmem:[#allocation5 + $0x1f0] sm:$0xff]
    %v1147 = vld [vmem:[#allocation5 + $0x1f8] sm:$0xff]
    %v1148 = vld [vmem:[#allocation5 + $0x200] sm:$0xff]
    %v1149 = vld [vmem:[#allocation5 + $0x208] sm:$0xff]
    %v1150 = vld [vmem:[#allocation5 + $0x210] sm:$0xff]
    %v1151 = vld [vmem:[#allocation5 + $0x218] sm:$0xff]
    %v1152 = vld [vmem:[#allocation5 + $0x220] sm:$0xff]
    %v1153 = vld [vmem:[#allocation5 + $0x228] sm:$0xff]
    %v1154 = vld [vmem:[#allocation5 + $0x230] sm:$0xff]
    %v1155 = vld [vmem:[#allocation5 + $0x238] sm:$0xff]
    %v1156 = vld [vmem:[#allocation5 + $0x240] sm:$0xff]
    %v1157 = vld [vmem:[#allocation5 + $0x248] sm:$0xff]
    %v1158 = vld [vmem:[#allocation5 + $0x250] sm:$0xff]
    %v1159 = vld [vmem:[#allocation5 + $0x258] sm:$0xff]
    %v1160 = vld [vmem:[#allocation5 + $0x260] sm:$0xff]
    %v1161 = vld [vmem:[#allocation5 + $0x268] sm:$0xff]
    %v1162 = vld [vmem:[#allocation5 + $0x270] sm:$0xff]
    %v1163 = vld [vmem:[#allocation5 + $0x278] sm:$0xff]
    %v1164 = vld [vmem:[#allocation5 + $0x280] sm:$0xff]
    %v1165 = vld [vmem:[#allocation5 + $0x288] sm:$0xff]
    %v1166 = vld [vmem:[#allocation5 + $0x290] sm:$0xff]
    %v1167 = vld [vmem:[#allocation5 + $0x298] sm:$0xff]
    %v1168 = vld [vmem:[#allocation5 + $0x2a0] sm:$0xff]
    %v1169 = vld [vmem:[#allocation5 + $0x2a8] sm:$0xff]
    %v1170 = vld [vmem:[#allocation5 + $0x2b0] sm:$0xff]
    %v1171 = vld [vmem:[#allocation5 + $0x2b8] sm:$0xff]
    %v1172 = vld [vmem:[#allocation5 + $0x2c0] sm:$0xff]
    %v1173 = vld [vmem:[#allocation5 + $0x2c8] sm:$0xff]
    %v1174 = vld [vmem:[#allocation5 + $0x2d0] sm:$0xff]
    %v1175 = vld [vmem:[#allocation5 + $0x2d8] sm:$0xff]
    %v1176 = vld [vmem:[#allocation5 + $0x2e0] sm:$0xff]
    %v1177 = vld [vmem:[#allocation5 + $0x2e8] sm:$0xff]
    %v1178 = vld [vmem:[#allocation5 + $0x2f0] sm:$0xff]
    %v1179 = vld [vmem:[#allocation5 + $0x2f8] sm:$0xff]
    %v1180 = vld [vmem:[#allocation5 + $0x300] sm:$0xff]
    %v1181 = vld [vmem:[#allocation5 + $0x308] sm:$0xff]
    %v1182 = vld [vmem:[#allocation5 + $0x310] sm:$0xff]
    %v1183 = vld [vmem:[#allocation5 + $0x318] sm:$0xff]
    %v1184 = vld [vmem:[#allocation5 + $0x320] sm:$0xff]
    %v1185 = vld [vmem:[#allocation5 + $0x328] sm:$0xff]
    %v1186 = vld [vmem:[#allocation5 + $0x330] sm:$0xff]
    %v1187 = vld [vmem:[#allocation5 + $0x338] sm:$0xff]
    %v1188 = vld [vmem:[#allocation5 + $0x340] sm:$0xff]
    %v1189 = vld [vmem:[#allocation5 + $0x348] sm:$0xff]
    %v1190 = vld [vmem:[#allocation5 + $0x350] sm:$0xff]
    %v1191 = vld [vmem:[#allocation5 + $0x358] sm:$0xff]
    %v1192 = vld [vmem:[#allocation5 + $0x360] sm:$0xff]
    %v1193 = vld [vmem:[#allocation5 + $0x368] sm:$0xff]
    %v1194 = vld [vmem:[#allocation5 + $0x370] sm:$0xff]
    %v1195 = vld [vmem:[#allocation5 + $0x378] sm:$0xff]
    %v1196 = vld [vmem:[#allocation5 + $0x380] sm:$0xff]
    %v1197 = vld [vmem:[#allocation5 + $0x388] sm:$0xff]
    %v1198 = vld [vmem:[#allocation5 + $0x390] sm:$0xff]
    %v1199 = vld [vmem:[#allocation5 + $0x398] sm:$0xff]
    %v1200 = vld [vmem:[#allocation5 + $0x3a0] sm:$0xff]
    %v1201 = vld [vmem:[#allocation5 + $0x3a8] sm:$0xff]
    %v1202 = vld [vmem:[#allocation5 + $0x3b0] sm:$0xff]
    %v1203 = vld [vmem:[#allocation5 + $0x3b8] sm:$0xff]
    %v1204 = vld [vmem:[#allocation5 + $0x3c0] sm:$0xff]
    %v1205 = vld [vmem:[#allocation5 + $0x3c8] sm:$0xff]
    %v1206 = vld [vmem:[#allocation5 + $0x3d0] sm:$0xff]
    %v1207 = vld [vmem:[#allocation5 + $0x3d8] sm:$0xff]
    %v1208 = vld [vmem:[#allocation5 + $0x3e0] sm:$0xff]
    %v1209 = vld [vmem:[#allocation5 + $0x3e8] sm:$0xff]
    %v1210 = vld [vmem:[#allocation5 + $0x3f0] sm:$0xff]
    %v1211 = vld [vmem:[#allocation5 + $0x3f8] sm:$0xff]
    %v1212 = vld [vmem:[#allocation5 + $0x400] sm:$0xff]
    %v1213 = vld [vmem:[#allocation5 + $0x408] sm:$0xff]
    %v1214 = vld [vmem:[#allocation5 + $0x410] sm:$0xff]
    %v1215 = vld [vmem:[#allocation5 + $0x418] sm:$0xff]
    %v1216 = vld [vmem:[#allocation5 + $0x420] sm:$0xff]
    %v1217 = vld [vmem:[#allocation5 + $0x428] sm:$0xff]
    %v1218 = vld [vmem:[#allocation5 + $0x430] sm:$0xff]
    %v1219 = vld [vmem:[#allocation5 + $0x438] sm:$0xff]
    %v1220 = vld [vmem:[#allocation5 + $0x440] sm:$0xff]
    %v1221 = vld [vmem:[#allocation5 + $0x448] sm:$0xff]
    %v1222 = vld [vmem:[#allocation5 + $0x450] sm:$0xff]
    %v1223 = vld [vmem:[#allocation5 + $0x458] sm:$0xff]
    %v1224 = vld [vmem:[#allocation5 + $0x460] sm:$0xff]
    %v1225 = vld [vmem:[#allocation5 + $0x468] sm:$0xff]
    %v1226 = vld [vmem:[#allocation5 + $0x470] sm:$0xff]
    %v1227 = vld [vmem:[#allocation5 + $0x478] sm:$0xff]
    %v1228 = vld [vmem:[#allocation5 + $0x480] sm:$0xff]
    %v1229 = vld [vmem:[#allocation5 + $0x488] sm:$0xff]
    %v1230 = vld [vmem:[#allocation5 + $0x490] sm:$0xff]
    %v1231 = vld [vmem:[#allocation5 + $0x498] sm:$0xff]
    %v1232 = vld [vmem:[#allocation5 + $0x4a0] sm:$0xff]
    %v1233 = vld [vmem:[#allocation5 + $0x4a8] sm:$0xff]
    %v1234 = vld [vmem:[#allocation5 + $0x4b0] sm:$0xff]
    %v1235 = vld [vmem:[#allocation5 + $0x4b8] sm:$0xff]
    %v1236 = vld [vmem:[#allocation5 + $0x4c0] sm:$0xff]
    %v1237 = vld [vmem:[#allocation5 + $0x4c8] sm:$0xff]
    %v1238 = vld [vmem:[#allocation5 + $0x4d0] sm:$0xff]
    %v1239 = vld [vmem:[#allocation5 + $0x4d8] sm:$0xff]
    %v1240 = vld [vmem:[#allocation5 + $0x4e0] sm:$0xff]
    %v1241 = vld [vmem:[#allocation5 + $0x4e8] sm:$0xff]
    %v1242 = vld [vmem:[#allocation5 + $0x4f0] sm:$0xff]
    %v1243 = vld [vmem:[#allocation5 + $0x4f8] sm:$0xff]
    %v1244 = vld [vmem:[#allocation5 + $0x500] sm:$0xff]
    %v1245 = vld [vmem:[#allocation5 + $0x508] sm:$0xff]
    %v1246 = vld [vmem:[#allocation5 + $0x510] sm:$0xff]
    %v1247 = vld [vmem:[#allocation5 + $0x518] sm:$0xff]
    %v1248 = vld [vmem:[#allocation5 + $0x520] sm:$0xff]
    %v1249 = vld [vmem:[#allocation5 + $0x528] sm:$0xff]
    %v1250 = vld [vmem:[#allocation5 + $0x530] sm:$0xff]
    %v1251 = vld [vmem:[#allocation5 + $0x538] sm:$0xff]
    %v1252 = vld [vmem:[#allocation5 + $0x540] sm:$0xff]
    %v1253 = vld [vmem:[#allocation5 + $0x548] sm:$0xff]
    %v1254 = vld [vmem:[#allocation5 + $0x550] sm:$0xff]
    %v1255 = vld [vmem:[#allocation5 + $0x558] sm:$0xff]
    %v1256 = vld [vmem:[#allocation5 + $0x560] sm:$0xff]
    %v1257 = vld [vmem:[#allocation5 + $0x568] sm:$0xff]
    %v1258 = vld [vmem:[#allocation5 + $0x570] sm:$0xff]
    %v1259 = vld [vmem:[#allocation5 + $0x578] sm:$0xff]
    %v1260 = vld [vmem:[#allocation5 + $0x580] sm:$0xff]
    %v1261 = vld [vmem:[#allocation5 + $0x588] sm:$0xff]
    %v1262 = vld [vmem:[#allocation5 + $0x590] sm:$0xff]
    %v1263 = vld [vmem:[#allocation5 + $0x598] sm:$0xff]
    %v1264 = vld [vmem:[#allocation5 + $0x5a0] sm:$0xff]
    %v1265 = vld [vmem:[#allocation5 + $0x5a8] sm:$0xff]
    %v1266 = vld [vmem:[#allocation5 + $0x5b0] sm:$0xff]
    %v1267 = vld [vmem:[#allocation5 + $0x5b8] sm:$0xff]
    %v1268 = vld [vmem:[#allocation5 + $0x5c0] sm:$0xff]
    %v1269 = vld [vmem:[#allocation5 + $0x5c8] sm:$0xff]
    %v1270 = vld [vmem:[#allocation5 + $0x5d0] sm:$0xff]
    %v1271 = vld [vmem:[#allocation5 + $0x5d8] sm:$0xff]
    %v1272 = vld [vmem:[#allocation5 + $0x5e0] sm:$0xff]
    %v1273 = vld [vmem:[#allocation5 + $0x5e8] sm:$0xff]
    %v1274 = vld [vmem:[#allocation5 + $0x5f0] sm:$0xff]
    %v1275 = vld [vmem:[#allocation5 + $0x5f8] sm:$0xff]
    %v1276 = vld [vmem:[#allocation5 + $0x600] sm:$0xff]
    %v1277 = vld [vmem:[#allocation5 + $0x608] sm:$0xff]
    %v1278 = vld [vmem:[#allocation5 + $0x610] sm:$0xff]
    %v1279 = vld [vmem:[#allocation5 + $0x618] sm:$0xff]
    %v1280 = vld [vmem:[#allocation5 + $0x620] sm:$0xff]
    %v1281 = vld [vmem:[#allocation5 + $0x628] sm:$0xff]
    %v1282 = vld [vmem:[#allocation5 + $0x630] sm:$0xff]
    %v1283 = vld [vmem:[#allocation5 + $0x638] sm:$0xff]
    %v1284 = vld [vmem:[#allocation5 + $0x640] sm:$0xff]
    %v1285 = vld [vmem:[#allocation5 + $0x648] sm:$0xff]
    %v1286 = vld [vmem:[#allocation5 + $0x650] sm:$0xff]
    %v1287 = vld [vmem:[#allocation5 + $0x658] sm:$0xff]
    %v1288 = vld [vmem:[#allocation5 + $0x660] sm:$0xff]
    %v1289 = vld [vmem:[#allocation5 + $0x668] sm:$0xff]
    %v1290 = vld [vmem:[#allocation5 + $0x670] sm:$0xff]
    %v1291 = vld [vmem:[#allocation5 + $0x678] sm:$0xff]
    %v1292 = vld [vmem:[#allocation5 + $0x680] sm:$0xff]
    %v1293 = vld [vmem:[#allocation5 + $0x688] sm:$0xff]
    %v1294 = vld [vmem:[#allocation5 + $0x690] sm:$0xff]
    %v1295 = vld [vmem:[#allocation5 + $0x698] sm:$0xff]
    %v1296 = vld [vmem:[#allocation5 + $0x6a0] sm:$0xff]
    %v1297 = vld [vmem:[#allocation5 + $0x6a8] sm:$0xff]
    %v1298 = vld [vmem:[#allocation5 + $0x6b0] sm:$0xff]
    %v1299 = vld [vmem:[#allocation5 + $0x6b8] sm:$0xff]
    %v1300 = vld [vmem:[#allocation5 + $0x6c0] sm:$0xff]
    %v1301 = vld [vmem:[#allocation5 + $0x6c8] sm:$0xff]
    %v1302 = vld [vmem:[#allocation5 + $0x6d0] sm:$0xff]
    %v1303 = vld [vmem:[#allocation5 + $0x6d8] sm:$0xff]
    %v1304 = vld [vmem:[#allocation5 + $0x6e0] sm:$0xff]
    %v1305 = vld [vmem:[#allocation5 + $0x6e8] sm:$0xff]
    %v1306 = vld [vmem:[#allocation5 + $0x6f0] sm:$0xff]
    %v1307 = vld [vmem:[#allocation5 + $0x6f8] sm:$0xff]
    %v1308 = vld [vmem:[#allocation5 + $0x700] sm:$0xff]
    %v1309 = vld [vmem:[#allocation5 + $0x708] sm:$0xff]
    %v1310 = vld [vmem:[#allocation5 + $0x710] sm:$0xff]
    %v1311 = vld [vmem:[#allocation5 + $0x718] sm:$0xff]
    %v1312 = vld [vmem:[#allocation5 + $0x720] sm:$0xff]
    %v1313 = vld [vmem:[#allocation5 + $0x728] sm:$0xff]
    %v1314 = vld [vmem:[#allocation5 + $0x730] sm:$0xff]
    %v1315 = vld [vmem:[#allocation5 + $0x738] sm:$0xff]
    %v1316 = vld [vmem:[#allocation5 + $0x740] sm:$0xff]
    %v1317 = vld [vmem:[#allocation5 + $0x748] sm:$0xff]
    %v1318 = vld [vmem:[#allocation5 + $0x750] sm:$0xff]
    %v1319 = vld [vmem:[#allocation5 + $0x758] sm:$0xff]
    %v1320 = vld [vmem:[#allocation5 + $0x760] sm:$0xff]
    %v1321 = vld [vmem:[#allocation5 + $0x768] sm:$0xff]
    %v1322 = vld [vmem:[#allocation5 + $0x770] sm:$0xff]
    %v1323 = vld [vmem:[#allocation5 + $0x778] sm:$0xff]
    %v1324 = vld [vmem:[#allocation5 + $0x780] sm:$0xff]
    %v1325 = vld [vmem:[#allocation5 + $0x788] sm:$0xff]
    %v1326 = vld [vmem:[#allocation5 + $0x790] sm:$0xff]
    %v1327 = vld [vmem:[#allocation5 + $0x798] sm:$0xff]
    %v1328 = vld [vmem:[#allocation5 + $0x7a0] sm:$0xff]
    %v1329 = vld [vmem:[#allocation5 + $0x7a8] sm:$0xff]
    %v1330 = vld [vmem:[#allocation5 + $0x7b0] sm:$0xff]
    %v1331 = vld [vmem:[#allocation5 + $0x7b8] sm:$0xff]
    %v1332 = vld [vmem:[#allocation5 + $0x7c0] sm:$0xff]
    %v1333 = vld [vmem:[#allocation5 + $0x7c8] sm:$0xff]
    %v1334 = vld [vmem:[#allocation5 + $0x7d0] sm:$0xff]
    %v1335 = vld [vmem:[#allocation5 + $0x7d8] sm:$0xff]
    %v1336 = vld [vmem:[#allocation5 + $0x7e0] sm:$0xff]
    %v1337 = vld [vmem:[#allocation5 + $0x7e8] sm:$0xff]
    %v1338 = vld [vmem:[#allocation5 + $0x7f0] sm:$0xff]
    %v1339 = vld [vmem:[#allocation5 + $0x7f8] sm:$0xff]
    %v1340 = vld [vmem:[%s8] sm:$0xf]
    %v1342 = vlaneseq
    %v1343 = vshrl.u32 %v1342, 7
    %v1344 = vsub.s32 0, %v1343
    %v1345 = vrot.slane %v1340, %v1344
    %v1346 = vlaneseq
    %v1347 = vshrl.u32 %v1346, 7
    %v1348 = vsub.s32 1, %v1347
    %v1349 = vrot.slane %v1340, %v1348
    %v1350 = vlaneseq
    %v1351 = vshrl.u32 %v1350, 7
    %v1352 = vsub.s32 2, %v1351
    %v1353 = vrot.slane %v1340, %v1352
    %v1354 = vlaneseq
    %v1355 = vshrl.u32 %v1354, 7
    %v1356 = vsub.s32 3, %v1355
    %v1357 = vrot.slane %v1340, %v1356
    %v1618 = vunpack.c.l.b16 %v1084
    %v1619 = vunpack.c.h.b16 %v1084
    %v1620 = vunpack.c.l.b16 %v1085
    %v1621 = vunpack.c.h.b16 %v1085
    %v1622 = vunpack.c.l.b16 %v1086
    %v1623 = vunpack.c.h.b16 %v1086
    %v1624 = vunpack.c.l.b16 %v1087
    %v1625 = vunpack.c.h.b16 %v1087
    %v1626 = vunpack.c.l.b16 %v1088
    %v1627 = vunpack.c.h.b16 %v1088
    %v1628 = vunpack.c.l.b16 %v1089
    %v1629 = vunpack.c.h.b16 %v1089
    %v1630 = vunpack.c.l.b16 %v1090
    %v1631 = vunpack.c.h.b16 %v1090
    %v1632 = vunpack.c.l.b16 %v1091
    %v1633 = vunpack.c.h.b16 %v1091
    %v1634 = vunpack.c.l.b16 %v1092
    %v1635 = vunpack.c.h.b16 %v1092
    %v1636 = vunpack.c.l.b16 %v1093
    %v1637 = vunpack.c.h.b16 %v1093
    %v1638 = vunpack.c.l.b16 %v1094
    %v1639 = vunpack.c.h.b16 %v1094
    %v1640 = vunpack.c.l.b16 %v1095
    %v1641 = vunpack.c.h.b16 %v1095
    %v1642 = vunpack.c.l.b16 %v1096
    %v1643 = vunpack.c.h.b16 %v1096
    %v1644 = vunpack.c.l.b16 %v1097
    %v1645 = vunpack.c.h.b16 %v1097
    %v1646 = vunpack.c.l.b16 %v1098
    %v1647 = vunpack.c.h.b16 %v1098
    %v1648 = vunpack.c.l.b16 %v1099
    %v1649 = vunpack.c.h.b16 %v1099
    %v1650 = vunpack.c.l.b16 %v1100
    %v1651 = vunpack.c.h.b16 %v1100
    %v1652 = vunpack.c.l.b16 %v1101
    %v1653 = vunpack.c.h.b16 %v1101
    %v1654 = vunpack.c.l.b16 %v1102
    %v1655 = vunpack.c.h.b16 %v1102
    %v1656 = vunpack.c.l.b16 %v1103
    %v1657 = vunpack.c.h.b16 %v1103
    %v1658 = vunpack.c.l.b16 %v1104
    %v1659 = vunpack.c.h.b16 %v1104
    %v1660 = vunpack.c.l.b16 %v1105
    %v1661 = vunpack.c.h.b16 %v1105
    %v1662 = vunpack.c.l.b16 %v1106
    %v1663 = vunpack.c.h.b16 %v1106
    %v1664 = vunpack.c.l.b16 %v1107
    %v1665 = vunpack.c.h.b16 %v1107
    %v1666 = vunpack.c.l.b16 %v1108
    %v1667 = vunpack.c.h.b16 %v1108
    %v1668 = vunpack.c.l.b16 %v1109
    %v1669 = vunpack.c.h.b16 %v1109
    %v1670 = vunpack.c.l.b16 %v1110
    %v1671 = vunpack.c.h.b16 %v1110
    %v1672 = vunpack.c.l.b16 %v1111
    %v1673 = vunpack.c.h.b16 %v1111
    %v1674 = vunpack.c.l.b16 %v1112
    %v1675 = vunpack.c.h.b16 %v1112
    %v1676 = vunpack.c.l.b16 %v1113
    %v1677 = vunpack.c.h.b16 %v1113
    %v1678 = vunpack.c.l.b16 %v1114
    %v1679 = vunpack.c.h.b16 %v1114
    %v1680 = vunpack.c.l.b16 %v1115
    %v1681 = vunpack.c.h.b16 %v1115
    %v1682 = vunpack.c.l.b16 %v1116
    %v1683 = vunpack.c.h.b16 %v1116
    %v1684 = vunpack.c.l.b16 %v1117
    %v1685 = vunpack.c.h.b16 %v1117
    %v1686 = vunpack.c.l.b16 %v1118
    %v1687 = vunpack.c.h.b16 %v1118
    %v1688 = vunpack.c.l.b16 %v1119
    %v1689 = vunpack.c.h.b16 %v1119
    %v1690 = vunpack.c.l.b16 %v1120
    %v1691 = vunpack.c.h.b16 %v1120
    %v1692 = vunpack.c.l.b16 %v1121
    %v1693 = vunpack.c.h.b16 %v1121
    %v1694 = vunpack.c.l.b16 %v1122
    %v1695 = vunpack.c.h.b16 %v1122
    %v1696 = vunpack.c.l.b16 %v1123
    %v1697 = vunpack.c.h.b16 %v1123
    %v1698 = vunpack.c.l.b16 %v1124
    %v1699 = vunpack.c.h.b16 %v1124
    %v1700 = vunpack.c.l.b16 %v1125
    %v1701 = vunpack.c.h.b16 %v1125
    %v1702 = vunpack.c.l.b16 %v1126
    %v1703 = vunpack.c.h.b16 %v1126
    %v1704 = vunpack.c.l.b16 %v1127
    %v1705 = vunpack.c.h.b16 %v1127
    %v1706 = vunpack.c.l.b16 %v1128
    %v1707 = vunpack.c.h.b16 %v1128
    %v1708 = vunpack.c.l.b16 %v1129
    %v1709 = vunpack.c.h.b16 %v1129
    %v1710 = vunpack.c.l.b16 %v1130
    %v1711 = vunpack.c.h.b16 %v1130
    %v1712 = vunpack.c.l.b16 %v1131
    %v1713 = vunpack.c.h.b16 %v1131
    %v1714 = vunpack.c.l.b16 %v1132
    %v1715 = vunpack.c.h.b16 %v1132
    %v1716 = vunpack.c.l.b16 %v1133
    %v1717 = vunpack.c.h.b16 %v1133
    %v1718 = vunpack.c.l.b16 %v1134
    %v1719 = vunpack.c.h.b16 %v1134
    %v1720 = vunpack.c.l.b16 %v1135
    %v1721 = vunpack.c.h.b16 %v1135
    %v1722 = vunpack.c.l.b16 %v1136
    %v1723 = vunpack.c.h.b16 %v1136
    %v1724 = vunpack.c.l.b16 %v1137
    %v1725 = vunpack.c.h.b16 %v1137
    %v1726 = vunpack.c.l.b16 %v1138
    %v1727 = vunpack.c.h.b16 %v1138
    %v1728 = vunpack.c.l.b16 %v1139
    %v1729 = vunpack.c.h.b16 %v1139
    %v1730 = vunpack.c.l.b16 %v1140
    %v1731 = vunpack.c.h.b16 %v1140
    %v1732 = vunpack.c.l.b16 %v1141
    %v1733 = vunpack.c.h.b16 %v1141
    %v1734 = vunpack.c.l.b16 %v1142
    %v1735 = vunpack.c.h.b16 %v1142
    %v1736 = vunpack.c.l.b16 %v1143
    %v1737 = vunpack.c.h.b16 %v1143
    %v1738 = vunpack.c.l.b16 %v1144
    %v1739 = vunpack.c.h.b16 %v1144
    %v1740 = vunpack.c.l.b16 %v1145
    %v1741 = vunpack.c.h.b16 %v1145
    %v1742 = vunpack.c.l.b16 %v1146
    %v1743 = vunpack.c.h.b16 %v1146
    %v1744 = vunpack.c.l.b16 %v1147
    %v1745 = vunpack.c.h.b16 %v1147
    %v1746 = vunpack.c.l.b16 %v1148
    %v1747 = vunpack.c.h.b16 %v1148
    %v1748 = vunpack.c.l.b16 %v1149
    %v1749 = vunpack.c.h.b16 %v1149
    %v1750 = vunpack.c.l.b16 %v1150
    %v1751 = vunpack.c.h.b16 %v1150
    %v1752 = vunpack.c.l.b16 %v1151
    %v1753 = vunpack.c.h.b16 %v1151
    %v1754 = vunpack.c.l.b16 %v1152
    %v1755 = vunpack.c.h.b16 %v1152
    %v1756 = vunpack.c.l.b16 %v1153
    %v1757 = vunpack.c.h.b16 %v1153
    %v1758 = vunpack.c.l.b16 %v1154
    %v1759 = vunpack.c.h.b16 %v1154
    %v1760 = vunpack.c.l.b16 %v1155
    %v1761 = vunpack.c.h.b16 %v1155
    %v1762 = vunpack.c.l.b16 %v1156
    %v1763 = vunpack.c.h.b16 %v1156
    %v1764 = vunpack.c.l.b16 %v1157
    %v1765 = vunpack.c.h.b16 %v1157
    %v1766 = vunpack.c.l.b16 %v1158
    %v1767 = vunpack.c.h.b16 %v1158
    %v1768 = vunpack.c.l.b16 %v1159
    %v1769 = vunpack.c.h.b16 %v1159
    %v1770 = vunpack.c.l.b16 %v1160
    %v1771 = vunpack.c.h.b16 %v1160
    %v1772 = vunpack.c.l.b16 %v1161
    %v1773 = vunpack.c.h.b16 %v1161
    %v1774 = vunpack.c.l.b16 %v1162
    %v1775 = vunpack.c.h.b16 %v1162
    %v1776 = vunpack.c.l.b16 %v1163
    %v1777 = vunpack.c.h.b16 %v1163
    %v1778 = vunpack.c.l.b16 %v1164
    %v1779 = vunpack.c.h.b16 %v1164
    %v1780 = vunpack.c.l.b16 %v1165
    %v1781 = vunpack.c.h.b16 %v1165
    %v1782 = vunpack.c.l.b16 %v1166
    %v1783 = vunpack.c.h.b16 %v1166
    %v1784 = vunpack.c.l.b16 %v1167
    %v1785 = vunpack.c.h.b16 %v1167
    %v1786 = vunpack.c.l.b16 %v1168
    %v1787 = vunpack.c.h.b16 %v1168
    %v1788 = vunpack.c.l.b16 %v1169
    %v1789 = vunpack.c.h.b16 %v1169
    %v1790 = vunpack.c.l.b16 %v1170
    %v1791 = vunpack.c.h.b16 %v1170
    %v1792 = vunpack.c.l.b16 %v1171
    %v1793 = vunpack.c.h.b16 %v1171
    %v1794 = vunpack.c.l.b16 %v1172
    %v1795 = vunpack.c.h.b16 %v1172
    %v1796 = vunpack.c.l.b16 %v1173
    %v1797 = vunpack.c.h.b16 %v1173
    %v1798 = vunpack.c.l.b16 %v1174
    %v1799 = vunpack.c.h.b16 %v1174
    %v1800 = vunpack.c.l.b16 %v1175
    %v1801 = vunpack.c.h.b16 %v1175
    %v1802 = vunpack.c.l.b16 %v1176
    %v1803 = vunpack.c.h.b16 %v1176
    %v1804 = vunpack.c.l.b16 %v1177
    %v1805 = vunpack.c.h.b16 %v1177
    %v1806 = vunpack.c.l.b16 %v1178
    %v1807 = vunpack.c.h.b16 %v1178
    %v1808 = vunpack.c.l.b16 %v1179
    %v1809 = vunpack.c.h.b16 %v1179
    %v1810 = vunpack.c.l.b16 %v1180
    %v1811 = vunpack.c.h.b16 %v1180
    %v1812 = vunpack.c.l.b16 %v1181
    %v1813 = vunpack.c.h.b16 %v1181
    %v1814 = vunpack.c.l.b16 %v1182
    %v1815 = vunpack.c.h.b16 %v1182
    %v1816 = vunpack.c.l.b16 %v1183
    %v1817 = vunpack.c.h.b16 %v1183
    %v1818 = vunpack.c.l.b16 %v1184
    %v1819 = vunpack.c.h.b16 %v1184
    %v1820 = vunpack.c.l.b16 %v1185
    %v1821 = vunpack.c.h.b16 %v1185
    %v1822 = vunpack.c.l.b16 %v1186
    %v1823 = vunpack.c.h.b16 %v1186
    %v1824 = vunpack.c.l.b16 %v1187
    %v1825 = vunpack.c.h.b16 %v1187
    %v1826 = vunpack.c.l.b16 %v1188
    %v1827 = vunpack.c.h.b16 %v1188
    %v1828 = vunpack.c.l.b16 %v1189
    %v1829 = vunpack.c.h.b16 %v1189
    %v1830 = vunpack.c.l.b16 %v1190
    %v1831 = vunpack.c.h.b16 %v1190
    %v1832 = vunpack.c.l.b16 %v1191
    %v1833 = vunpack.c.h.b16 %v1191
    %v1834 = vunpack.c.l.b16 %v1192
    %v1835 = vunpack.c.h.b16 %v1192
    %v1836 = vunpack.c.l.b16 %v1193
    %v1837 = vunpack.c.h.b16 %v1193
    %v1838 = vunpack.c.l.b16 %v1194
    %v1839 = vunpack.c.h.b16 %v1194
    %v1840 = vunpack.c.l.b16 %v1195
    %v1841 = vunpack.c.h.b16 %v1195
    %v1842 = vunpack.c.l.b16 %v1196
    %v1843 = vunpack.c.h.b16 %v1196
    %v1844 = vunpack.c.l.b16 %v1197
    %v1845 = vunpack.c.h.b16 %v1197
    %v1846 = vunpack.c.l.b16 %v1198
    %v1847 = vunpack.c.h.b16 %v1198
    %v1848 = vunpack.c.l.b16 %v1199
    %v1849 = vunpack.c.h.b16 %v1199
    %v1850 = vunpack.c.l.b16 %v1200
    %v1851 = vunpack.c.h.b16 %v1200
    %v1852 = vunpack.c.l.b16 %v1201
    %v1853 = vunpack.c.h.b16 %v1201
    %v1854 = vunpack.c.l.b16 %v1202
    %v1855 = vunpack.c.h.b16 %v1202
    %v1856 = vunpack.c.l.b16 %v1203
    %v1857 = vunpack.c.h.b16 %v1203
    %v1858 = vunpack.c.l.b16 %v1204
    %v1859 = vunpack.c.h.b16 %v1204
    %v1860 = vunpack.c.l.b16 %v1205
    %v1861 = vunpack.c.h.b16 %v1205
    %v1862 = vunpack.c.l.b16 %v1206
    %v1863 = vunpack.c.h.b16 %v1206
    %v1864 = vunpack.c.l.b16 %v1207
    %v1865 = vunpack.c.h.b16 %v1207
    %v1866 = vunpack.c.l.b16 %v1208
    %v1867 = vunpack.c.h.b16 %v1208
    %v1868 = vunpack.c.l.b16 %v1209
    %v1869 = vunpack.c.h.b16 %v1209
    %v1870 = vunpack.c.l.b16 %v1210
    %v1871 = vunpack.c.h.b16 %v1210
    %v1872 = vunpack.c.l.b16 %v1211
    %v1873 = vunpack.c.h.b16 %v1211
    %v1874 = vunpack.c.l.b16 %v1212
    %v1875 = vunpack.c.h.b16 %v1212
    %v1876 = vunpack.c.l.b16 %v1213
    %v1877 = vunpack.c.h.b16 %v1213
    %v1878 = vunpack.c.l.b16 %v1214
    %v1879 = vunpack.c.h.b16 %v1214
    %v1880 = vunpack.c.l.b16 %v1215
    %v1881 = vunpack.c.h.b16 %v1215
    %v1882 = vunpack.c.l.b16 %v1216
    %v1883 = vunpack.c.h.b16 %v1216
    %v1884 = vunpack.c.l.b16 %v1217
    %v1885 = vunpack.c.h.b16 %v1217
    %v1886 = vunpack.c.l.b16 %v1218
    %v1887 = vunpack.c.h.b16 %v1218
    %v1888 = vunpack.c.l.b16 %v1219
    %v1889 = vunpack.c.h.b16 %v1219
    %v1890 = vunpack.c.l.b16 %v1220
    %v1891 = vunpack.c.h.b16 %v1220
    %v1892 = vunpack.c.l.b16 %v1221
    %v1893 = vunpack.c.h.b16 %v1221
    %v1894 = vunpack.c.l.b16 %v1222
    %v1895 = vunpack.c.h.b16 %v1222
    %v1896 = vunpack.c.l.b16 %v1223
    %v1897 = vunpack.c.h.b16 %v1223
    %v1898 = vunpack.c.l.b16 %v1224
    %v1899 = vunpack.c.h.b16 %v1224
    %v1900 = vunpack.c.l.b16 %v1225
    %v1901 = vunpack.c.h.b16 %v1225
    %v1902 = vunpack.c.l.b16 %v1226
    %v1903 = vunpack.c.h.b16 %v1226
    %v1904 = vunpack.c.l.b16 %v1227
    %v1905 = vunpack.c.h.b16 %v1227
    %v1906 = vunpack.c.l.b16 %v1228
    %v1907 = vunpack.c.h.b16 %v1228
    %v1908 = vunpack.c.l.b16 %v1229
    %v1909 = vunpack.c.h.b16 %v1229
    %v1910 = vunpack.c.l.b16 %v1230
    %v1911 = vunpack.c.h.b16 %v1230
    %v1912 = vunpack.c.l.b16 %v1231
    %v1913 = vunpack.c.h.b16 %v1231
    %v1914 = vunpack.c.l.b16 %v1232
    %v1915 = vunpack.c.h.b16 %v1232
    %v1916 = vunpack.c.l.b16 %v1233
    %v1917 = vunpack.c.h.b16 %v1233
    %v1918 = vunpack.c.l.b16 %v1234
    %v1919 = vunpack.c.h.b16 %v1234
    %v1920 = vunpack.c.l.b16 %v1235
    %v1921 = vunpack.c.h.b16 %v1235
    %v1922 = vunpack.c.l.b16 %v1236
    %v1923 = vunpack.c.h.b16 %v1236
    %v1924 = vunpack.c.l.b16 %v1237
    %v1925 = vunpack.c.h.b16 %v1237
    %v1926 = vunpack.c.l.b16 %v1238
    %v1927 = vunpack.c.h.b16 %v1238
    %v1928 = vunpack.c.l.b16 %v1239
    %v1929 = vunpack.c.h.b16 %v1239
    %v1930 = vunpack.c.l.b16 %v1240
    %v1931 = vunpack.c.h.b16 %v1240
    %v1932 = vunpack.c.l.b16 %v1241
    %v1933 = vunpack.c.h.b16 %v1241
    %v1934 = vunpack.c.l.b16 %v1242
    %v1935 = vunpack.c.h.b16 %v1242
    %v1936 = vunpack.c.l.b16 %v1243
    %v1937 = vunpack.c.h.b16 %v1243
    %v1938 = vunpack.c.l.b16 %v1244
    %v1939 = vunpack.c.h.b16 %v1244
    %v1940 = vunpack.c.l.b16 %v1245
    %v1941 = vunpack.c.h.b16 %v1245
    %v1942 = vunpack.c.l.b16 %v1246
    %v1943 = vunpack.c.h.b16 %v1246
    %v1944 = vunpack.c.l.b16 %v1247
    %v1945 = vunpack.c.h.b16 %v1247
    %v1946 = vunpack.c.l.b16 %v1248
    %v1947 = vunpack.c.h.b16 %v1248
    %v1948 = vunpack.c.l.b16 %v1249
    %v1949 = vunpack.c.h.b16 %v1249
    %v1950 = vunpack.c.l.b16 %v1250
    %v1951 = vunpack.c.h.b16 %v1250
    %v1952 = vunpack.c.l.b16 %v1251
    %v1953 = vunpack.c.h.b16 %v1251
    %v1954 = vunpack.c.l.b16 %v1252
    %v1955 = vunpack.c.h.b16 %v1252
    %v1956 = vunpack.c.l.b16 %v1253
    %v1957 = vunpack.c.h.b16 %v1253
    %v1958 = vunpack.c.l.b16 %v1254
    %v1959 = vunpack.c.h.b16 %v1254
    %v1960 = vunpack.c.l.b16 %v1255
    %v1961 = vunpack.c.h.b16 %v1255
    %v1962 = vunpack.c.l.b16 %v1256
    %v1963 = vunpack.c.h.b16 %v1256
    %v1964 = vunpack.c.l.b16 %v1257
    %v1965 = vunpack.c.h.b16 %v1257
    %v1966 = vunpack.c.l.b16 %v1258
    %v1967 = vunpack.c.h.b16 %v1258
    %v1968 = vunpack.c.l.b16 %v1259
    %v1969 = vunpack.c.h.b16 %v1259
    %v1970 = vunpack.c.l.b16 %v1260
    %v1971 = vunpack.c.h.b16 %v1260
    %v1972 = vunpack.c.l.b16 %v1261
    %v1973 = vunpack.c.h.b16 %v1261
    %v1974 = vunpack.c.l.b16 %v1262
    %v1975 = vunpack.c.h.b16 %v1262
    %v1976 = vunpack.c.l.b16 %v1263
    %v1977 = vunpack.c.h.b16 %v1263
    %v1978 = vunpack.c.l.b16 %v1264
    %v1979 = vunpack.c.h.b16 %v1264
    %v1980 = vunpack.c.l.b16 %v1265
    %v1981 = vunpack.c.h.b16 %v1265
    %v1982 = vunpack.c.l.b16 %v1266
    %v1983 = vunpack.c.h.b16 %v1266
    %v1984 = vunpack.c.l.b16 %v1267
    %v1985 = vunpack.c.h.b16 %v1267
    %v1986 = vunpack.c.l.b16 %v1268
    %v1987 = vunpack.c.h.b16 %v1268
    %v1988 = vunpack.c.l.b16 %v1269
    %v1989 = vunpack.c.h.b16 %v1269
    %v1990 = vunpack.c.l.b16 %v1270
    %v1991 = vunpack.c.h.b16 %v1270
    %v1992 = vunpack.c.l.b16 %v1271
    %v1993 = vunpack.c.h.b16 %v1271
    %v1994 = vunpack.c.l.b16 %v1272
    %v1995 = vunpack.c.h.b16 %v1272
    %v1996 = vunpack.c.l.b16 %v1273
    %v1997 = vunpack.c.h.b16 %v1273
    %v1998 = vunpack.c.l.b16 %v1274
    %v1999 = vunpack.c.h.b16 %v1274
    %v2000 = vunpack.c.l.b16 %v1275
    %v2001 = vunpack.c.h.b16 %v1275
    %v2002 = vunpack.c.l.b16 %v1276
    %v2003 = vunpack.c.h.b16 %v1276
    %v2004 = vunpack.c.l.b16 %v1277
    %v2005 = vunpack.c.h.b16 %v1277
    %v2006 = vunpack.c.l.b16 %v1278
    %v2007 = vunpack.c.h.b16 %v1278
    %v2008 = vunpack.c.l.b16 %v1279
    %v2009 = vunpack.c.h.b16 %v1279
    %v2010 = vunpack.c.l.b16 %v1280
    %v2011 = vunpack.c.h.b16 %v1280
    %v2012 = vunpack.c.l.b16 %v1281
    %v2013 = vunpack.c.h.b16 %v1281
    %v2014 = vunpack.c.l.b16 %v1282
    %v2015 = vunpack.c.h.b16 %v1282
    %v2016 = vunpack.c.l.b16 %v1283
    %v2017 = vunpack.c.h.b16 %v1283
    %v2018 = vunpack.c.l.b16 %v1284
    %v2019 = vunpack.c.h.b16 %v1284
    %v2020 = vunpack.c.l.b16 %v1285
    %v2021 = vunpack.c.h.b16 %v1285
    %v2022 = vunpack.c.l.b16 %v1286
    %v2023 = vunpack.c.h.b16 %v1286
    %v2024 = vunpack.c.l.b16 %v1287
    %v2025 = vunpack.c.h.b16 %v1287
    %v2026 = vunpack.c.l.b16 %v1288
    %v2027 = vunpack.c.h.b16 %v1288
    %v2028 = vunpack.c.l.b16 %v1289
    %v2029 = vunpack.c.h.b16 %v1289
    %v2030 = vunpack.c.l.b16 %v1290
    %v2031 = vunpack.c.h.b16 %v1290
    %v2032 = vunpack.c.l.b16 %v1291
    %v2033 = vunpack.c.h.b16 %v1291
    %v2034 = vunpack.c.l.b16 %v1292
    %v2035 = vunpack.c.h.b16 %v1292
    %v2036 = vunpack.c.l.b16 %v1293
    %v2037 = vunpack.c.h.b16 %v1293
    %v2038 = vunpack.c.l.b16 %v1294
    %v2039 = vunpack.c.h.b16 %v1294
    %v2040 = vunpack.c.l.b16 %v1295
    %v2041 = vunpack.c.h.b16 %v1295
    %v2042 = vunpack.c.l.b16 %v1296
    %v2043 = vunpack.c.h.b16 %v1296
    %v2044 = vunpack.c.l.b16 %v1297
    %v2045 = vunpack.c.h.b16 %v1297
    %v2046 = vunpack.c.l.b16 %v1298
    %v2047 = vunpack.c.h.b16 %v1298
    %v2048 = vunpack.c.l.b16 %v1299
    %v2049 = vunpack.c.h.b16 %v1299
    %v2050 = vunpack.c.l.b16 %v1300
    %v2051 = vunpack.c.h.b16 %v1300
    %v2052 = vunpack.c.l.b16 %v1301
    %v2053 = vunpack.c.h.b16 %v1301
    %v2054 = vunpack.c.l.b16 %v1302
    %v2055 = vunpack.c.h.b16 %v1302
    %v2056 = vunpack.c.l.b16 %v1303
    %v2057 = vunpack.c.h.b16 %v1303
    %v2058 = vunpack.c.l.b16 %v1304
    %v2059 = vunpack.c.h.b16 %v1304
    %v2060 = vunpack.c.l.b16 %v1305
    %v2061 = vunpack.c.h.b16 %v1305
    %v2062 = vunpack.c.l.b16 %v1306
    %v2063 = vunpack.c.h.b16 %v1306
    %v2064 = vunpack.c.l.b16 %v1307
    %v2065 = vunpack.c.h.b16 %v1307
    %v2066 = vunpack.c.l.b16 %v1308
    %v2067 = vunpack.c.h.b16 %v1308
    %v2068 = vunpack.c.l.b16 %v1309
    %v2069 = vunpack.c.h.b16 %v1309
    %v2070 = vunpack.c.l.b16 %v1310
    %v2071 = vunpack.c.h.b16 %v1310
    %v2072 = vunpack.c.l.b16 %v1311
    %v2073 = vunpack.c.h.b16 %v1311
    %v2074 = vunpack.c.l.b16 %v1312
    %v2075 = vunpack.c.h.b16 %v1312
    %v2076 = vunpack.c.l.b16 %v1313
    %v2077 = vunpack.c.h.b16 %v1313
    %v2078 = vunpack.c.l.b16 %v1314
    %v2079 = vunpack.c.h.b16 %v1314
    %v2080 = vunpack.c.l.b16 %v1315
    %v2081 = vunpack.c.h.b16 %v1315
    %v2082 = vunpack.c.l.b16 %v1316
    %v2083 = vunpack.c.h.b16 %v1316
    %v2084 = vunpack.c.l.b16 %v1317
    %v2085 = vunpack.c.h.b16 %v1317
    %v2086 = vunpack.c.l.b16 %v1318
    %v2087 = vunpack.c.h.b16 %v1318
    %v2088 = vunpack.c.l.b16 %v1319
    %v2089 = vunpack.c.h.b16 %v1319
    %v2090 = vunpack.c.l.b16 %v1320
    %v2091 = vunpack.c.h.b16 %v1320
    %v2092 = vunpack.c.l.b16 %v1321
    %v2093 = vunpack.c.h.b16 %v1321
    %v2094 = vunpack.c.l.b16 %v1322
    %v2095 = vunpack.c.h.b16 %v1322
    %v2096 = vunpack.c.l.b16 %v1323
    %v2097 = vunpack.c.h.b16 %v1323
    %v2098 = vunpack.c.l.b16 %v1324
    %v2099 = vunpack.c.h.b16 %v1324
    %v2100 = vunpack.c.l.b16 %v1325
    %v2101 = vunpack.c.h.b16 %v1325
    %v2102 = vunpack.c.l.b16 %v1326
    %v2103 = vunpack.c.h.b16 %v1326
    %v2104 = vunpack.c.l.b16 %v1327
    %v2105 = vunpack.c.h.b16 %v1327
    %v2106 = vunpack.c.l.b16 %v1328
    %v2107 = vunpack.c.h.b16 %v1328
    %v2108 = vunpack.c.l.b16 %v1329
    %v2109 = vunpack.c.h.b16 %v1329
    %v2110 = vunpack.c.l.b16 %v1330
    %v2111 = vunpack.c.h.b16 %v1330
    %v2112 = vunpack.c.l.b16 %v1331
    %v2113 = vunpack.c.h.b16 %v1331
    %v2114 = vunpack.c.l.b16 %v1332
    %v2115 = vunpack.c.h.b16 %v1332
    %v2116 = vunpack.c.l.b16 %v1333
    %v2117 = vunpack.c.h.b16 %v1333
    %v2118 = vunpack.c.l.b16 %v1334
    %v2119 = vunpack.c.h.b16 %v1334
    %v2120 = vunpack.c.l.b16 %v1335
    %v2121 = vunpack.c.h.b16 %v1335
    %v2122 = vunpack.c.l.b16 %v1336
    %v2123 = vunpack.c.h.b16 %v1336
    %v2124 = vunpack.c.l.b16 %v1337
    %v2125 = vunpack.c.h.b16 %v1337
    %v2126 = vunpack.c.l.b16 %v1338
    %v2127 = vunpack.c.h.b16 %v1338
    %v2128 = vunpack.c.l.b16 %v1339
    %v2129 = vunpack.c.h.b16 %v1339
    %v2130 = vpack.c.b16 %v1622, %v1618
    %v2131 = vpack.c.b16 %v1623, %v1619
    %v2132 = vpack.c.b16 %v1624, %v1620
    %v2133 = vpack.c.b16 %v1625, %v1621
    %v2134 = vpack.c.b16 %v1630, %v1626
    %v2135 = vpack.c.b16 %v1631, %v1627
    %v2136 = vpack.c.b16 %v1632, %v1628
    %v2137 = vpack.c.b16 %v1633, %v1629
    %v2138 = vpack.c.b16 %v1638, %v1634
    %v2139 = vpack.c.b16 %v1639, %v1635
    %v2140 = vpack.c.b16 %v1640, %v1636
    %v2141 = vpack.c.b16 %v1641, %v1637
    %v2142 = vpack.c.b16 %v1646, %v1642
    %v2143 = vpack.c.b16 %v1647, %v1643
    %v2144 = vpack.c.b16 %v1648, %v1644
    %v2145 = vpack.c.b16 %v1649, %v1645
    %v2146 = vpack.c.b16 %v1654, %v1650
    %v2147 = vpack.c.b16 %v1655, %v1651
    %v2148 = vpack.c.b16 %v1656, %v1652
    %v2149 = vpack.c.b16 %v1657, %v1653
    %v2150 = vpack.c.b16 %v1662, %v1658
    %v2151 = vpack.c.b16 %v1663, %v1659
    %v2152 = vpack.c.b16 %v1664, %v1660
    %v2153 = vpack.c.b16 %v1665, %v1661
    %v2154 = vpack.c.b16 %v1670, %v1666
    %v2155 = vpack.c.b16 %v1671, %v1667
    %v2156 = vpack.c.b16 %v1672, %v1668
    %v2157 = vpack.c.b16 %v1673, %v1669
    %v2158 = vpack.c.b16 %v1678, %v1674
    %v2159 = vpack.c.b16 %v1679, %v1675
    %v2160 = vpack.c.b16 %v1680, %v1676
    %v2161 = vpack.c.b16 %v1681, %v1677
    %v2162 = vpack.c.b16 %v1686, %v1682
    %v2163 = vpack.c.b16 %v1687, %v1683
    %v2164 = vpack.c.b16 %v1688, %v1684
    %v2165 = vpack.c.b16 %v1689, %v1685
    %v2166 = vpack.c.b16 %v1694, %v1690
    %v2167 = vpack.c.b16 %v1695, %v1691
    %v2168 = vpack.c.b16 %v1696, %v1692
    %v2169 = vpack.c.b16 %v1697, %v1693
    %v2170 = vpack.c.b16 %v1702, %v1698
    %v2171 = vpack.c.b16 %v1703, %v1699
    %v2172 = vpack.c.b16 %v1704, %v1700
    %v2173 = vpack.c.b16 %v1705, %v1701
    %v2174 = vpack.c.b16 %v1710, %v1706
    %v2175 = vpack.c.b16 %v1711, %v1707
    %v2176 = vpack.c.b16 %v1712, %v1708
    %v2177 = vpack.c.b16 %v1713, %v1709
    %v2178 = vpack.c.b16 %v1718, %v1714
    %v2179 = vpack.c.b16 %v1719, %v1715
    %v2180 = vpack.c.b16 %v1720, %v1716
    %v2181 = vpack.c.b16 %v1721, %v1717
    %v2182 = vpack.c.b16 %v1726, %v1722
    %v2183 = vpack.c.b16 %v1727, %v1723
    %v2184 = vpack.c.b16 %v1728, %v1724
    %v2185 = vpack.c.b16 %v1729, %v1725
    %v2186 = vpack.c.b16 %v1734, %v1730
    %v2187 = vpack.c.b16 %v1735, %v1731
    %v2188 = vpack.c.b16 %v1736, %v1732
    %v2189 = vpack.c.b16 %v1737, %v1733
    %v2190 = vpack.c.b16 %v1742, %v1738
    %v2191 = vpack.c.b16 %v1743, %v1739
    %v2192 = vpack.c.b16 %v1744, %v1740
    %v2193 = vpack.c.b16 %v1745, %v1741
    %v2194 = vpack.c.b16 %v1750, %v1746
    %v2195 = vpack.c.b16 %v1751, %v1747
    %v2196 = vpack.c.b16 %v1752, %v1748
    %v2197 = vpack.c.b16 %v1753, %v1749
    %v2198 = vpack.c.b16 %v1758, %v1754
    %v2199 = vpack.c.b16 %v1759, %v1755
    %v2200 = vpack.c.b16 %v1760, %v1756
    %v2201 = vpack.c.b16 %v1761, %v1757
    %v2202 = vpack.c.b16 %v1766, %v1762
    %v2203 = vpack.c.b16 %v1767, %v1763
    %v2204 = vpack.c.b16 %v1768, %v1764
    %v2205 = vpack.c.b16 %v1769, %v1765
    %v2206 = vpack.c.b16 %v1774, %v1770
    %v2207 = vpack.c.b16 %v1775, %v1771
    %v2208 = vpack.c.b16 %v1776, %v1772
    %v2209 = vpack.c.b16 %v1777, %v1773
    %v2210 = vpack.c.b16 %v1782, %v1778
    %v2211 = vpack.c.b16 %v1783, %v1779
    %v2212 = vpack.c.b16 %v1784, %v1780
    %v2213 = vpack.c.b16 %v1785, %v1781
    %v2214 = vpack.c.b16 %v1790, %v1786
    %v2215 = vpack.c.b16 %v1791, %v1787
    %v2216 = vpack.c.b16 %v1792, %v1788
    %v2217 = vpack.c.b16 %v1793, %v1789
    %v2218 = vpack.c.b16 %v1798, %v1794
    %v2219 = vpack.c.b16 %v1799, %v1795
    %v2220 = vpack.c.b16 %v1800, %v1796
    %v2221 = vpack.c.b16 %v1801, %v1797
    %v2222 = vpack.c.b16 %v1806, %v1802
    %v2223 = vpack.c.b16 %v1807, %v1803
    %v2224 = vpack.c.b16 %v1808, %v1804
    %v2225 = vpack.c.b16 %v1809, %v1805
    %v2226 = vpack.c.b16 %v1814, %v1810
    %v2227 = vpack.c.b16 %v1815, %v1811
    %v2228 = vpack.c.b16 %v1816, %v1812
    %v2229 = vpack.c.b16 %v1817, %v1813
    %v2230 = vpack.c.b16 %v1822, %v1818
    %v2231 = vpack.c.b16 %v1823, %v1819
    %v2232 = vpack.c.b16 %v1824, %v1820
    %v2233 = vpack.c.b16 %v1825, %v1821
    %v2234 = vpack.c.b16 %v1830, %v1826
    %v2235 = vpack.c.b16 %v1831, %v1827
    %v2236 = vpack.c.b16 %v1832, %v1828
    %v2237 = vpack.c.b16 %v1833, %v1829
    %v2238 = vpack.c.b16 %v1838, %v1834
    %v2239 = vpack.c.b16 %v1839, %v1835
    %v2240 = vpack.c.b16 %v1840, %v1836
    %v2241 = vpack.c.b16 %v1841, %v1837
    %v2242 = vpack.c.b16 %v1846, %v1842
    %v2243 = vpack.c.b16 %v1847, %v1843
    %v2244 = vpack.c.b16 %v1848, %v1844
    %v2245 = vpack.c.b16 %v1849, %v1845
    %v2246 = vpack.c.b16 %v1854, %v1850
    %v2247 = vpack.c.b16 %v1855, %v1851
    %v2248 = vpack.c.b16 %v1856, %v1852
    %v2249 = vpack.c.b16 %v1857, %v1853
    %v2250 = vpack.c.b16 %v1862, %v1858
    %v2251 = vpack.c.b16 %v1863, %v1859
    %v2252 = vpack.c.b16 %v1864, %v1860
    %v2253 = vpack.c.b16 %v1865, %v1861
    %v2254 = vpack.c.b16 %v1870, %v1866
    %v2255 = vpack.c.b16 %v1871, %v1867
    %v2256 = vpack.c.b16 %v1872, %v1868
    %v2257 = vpack.c.b16 %v1873, %v1869
    %v2258 = vpack.c.b16 %v1878, %v1874
    %v2259 = vpack.c.b16 %v1879, %v1875
    %v2260 = vpack.c.b16 %v1880, %v1876
    %v2261 = vpack.c.b16 %v1881, %v1877
    %v2262 = vpack.c.b16 %v1886, %v1882
    %v2263 = vpack.c.b16 %v1887, %v1883
    %v2264 = vpack.c.b16 %v1888, %v1884
    %v2265 = vpack.c.b16 %v1889, %v1885
    %v2266 = vpack.c.b16 %v1894, %v1890
    %v2267 = vpack.c.b16 %v1895, %v1891
    %v2268 = vpack.c.b16 %v1896, %v1892
    %v2269 = vpack.c.b16 %v1897, %v1893
    %v2270 = vpack.c.b16 %v1902, %v1898
    %v2271 = vpack.c.b16 %v1903, %v1899
    %v2272 = vpack.c.b16 %v1904, %v1900
    %v2273 = vpack.c.b16 %v1905, %v1901
    %v2274 = vpack.c.b16 %v1910, %v1906
    %v2275 = vpack.c.b16 %v1911, %v1907
    %v2276 = vpack.c.b16 %v1912, %v1908
    %v2277 = vpack.c.b16 %v1913, %v1909
    %v2278 = vpack.c.b16 %v1918, %v1914
    %v2279 = vpack.c.b16 %v1919, %v1915
    %v2280 = vpack.c.b16 %v1920, %v1916
    %v2281 = vpack.c.b16 %v1921, %v1917
    %v2282 = vpack.c.b16 %v1926, %v1922
    %v2283 = vpack.c.b16 %v1927, %v1923
    %v2284 = vpack.c.b16 %v1928, %v1924
    %v2285 = vpack.c.b16 %v1929, %v1925
    %v2286 = vpack.c.b16 %v1934, %v1930
    %v2287 = vpack.c.b16 %v1935, %v1931
    %v2288 = vpack.c.b16 %v1936, %v1932
    %v2289 = vpack.c.b16 %v1937, %v1933
    %v2290 = vpack.c.b16 %v1942, %v1938
    %v2291 = vpack.c.b16 %v1943, %v1939
    %v2292 = vpack.c.b16 %v1944, %v1940
    %v2293 = vpack.c.b16 %v1945, %v1941
    %v2294 = vpack.c.b16 %v1950, %v1946
    %v2295 = vpack.c.b16 %v1951, %v1947
    %v2296 = vpack.c.b16 %v1952, %v1948
    %v2297 = vpack.c.b16 %v1953, %v1949
    %v2298 = vpack.c.b16 %v1958, %v1954
    %v2299 = vpack.c.b16 %v1959, %v1955
    %v2300 = vpack.c.b16 %v1960, %v1956
    %v2301 = vpack.c.b16 %v1961, %v1957
    %v2302 = vpack.c.b16 %v1966, %v1962
    %v2303 = vpack.c.b16 %v1967, %v1963
    %v2304 = vpack.c.b16 %v1968, %v1964
    %v2305 = vpack.c.b16 %v1969, %v1965
    %v2306 = vpack.c.b16 %v1974, %v1970
    %v2307 = vpack.c.b16 %v1975, %v1971
    %v2308 = vpack.c.b16 %v1976, %v1972
    %v2309 = vpack.c.b16 %v1977, %v1973
    %v2310 = vpack.c.b16 %v1982, %v1978
    %v2311 = vpack.c.b16 %v1983, %v1979
    %v2312 = vpack.c.b16 %v1984, %v1980
    %v2313 = vpack.c.b16 %v1985, %v1981
    %v2314 = vpack.c.b16 %v1990, %v1986
    %v2315 = vpack.c.b16 %v1991, %v1987
    %v2316 = vpack.c.b16 %v1992, %v1988
    %v2317 = vpack.c.b16 %v1993, %v1989
    %v2318 = vpack.c.b16 %v1998, %v1994
    %v2319 = vpack.c.b16 %v1999, %v1995
    %v2320 = vpack.c.b16 %v2000, %v1996
    %v2321 = vpack.c.b16 %v2001, %v1997
    %v2322 = vpack.c.b16 %v2006, %v2002
    %v2323 = vpack.c.b16 %v2007, %v2003
    %v2324 = vpack.c.b16 %v2008, %v2004
    %v2325 = vpack.c.b16 %v2009, %v2005
    %v2326 = vpack.c.b16 %v2014, %v2010
    %v2327 = vpack.c.b16 %v2015, %v2011
    %v2328 = vpack.c.b16 %v2016, %v2012
    %v2329 = vpack.c.b16 %v2017, %v2013
    %v2330 = vpack.c.b16 %v2022, %v2018
    %v2331 = vpack.c.b16 %v2023, %v2019
    %v2332 = vpack.c.b16 %v2024, %v2020
    %v2333 = vpack.c.b16 %v2025, %v2021
    %v2334 = vpack.c.b16 %v2030, %v2026
    %v2335 = vpack.c.b16 %v2031, %v2027
    %v2336 = vpack.c.b16 %v2032, %v2028
    %v2337 = vpack.c.b16 %v2033, %v2029
    %v2338 = vpack.c.b16 %v2038, %v2034
    %v2339 = vpack.c.b16 %v2039, %v2035
    %v2340 = vpack.c.b16 %v2040, %v2036
    %v2341 = vpack.c.b16 %v2041, %v2037
    %v2342 = vpack.c.b16 %v2046, %v2042
    %v2343 = vpack.c.b16 %v2047, %v2043
    %v2344 = vpack.c.b16 %v2048, %v2044
    %v2345 = vpack.c.b16 %v2049, %v2045
    %v2346 = vpack.c.b16 %v2054, %v2050
    %v2347 = vpack.c.b16 %v2055, %v2051
    %v2348 = vpack.c.b16 %v2056, %v2052
    %v2349 = vpack.c.b16 %v2057, %v2053
    %v2350 = vpack.c.b16 %v2062, %v2058
    %v2351 = vpack.c.b16 %v2063, %v2059
    %v2352 = vpack.c.b16 %v2064, %v2060
    %v2353 = vpack.c.b16 %v2065, %v2061
    %v2354 = vpack.c.b16 %v2070, %v2066
    %v2355 = vpack.c.b16 %v2071, %v2067
    %v2356 = vpack.c.b16 %v2072, %v2068
    %v2357 = vpack.c.b16 %v2073, %v2069
    %v2358 = vpack.c.b16 %v2078, %v2074
    %v2359 = vpack.c.b16 %v2079, %v2075
    %v2360 = vpack.c.b16 %v2080, %v2076
    %v2361 = vpack.c.b16 %v2081, %v2077
    %v2362 = vpack.c.b16 %v2086, %v2082
    %v2363 = vpack.c.b16 %v2087, %v2083
    %v2364 = vpack.c.b16 %v2088, %v2084
    %v2365 = vpack.c.b16 %v2089, %v2085
    %v2366 = vpack.c.b16 %v2094, %v2090
    %v2367 = vpack.c.b16 %v2095, %v2091
    %v2368 = vpack.c.b16 %v2096, %v2092
    %v2369 = vpack.c.b16 %v2097, %v2093
    %v2370 = vpack.c.b16 %v2102, %v2098
    %v2371 = vpack.c.b16 %v2103, %v2099
    %v2372 = vpack.c.b16 %v2104, %v2100
    %v2373 = vpack.c.b16 %v2105, %v2101
    %v2374 = vpack.c.b16 %v2110, %v2106
    %v2375 = vpack.c.b16 %v2111, %v2107
    %v2376 = vpack.c.b16 %v2112, %v2108
    %v2377 = vpack.c.b16 %v2113, %v2109
    %v2378 = vpack.c.b16 %v2118, %v2114
    %v2379 = vpack.c.b16 %v2119, %v2115
    %v2380 = vpack.c.b16 %v2120, %v2116
    %v2381 = vpack.c.b16 %v2121, %v2117
    %v2382 = vpack.c.b16 %v2126, %v2122
    %v2383 = vpack.c.b16 %v2127, %v2123
    %v2384 = vpack.c.b16 %v2128, %v2124
    %v2385 = vpack.c.b16 %v2129, %v2125
    %2642 = vmatprep.subr.bf16.mxu0 %v2131
    %2643 = vmatpush1.bf16.msra.mxu0 %v2130
    %2644 = vmatprep.subr.bf16.mxu0 %v2135
    %2645 = vmatpush1.bf16.msra.mxu0 %v2134
    %2646 = vmatprep.subr.bf16.mxu0 %v2139
    %2647 = vmatpush1.bf16.msra.mxu0 %v2138
    %2648 = vmatprep.subr.bf16.mxu0 %v2143
    %2649 = vmatpush1.bf16.msra.mxu0 %v2142
    %2650 = vmatprep.subr.bf16.mxu0 %v2147
    %2651 = vmatpush1.bf16.msra.mxu0 %v2146
    %2652 = vmatprep.subr.bf16.mxu0 %v2151
    %2653 = vmatpush1.bf16.msra.mxu0 %v2150
    %2654 = vmatprep.subr.bf16.mxu0 %v2155
    %2655 = vmatpush1.bf16.msra.mxu0 %v2154
    %2656 = vmatprep.subr.bf16.mxu0 %v2159
    %2657 = vmatpush1.bf16.msra.mxu0 %v2158
    %2658 = vmatprep.subr.bf16.mxu0 %v2163
    %2659 = vmatpush1.bf16.msra.mxu0 %v2162
    %2660 = vmatprep.subr.bf16.mxu0 %v2167
    %2661 = vmatpush1.bf16.msra.mxu0 %v2166
    %2662 = vmatprep.subr.bf16.mxu0 %v2171
    %2663 = vmatpush1.bf16.msra.mxu0 %v2170
    %2664 = vmatprep.subr.bf16.mxu0 %v2175
    %2665 = vmatpush1.bf16.msra.mxu0 %v2174
    %2666 = vmatprep.subr.bf16.mxu0 %v2179
    %2667 = vmatpush1.bf16.msra.mxu0 %v2178
    %2668 = vmatprep.subr.bf16.mxu0 %v2183
    %2669 = vmatpush1.bf16.msra.mxu0 %v2182
    %2670 = vmatprep.subr.bf16.mxu0 %v2187
    %2671 = vmatpush1.bf16.msra.mxu0 %v2186
    %2672 = vmatprep.subr.bf16.mxu0 %v2191
    %2673 = vmatpush1.bf16.msra.mxu0 %v2190
    %2674 = vmatprep.mubr.bf16.mxu0 %v1077
    %2675 = vmatmul.mubr.bf16.gmra.mrb[0].mxu0 %v1076
    %v2676 = vpop.f32.mrb[0].mxu0
    %v2677 = vadd.f32 %v1345, %v2676
    %v2678 = vpop.f32.mrb[0].mxu0
    %v2679 = vadd.f32 %v1349, %v2678
    %v2680 = vpop.f32.mrb[0].mxu0
    %v2681 = vpop.f32.mrb[0].mxu0
    %2682 = vdwg.mxu0
    %2683 = vmatprep.subr.bf16.mxu0 %v2195
    %2684 = vmatpush1.bf16.msra.mxu0 %v2194
    %2685 = vmatprep.subr.bf16.mxu0 %v2199
    %2686 = vmatpush1.bf16.msra.mxu0 %v2198
    %2687 = vmatprep.subr.bf16.mxu0 %v2203
    %2688 = vmatpush1.bf16.msra.mxu0 %v2202
    %2689 = vmatprep.subr.bf16.mxu0 %v2207
    %2690 = vmatpush1.bf16.msra.mxu0 %v2206
    %2691 = vmatprep.subr.bf16.mxu0 %v2211
    %2692 = vmatpush1.bf16.msra.mxu0 %v2210
    %2693 = vmatprep.subr.bf16.mxu0 %v2215
    %2694 = vmatpush1.bf16.msra.mxu0 %v2214
    %2695 = vmatprep.subr.bf16.mxu0 %v2219
    %2696 = vmatpush1.bf16.msra.mxu0 %v2218
    %2697 = vmatprep.subr.bf16.mxu0 %v2223
    %2698 = vmatpush1.bf16.msra.mxu0 %v2222
    %2699 = vmatprep.subr.bf16.mxu0 %v2227
    %2700 = vmatpush1.bf16.msra.mxu0 %v2226
    %2701 = vmatprep.subr.bf16.mxu0 %v2231
    %2702 = vmatpush1.bf16.msra.mxu0 %v2230
    %2703 = vmatprep.subr.bf16.mxu0 %v2235
    %2704 = vmatpush1.bf16.msra.mxu0 %v2234
    %2705 = vmatprep.subr.bf16.mxu0 %v2239
    %2706 = vmatpush1.bf16.msra.mxu0 %v2238
    %2707 = vmatprep.subr.bf16.mxu0 %v2243
    %2708 = vmatpush1.bf16.msra.mxu0 %v2242
    %2709 = vmatprep.subr.bf16.mxu0 %v2247
    %2710 = vmatpush1.bf16.msra.mxu0 %v2246
    %2711 = vmatprep.subr.bf16.mxu0 %v2251
    %2712 = vmatpush1.bf16.msra.mxu0 %v2250
    %2713 = vmatprep.subr.bf16.mxu0 %v2255
    %2714 = vmatpush1.bf16.msra.mxu0 %v2254
    %2715 = vmatprep.mubr.bf16.mxu0 %v1079
    %2716 = vmatmul.mubr.bf16.gmra.mrb[0].mxu0 %v1078
    %v2717 = vpop.f32.mrb[0].mxu0
    %v2718 = vadd.f32 %v2677, %v2717
    %v2719 = vpop.f32.mrb[0].mxu0
    %v2720 = vadd.f32 %v2679, %v2719
    %v2721 = vpop.f32.mrb[0].mxu0
    %v2722 = vpop.f32.mrb[0].mxu0
    %2723 = vdwg.mxu0
    %2724 = vmatprep.subr.bf16.mxu0 %v2259
    %2725 = vmatpush1.bf16.msra.mxu0 %v2258
    %2726 = vmatprep.subr.bf16.mxu0 %v2263
    %2727 = vmatpush1.bf16.msra.mxu0 %v2262
    %2728 = vmatprep.subr.bf16.mxu0 %v2267
    %2729 = vmatpush1.bf16.msra.mxu0 %v2266
    %2730 = vmatprep.subr.bf16.mxu0 %v2271
    %2731 = vmatpush1.bf16.msra.mxu0 %v2270
    %2732 = vmatprep.subr.bf16.mxu0 %v2275
    %2733 = vmatpush1.bf16.msra.mxu0 %v2274
    %2734 = vmatprep.subr.bf16.mxu0 %v2279
    %2735 = vmatpush1.bf16.msra.mxu0 %v2278
    %2736 = vmatprep.subr.bf16.mxu0 %v2283
    %2737 = vmatpush1.bf16.msra.mxu0 %v2282
    %2738 = vmatprep.subr.bf16.mxu0 %v2287
    %2739 = vmatpush1.bf16.msra.mxu0 %v2286
    %2740 = vmatprep.subr.bf16.mxu0 %v2291
    %2741 = vmatpush1.bf16.msra.mxu0 %v2290
    %2742 = vmatprep.subr.bf16.mxu0 %v2295
    %2743 = vmatpush1.bf16.msra.mxu0 %v2294
    %2744 = vmatprep.subr.bf16.mxu0 %v2299
    %2745 = vmatpush1.bf16.msra.mxu0 %v2298
    %2746 = vmatprep.subr.bf16.mxu0 %v2303
    %2747 = vmatpush1.bf16.msra.mxu0 %v2302
    %2748 = vmatprep.subr.bf16.mxu0 %v2307
    %2749 = vmatpush1.bf16.msra.mxu0 %v2306
    %2750 = vmatprep.subr.bf16.mxu0 %v2311
    %2751 = vmatpush1.bf16.msra.mxu0 %v2310
    %2752 = vmatprep.subr.bf16.mxu0 %v2315
    %2753 = vmatpush1.bf16.msra.mxu0 %v2314
    %2754 = vmatprep.subr.bf16.mxu0 %v2319
    %2755 = vmatpush1.bf16.msra.mxu0 %v2318
    %2756 = vmatprep.mubr.bf16.mxu0 %v1081
    %2757 = vmatmul.mubr.bf16.gmra.mrb[0].mxu0 %v1080
    %v2758 = vpop.f32.mrb[0].mxu0
    %v2759 = vadd.f32 %v2718, %v2758
    %v2760 = vpop.f32.mrb[0].mxu0
    %v2761 = vadd.f32 %v2720, %v2760
    %v2762 = vpop.f32.mrb[0].mxu0
    %v2763 = vpop.f32.mrb[0].mxu0
    %2764 = vdwg.mxu0
    %2765 = vmatprep.subr.bf16.mxu0 %v2323
    %2766 = vmatpush1.bf16.msra.mxu0 %v2322
    %2767 = vmatprep.subr.bf16.mxu0 %v2327
    %2768 = vmatpush1.bf16.msra.mxu0 %v2326
    %2769 = vmatprep.subr.bf16.mxu0 %v2331
    %2770 = vmatpush1.bf16.msra.mxu0 %v2330
    %2771 = vmatprep.subr.bf16.mxu0 %v2335
    %2772 = vmatpush1.bf16.msra.mxu0 %v2334
    %2773 = vmatprep.subr.bf16.mxu0 %v2339
    %2774 = vmatpush1.bf16.msra.mxu0 %v2338
    %2775 = vmatprep.subr.bf16.mxu0 %v2343
    %2776 = vmatpush1.bf16.msra.mxu0 %v2342
    %2777 = vmatprep.subr.bf16.mxu0 %v2347
    %2778 = vmatpush1.bf16.msra.mxu0 %v2346
    %2779 = vmatprep.subr.bf16.mxu0 %v2351
    %2780 = vmatpush1.bf16.msra.mxu0 %v2350
    %2781 = vmatprep.subr.bf16.mxu0 %v2355
    %2782 = vmatpush1.bf16.msra.mxu0 %v2354
    %2783 = vmatprep.subr.bf16.mxu0 %v2359
    %2784 = vmatpush1.bf16.msra.mxu0 %v2358
    %2785 = vmatprep.subr.bf16.mxu0 %v2363
    %2786 = vmatpush1.bf16.msra.mxu0 %v2362
    %2787 = vmatprep.subr.bf16.mxu0 %v2367
    %2788 = vmatpush1.bf16.msra.mxu0 %v2366
    %2789 = vmatprep.subr.bf16.mxu0 %v2371
    %2790 = vmatpush1.bf16.msra.mxu0 %v2370
    %2791 = vmatprep.subr.bf16.mxu0 %v2375
    %2792 = vmatpush1.bf16.msra.mxu0 %v2374
    %2793 = vmatprep.subr.bf16.mxu0 %v2379
    %2794 = vmatpush1.bf16.msra.mxu0 %v2378
    %2795 = vmatprep.subr.bf16.mxu0 %v2383
    %2796 = vmatpush1.bf16.msra.mxu0 %v2382
    %2797 = vmatprep.mubr.bf16.mxu0 %v1083
    %2798 = vmatmul.mubr.bf16.gmra.mrb[0].mxu0 %v1082
    %v2799 = vpop.f32.mrb[0].mxu0
    %v2800 = vadd.f32 %v2759, %v2799
    %v2801 = vpop.f32.mrb[0].mxu0
    %v2802 = vadd.f32 %v2761, %v2801
    %v2803 = vpop.f32.mrb[0].mxu0
    %v2804 = vpop.f32.mrb[0].mxu0
    %2805 = vdwg.mxu0
    %2806 = vmatprep.subr.bf16.mxu0 %v2133
    %2807 = vmatpush1.bf16.msra.mxu0 %v2132
    %2808 = vmatprep.subr.bf16.mxu0 %v2137
    %2809 = vmatpush1.bf16.msra.mxu0 %v2136
    %2810 = vmatprep.subr.bf16.mxu0 %v2141
    %2811 = vmatpush1.bf16.msra.mxu0 %v2140
    %2812 = vmatprep.subr.bf16.mxu0 %v2145
    %2813 = vmatpush1.bf16.msra.mxu0 %v2144
    %2814 = vmatprep.subr.bf16.mxu0 %v2149
    %2815 = vmatpush1.bf16.msra.mxu0 %v2148
    %2816 = vmatprep.subr.bf16.mxu0 %v2153
    %2817 = vmatpush1.bf16.msra.mxu0 %v2152
    %2818 = vmatprep.subr.bf16.mxu0 %v2157
    %2819 = vmatpush1.bf16.msra.mxu0 %v2156
    %2820 = vmatprep.subr.bf16.mxu0 %v2161
    %2821 = vmatpush1.bf16.msra.mxu0 %v2160
    %2822 = vmatprep.subr.bf16.mxu0 %v2165
    %2823 = vmatpush1.bf16.msra.mxu0 %v2164
    %2824 = vmatprep.subr.bf16.mxu0 %v2169
    %2825 = vmatpush1.bf16.msra.mxu0 %v2168
    %2826 = vmatprep.subr.bf16.mxu0 %v2173
    %2827 = vmatpush1.bf16.msra.mxu0 %v2172
    %2828 = vmatprep.subr.bf16.mxu0 %v2177
    %2829 = vmatpush1.bf16.msra.mxu0 %v2176
    %2830 = vmatprep.subr.bf16.mxu0 %v2181
    %2831 = vmatpush1.bf16.msra.mxu0 %v2180
    %2832 = vmatprep.subr.bf16.mxu0 %v2185
    %2833 = vmatpush1.bf16.msra.mxu0 %v2184
    %2834 = vmatprep.subr.bf16.mxu0 %v2189
    %2835 = vmatpush1.bf16.msra.mxu0 %v2188
    %2836 = vmatprep.subr.bf16.mxu0 %v2193
    %2837 = vmatpush1.bf16.msra.mxu0 %v2192
    %2838 = vmatprep.mubr.bf16.mxu0 %v1077
    %2839 = vmatmul.mubr.bf16.gmra.mrb[0].mxu0 %v1076
    %v2840 = vpop.f32.mrb[0].mxu0
    %v2841 = vadd.f32 %v1353, %v2840
    %v2842 = vpop.f32.mrb[0].mxu0
    %v2843 = vadd.f32 %v1357, %v2842
    %v2844 = vpop.f32.mrb[0].mxu0
    %v2845 = vpop.f32.mrb[0].mxu0
    %2846 = vdwg.mxu0
    %2847 = vmatprep.subr.bf16.mxu0 %v2197
    %2848 = vmatpush1.bf16.msra.mxu0 %v2196
    %2849 = vmatprep.subr.bf16.mxu0 %v2201
    %2850 = vmatpush1.bf16.msra.mxu0 %v2200
    %2851 = vmatprep.subr.bf16.mxu0 %v2205
    %2852 = vmatpush1.bf16.msra.mxu0 %v2204
    %2853 = vmatprep.subr.bf16.mxu0 %v2209
    %2854 = vmatpush1.bf16.msra.mxu0 %v2208
    %2855 = vmatprep.subr.bf16.mxu0 %v2213
    %2856 = vmatpush1.bf16.msra.mxu0 %v2212
    %2857 = vmatprep.subr.bf16.mxu0 %v2217
    %2858 = vmatpush1.bf16.msra.mxu0 %v2216
    %2859 = vmatprep.subr.bf16.mxu0 %v2221
    %2860 = vmatpush1.bf16.msra.mxu0 %v2220
    %2861 = vmatprep.subr.bf16.mxu0 %v2225
    %2862 = vmatpush1.bf16.msra.mxu0 %v2224
    %2863 = vmatprep.subr.bf16.mxu0 %v2229
    %2864 = vmatpush1.bf16.msra.mxu0 %v2228
    %2865 = vmatprep.subr.bf16.mxu0 %v2233
    %2866 = vmatpush1.bf16.msra.mxu0 %v2232
    %2867 = vmatprep.subr.bf16.mxu0 %v2237
    %2868 = vmatpush1.bf16.msra.mxu0 %v2236
    %2869 = vmatprep.subr.bf16.mxu0 %v2241
    %2870 = vmatpush1.bf16.msra.mxu0 %v2240
    %2871 = vmatprep.subr.bf16.mxu0 %v2245
    %2872 = vmatpush1.bf16.msra.mxu0 %v2244
    %2873 = vmatprep.subr.bf16.mxu0 %v2249
    %2874 = vmatpush1.bf16.msra.mxu0 %v2248
    %2875 = vmatprep.subr.bf16.mxu0 %v2253
    %2876 = vmatpush1.bf16.msra.mxu0 %v2252
    %2877 = vmatprep.subr.bf16.mxu0 %v2257
    %2878 = vmatpush1.bf16.msra.mxu0 %v2256
    %2879 = vmatprep.mubr.bf16.mxu0 %v1079
    %2880 = vmatmul.mubr.bf16.gmra.mrb[0].mxu0 %v1078
    %v2881 = vpop.f32.mrb[0].mxu0
    %v2882 = vadd.f32 %v2841, %v2881
    %v2883 = vpop.f32.mrb[0].mxu0
    %v2884 = vadd.f32 %v2843, %v2883
    %v2885 = vpop.f32.mrb[0].mxu0
    %v2886 = vpop.f32.mrb[0].mxu0
    %2887 = vdwg.mxu0
    %2888 = vmatprep.subr.bf16.mxu0 %v2261
    %2889 = vmatpush1.bf16.msra.mxu0 %v2260
    %2890 = vmatprep.subr.bf16.mxu0 %v2265
    %2891 = vmatpush1.bf16.msra.mxu0 %v2264
    %2892 = vmatprep.subr.bf16.mxu0 %v2269
    %2893 = vmatpush1.bf16.msra.mxu0 %v2268
    %2894 = vmatprep.subr.bf16.mxu0 %v2273
    %2895 = vmatpush1.bf16.msra.mxu0 %v2272
    %2896 = vmatprep.subr.bf16.mxu0 %v2277
    %2897 = vmatpush1.bf16.msra.mxu0 %v2276
    %2898 = vmatprep.subr.bf16.mxu0 %v2281
    %2899 = vmatpush1.bf16.msra.mxu0 %v2280
    %2900 = vmatprep.subr.bf16.mxu0 %v2285
    %2901 = vmatpush1.bf16.msra.mxu0 %v2284
    %2902 = vmatprep.subr.bf16.mxu0 %v2289
    %2903 = vmatpush1.bf16.msra.mxu0 %v2288
    %2904 = vmatprep.subr.bf16.mxu0 %v2293
    %2905 = vmatpush1.bf16.msra.mxu0 %v2292
    %2906 = vmatprep.subr.bf16.mxu0 %v2297
    %2907 = vmatpush1.bf16.msra.mxu0 %v2296
    %2908 = vmatprep.subr.bf16.mxu0 %v2301
    %2909 = vmatpush1.bf16.msra.mxu0 %v2300
    %2910 = vmatprep.subr.bf16.mxu0 %v2305
    %2911 = vmatpush1.bf16.msra.mxu0 %v2304
    %2912 = vmatprep.subr.bf16.mxu0 %v2309
    %2913 = vmatpush1.bf16.msra.mxu0 %v2308
    %2914 = vmatprep.subr.bf16.mxu0 %v2313
    %2915 = vmatpush1.bf16.msra.mxu0 %v2312
    %2916 = vmatprep.subr.bf16.mxu0 %v2317
    %2917 = vmatpush1.bf16.msra.mxu0 %v2316
    %2918 = vmatprep.subr.bf16.mxu0 %v2321
    %2919 = vmatpush1.bf16.msra.mxu0 %v2320
    %2920 = vmatprep.mubr.bf16.mxu0 %v1081
    %2921 = vmatmul.mubr.bf16.gmra.mrb[0].mxu0 %v1080
    %v2922 = vpop.f32.mrb[0].mxu0
    %v2923 = vadd.f32 %v2882, %v2922
    %v2924 = vpop.f32.mrb[0].mxu0
    %v2925 = vadd.f32 %v2884, %v2924
    %v2926 = vpop.f32.mrb[0].mxu0
    %v2927 = vpop.f32.mrb[0].mxu0
    %2928 = vdwg.mxu0
    %2929 = vmatprep.subr.bf16.mxu0 %v2325
    %2930 = vmatpush1.bf16.msra.mxu0 %v2324
    %2931 = vmatprep.subr.bf16.mxu0 %v2329
    %2932 = vmatpush1.bf16.msra.mxu0 %v2328
    %2933 = vmatprep.subr.bf16.mxu0 %v2333
    %2934 = vmatpush1.bf16.msra.mxu0 %v2332
    %2935 = vmatprep.subr.bf16.mxu0 %v2337
    %2936 = vmatpush1.bf16.msra.mxu0 %v2336
    %2937 = vmatprep.subr.bf16.mxu0 %v2341
    %2938 = vmatpush1.bf16.msra.mxu0 %v2340
    %2939 = vmatprep.subr.bf16.mxu0 %v2345
    %2940 = vmatpush1.bf16.msra.mxu0 %v2344
    %2941 = vmatprep.subr.bf16.mxu0 %v2349
    %2942 = vmatpush1.bf16.msra.mxu0 %v2348
    %2943 = vmatprep.subr.bf16.mxu0 %v2353
    %2944 = vmatpush1.bf16.msra.mxu0 %v2352
    %2945 = vmatprep.subr.bf16.mxu0 %v2357
    %2946 = vmatpush1.bf16.msra.mxu0 %v2356
    %2947 = vmatprep.subr.bf16.mxu0 %v2361
    %2948 = vmatpush1.bf16.msra.mxu0 %v2360
    %2949 = vmatprep.subr.bf16.mxu0 %v2365
    %2950 = vmatpush1.bf16.msra.mxu0 %v2364
    %2951 = vmatprep.subr.bf16.mxu0 %v2369
    %2952 = vmatpush1.bf16.msra.mxu0 %v2368
    %2953 = vmatprep.subr.bf16.mxu0 %v2373
    %2954 = vmatpush1.bf16.msra.mxu0 %v2372
    %2955 = vmatprep.subr.bf16.mxu0 %v2377
    %2956 = vmatpush1.bf16.msra.mxu0 %v2376
    %2957 = vmatprep.subr.bf16.mxu0 %v2381
    %2958 = vmatpush1.bf16.msra.mxu0 %v2380
    %2959 = vmatprep.subr.bf16.mxu0 %v2385
    %2960 = vmatpush1.bf16.msra.mxu0 %v2384
    %2961 = vmatprep.mubr.bf16.mxu0 %v1083
    %2962 = vmatmul.mubr.bf16.gmra.mrb[0].mxu0 %v1082
    %v2963 = vpop.f32.mrb[0].mxu0
    %v2964 = vadd.f32 %v2923, %v2963
    %v2965 = vpop.f32.mrb[0].mxu0
    %v2966 = vadd.f32 %v2925, %v2965
    %v2967 = vpop.f32.mrb[0].mxu0
    %v2968 = vpop.f32.mrb[0].mxu0
    %2969 = vdwg.mxu0
    %v2970 = vmax.f32 %v2800, 0.0
    %v2971 = vmax.f32 %v2802, 0.0
    %v2972 = vmax.f32 %v2964, 0.0
    %v2973 = vmax.f32 %v2966, 0.0
    %v2974 = vpack.c.bf16 %v2970, %v2970
    %v2975 = vpack.c.bf16 %v2971, %v2971
    %v2976 = vpack.c.bf16 %v2972, %v2972
    %v2977 = vpack.c.bf16 %v2973, %v2973
    %v2978 = vld [vmem:[#allocation7] sm:$0xff]
    %v2979 = vld [vmem:[#allocation7 + $0x8] sm:$0xff]
    %v2980 = vld [vmem:[#allocation7 + $0x10] sm:$0xff]
    %v2981 = vld [vmem:[#allocation7 + $0x18] sm:$0xff]
    %v2982 = vld [vmem:[#allocation7 + $0x20] sm:$0xff]
    %v2983 = vld [vmem:[#allocation7 + $0x28] sm:$0xff]
    %v2984 = vld [vmem:[#allocation7 + $0x30] sm:$0xff]
    %v2985 = vld [vmem:[#allocation7 + $0x38] sm:$0xff]
    %v2986 = vld [vmem:[#allocation7 + $0x40] sm:$0xff]
    %v2987 = vld [vmem:[#allocation7 + $0x48] sm:$0xff]
    %v2988 = vld [vmem:[#allocation7 + $0x50] sm:$0xff]
    %v2989 = vld [vmem:[#allocation7 + $0x58] sm:$0xff]
    %v2990 = vld [vmem:[#allocation7 + $0x60] sm:$0xff]
    %v2991 = vld [vmem:[#allocation7 + $0x68] sm:$0xff]
    %v2992 = vld [vmem:[#allocation7 + $0x70] sm:$0xff]
    %v2993 = vld [vmem:[#allocation7 + $0x78] sm:$0xff]
    %v2994 = vld [vmem:[#allocation7 + $0x80] sm:$0xff]
    %v2995 = vld [vmem:[#allocation7 + $0x88] sm:$0xff]
    %v2996 = vld [vmem:[#allocation7 + $0x90] sm:$0xff]
    %v2997 = vld [vmem:[#allocation7 + $0x98] sm:$0xff]
    %v2998 = vld [vmem:[#allocation7 + $0xa0] sm:$0xff]
    %v2999 = vld [vmem:[#allocation7 + $0xa8] sm:$0xff]
    %v3000 = vld [vmem:[#allocation7 + $0xb0] sm:$0xff]
    %v3001 = vld [vmem:[#allocation7 + $0xb8] sm:$0xff]
    %v3002 = vld [vmem:[#allocation7 + $0xc0] sm:$0xff]
    %v3003 = vld [vmem:[#allocation7 + $0xc8] sm:$0xff]
    %v3004 = vld [vmem:[#allocation7 + $0xd0] sm:$0xff]
    %v3005 = vld [vmem:[#allocation7 + $0xd8] sm:$0xff]
    %v3006 = vld [vmem:[#allocation7 + $0xe0] sm:$0xff]
    %v3007 = vld [vmem:[#allocation7 + $0xe8] sm:$0xff]
    %v3008 = vld [vmem:[#allocation7 + $0xf0] sm:$0xff]
    %v3009 = vld [vmem:[#allocation7 + $0xf8] sm:$0xff]
    %v3010 = vld [vmem:[#allocation7 + $0x100] sm:$0xff]
    %v3011 = vld [vmem:[#allocation7 + $0x108] sm:$0xff]
    %v3012 = vld [vmem:[#allocation7 + $0x110] sm:$0xff]
    %v3013 = vld [vmem:[#allocation7 + $0x118] sm:$0xff]
    %v3014 = vld [vmem:[#allocation7 + $0x120] sm:$0xff]
    %v3015 = vld [vmem:[#allocation7 + $0x128] sm:$0xff]
    %v3016 = vld [vmem:[#allocation7 + $0x130] sm:$0xff]
    %v3017 = vld [vmem:[#allocation7 + $0x138] sm:$0xff]
    %v3018 = vld [vmem:[#allocation7 + $0x140] sm:$0xff]
    %v3019 = vld [vmem:[#allocation7 + $0x148] sm:$0xff]
    %v3020 = vld [vmem:[#allocation7 + $0x150] sm:$0xff]
    %v3021 = vld [vmem:[#allocation7 + $0x158] sm:$0xff]
    %v3022 = vld [vmem:[#allocation7 + $0x160] sm:$0xff]
    %v3023 = vld [vmem:[#allocation7 + $0x168] sm:$0xff]
    %v3024 = vld [vmem:[#allocation7 + $0x170] sm:$0xff]
    %v3025 = vld [vmem:[#allocation7 + $0x178] sm:$0xff]
    %v3026 = vld [vmem:[#allocation7 + $0x180] sm:$0xff]
    %v3027 = vld [vmem:[#allocation7 + $0x188] sm:$0xff]
    %v3028 = vld [vmem:[#allocation7 + $0x190] sm:$0xff]
    %v3029 = vld [vmem:[#allocation7 + $0x198] sm:$0xff]
    %v3030 = vld [vmem:[#allocation7 + $0x1a0] sm:$0xff]
    %v3031 = vld [vmem:[#allocation7 + $0x1a8] sm:$0xff]
    %v3032 = vld [vmem:[#allocation7 + $0x1b0] sm:$0xff]
    %v3033 = vld [vmem:[#allocation7 + $0x1b8] sm:$0xff]
    %v3034 = vld [vmem:[#allocation7 + $0x1c0] sm:$0xff]
    %v3035 = vld [vmem:[#allocation7 + $0x1c8] sm:$0xff]
    %v3036 = vld [vmem:[#allocation7 + $0x1d0] sm:$0xff]
    %v3037 = vld [vmem:[#allocation7 + $0x1d8] sm:$0xff]
    %v3038 = vld [vmem:[#allocation7 + $0x1e0] sm:$0xff]
    %v3039 = vld [vmem:[#allocation7 + $0x1e8] sm:$0xff]
    %v3040 = vld [vmem:[#allocation7 + $0x1f0] sm:$0xff]
    %v3041 = vld [vmem:[#allocation7 + $0x1f8] sm:$0xff]
    %v3042 = vld [vmem:[%s10] sm:$0x3]
    %v3044 = vlaneseq
    %v3045 = vshrl.u32 %v3044, 7
    %v3046 = vsub.s32 0, %v3045
    %v3047 = vrot.slane %v3042, %v3046
    %v3048 = vlaneseq
    %v3049 = vshrl.u32 %v3048, 7
    %v3050 = vsub.s32 1, %v3049
    %v3051 = vrot.slane %v3042, %v3050
    %v3118 = vunpack.c.l.b16 %v2978
    %v3119 = vunpack.c.h.b16 %v2978
    %v3120 = vunpack.c.l.b16 %v2979
    %v3121 = vunpack.c.h.b16 %v2979
    %v3122 = vunpack.c.l.b16 %v2980
    %v3123 = vunpack.c.h.b16 %v2980
    %v3124 = vunpack.c.l.b16 %v2981
    %v3125 = vunpack.c.h.b16 %v2981
    %v3126 = vunpack.c.l.b16 %v2982
    %v3127 = vunpack.c.h.b16 %v2982
    %v3128 = vunpack.c.l.b16 %v2983
    %v3129 = vunpack.c.h.b16 %v2983
    %v3130 = vunpack.c.l.b16 %v2984
    %v3131 = vunpack.c.h.b16 %v2984
    %v3132 = vunpack.c.l.b16 %v2985
    %v3133 = vunpack.c.h.b16 %v2985
    %v3134 = vunpack.c.l.b16 %v2986
    %v3135 = vunpack.c.h.b16 %v2986
    %v3136 = vunpack.c.l.b16 %v2987
    %v3137 = vunpack.c.h.b16 %v2987
    %v3138 = vunpack.c.l.b16 %v2988
    %v3139 = vunpack.c.h.b16 %v2988
    %v3140 = vunpack.c.l.b16 %v2989
    %v3141 = vunpack.c.h.b16 %v2989
    %v3142 = vunpack.c.l.b16 %v2990
    %v3143 = vunpack.c.h.b16 %v2990
    %v3144 = vunpack.c.l.b16 %v2991
    %v3145 = vunpack.c.h.b16 %v2991
    %v3146 = vunpack.c.l.b16 %v2992
    %v3147 = vunpack.c.h.b16 %v2992
    %v3148 = vunpack.c.l.b16 %v2993
    %v3149 = vunpack.c.h.b16 %v2993
    %v3150 = vunpack.c.l.b16 %v2994
    %v3151 = vunpack.c.h.b16 %v2994
    %v3152 = vunpack.c.l.b16 %v2995
    %v3153 = vunpack.c.h.b16 %v2995
    %v3154 = vunpack.c.l.b16 %v2996
    %v3155 = vunpack.c.h.b16 %v2996
    %v3156 = vunpack.c.l.b16 %v2997
    %v3157 = vunpack.c.h.b16 %v2997
    %v3158 = vunpack.c.l.b16 %v2998
    %v3159 = vunpack.c.h.b16 %v2998
    %v3160 = vunpack.c.l.b16 %v2999
    %v3161 = vunpack.c.h.b16 %v2999
    %v3162 = vunpack.c.l.b16 %v3000
    %v3163 = vunpack.c.h.b16 %v3000
    %v3164 = vunpack.c.l.b16 %v3001
    %v3165 = vunpack.c.h.b16 %v3001
    %v3166 = vunpack.c.l.b16 %v3002
    %v3167 = vunpack.c.h.b16 %v3002
    %v3168 = vunpack.c.l.b16 %v3003
    %v3169 = vunpack.c.h.b16 %v3003
    %v3170 = vunpack.c.l.b16 %v3004
    %v3171 = vunpack.c.h.b16 %v3004
    %v3172 = vunpack.c.l.b16 %v3005
    %v3173 = vunpack.c.h.b16 %v3005
    %v3174 = vunpack.c.l.b16 %v3006
    %v3175 = vunpack.c.h.b16 %v3006
    %v3176 = vunpack.c.l.b16 %v3007
    %v3177 = vunpack.c.h.b16 %v3007
    %v3178 = vunpack.c.l.b16 %v3008
    %v3179 = vunpack.c.h.b16 %v3008
    %v3180 = vunpack.c.l.b16 %v3009
    %v3181 = vunpack.c.h.b16 %v3009
    %v3182 = vunpack.c.l.b16 %v3010
    %v3183 = vunpack.c.h.b16 %v3010
    %v3184 = vunpack.c.l.b16 %v3011
    %v3185 = vunpack.c.h.b16 %v3011
    %v3186 = vunpack.c.l.b16 %v3012
    %v3187 = vunpack.c.h.b16 %v3012
    %v3188 = vunpack.c.l.b16 %v3013
    %v3189 = vunpack.c.h.b16 %v3013
    %v3190 = vunpack.c.l.b16 %v3014
    %v3191 = vunpack.c.h.b16 %v3014
    %v3192 = vunpack.c.l.b16 %v3015
    %v3193 = vunpack.c.h.b16 %v3015
    %v3194 = vunpack.c.l.b16 %v3016
    %v3195 = vunpack.c.h.b16 %v3016
    %v3196 = vunpack.c.l.b16 %v3017
    %v3197 = vunpack.c.h.b16 %v3017
    %v3198 = vunpack.c.l.b16 %v3018
    %v3199 = vunpack.c.h.b16 %v3018
    %v3200 = vunpack.c.l.b16 %v3019
    %v3201 = vunpack.c.h.b16 %v3019
    %v3202 = vunpack.c.l.b16 %v3020
    %v3203 = vunpack.c.h.b16 %v3020
    %v3204 = vunpack.c.l.b16 %v3021
    %v3205 = vunpack.c.h.b16 %v3021
    %v3206 = vunpack.c.l.b16 %v3022
    %v3207 = vunpack.c.h.b16 %v3022
    %v3208 = vunpack.c.l.b16 %v3023
    %v3209 = vunpack.c.h.b16 %v3023
    %v3210 = vunpack.c.l.b16 %v3024
    %v3211 = vunpack.c.h.b16 %v3024
    %v3212 = vunpack.c.l.b16 %v3025
    %v3213 = vunpack.c.h.b16 %v3025
    %v3214 = vunpack.c.l.b16 %v3026
    %v3215 = vunpack.c.h.b16 %v3026
    %v3216 = vunpack.c.l.b16 %v3027
    %v3217 = vunpack.c.h.b16 %v3027
    %v3218 = vunpack.c.l.b16 %v3028
    %v3219 = vunpack.c.h.b16 %v3028
    %v3220 = vunpack.c.l.b16 %v3029
    %v3221 = vunpack.c.h.b16 %v3029
    %v3222 = vunpack.c.l.b16 %v3030
    %v3223 = vunpack.c.h.b16 %v3030
    %v3224 = vunpack.c.l.b16 %v3031
    %v3225 = vunpack.c.h.b16 %v3031
    %v3226 = vunpack.c.l.b16 %v3032
    %v3227 = vunpack.c.h.b16 %v3032
    %v3228 = vunpack.c.l.b16 %v3033
    %v3229 = vunpack.c.h.b16 %v3033
    %v3230 = vunpack.c.l.b16 %v3034
    %v3231 = vunpack.c.h.b16 %v3034
    %v3232 = vunpack.c.l.b16 %v3035
    %v3233 = vunpack.c.h.b16 %v3035
    %v3234 = vunpack.c.l.b16 %v3036
    %v3235 = vunpack.c.h.b16 %v3036
    %v3236 = vunpack.c.l.b16 %v3037
    %v3237 = vunpack.c.h.b16 %v3037
    %v3238 = vunpack.c.l.b16 %v3038
    %v3239 = vunpack.c.h.b16 %v3038
    %v3240 = vunpack.c.l.b16 %v3039
    %v3241 = vunpack.c.h.b16 %v3039
    %v3242 = vunpack.c.l.b16 %v3040
    %v3243 = vunpack.c.h.b16 %v3040
    %v3244 = vunpack.c.l.b16 %v3041
    %v3245 = vunpack.c.h.b16 %v3041
    %v3246 = vpack.c.b16 %v3120, %v3118
    %v3247 = vpack.c.b16 %v3121, %v3119
    %v3248 = vpack.c.b16 %v3124, %v3122
    %v3249 = vpack.c.b16 %v3125, %v3123
    %v3250 = vpack.c.b16 %v3128, %v3126
    %v3251 = vpack.c.b16 %v3129, %v3127
    %v3252 = vpack.c.b16 %v3132, %v3130
    %v3253 = vpack.c.b16 %v3133, %v3131
    %v3254 = vpack.c.b16 %v3136, %v3134
    %v3255 = vpack.c.b16 %v3137, %v3135
    %v3256 = vpack.c.b16 %v3140, %v3138
    %v3257 = vpack.c.b16 %v3141, %v3139
    %v3258 = vpack.c.b16 %v3144, %v3142
    %v3259 = vpack.c.b16 %v3145, %v3143
    %v3260 = vpack.c.b16 %v3148, %v3146
    %v3261 = vpack.c.b16 %v3149, %v3147
    %v3262 = vpack.c.b16 %v3152, %v3150
    %v3263 = vpack.c.b16 %v3153, %v3151
    %v3264 = vpack.c.b16 %v3156, %v3154
    %v3265 = vpack.c.b16 %v3157, %v3155
    %v3266 = vpack.c.b16 %v3160, %v3158
    %v3267 = vpack.c.b16 %v3161, %v3159
    %v3268 = vpack.c.b16 %v3164, %v3162
    %v3269 = vpack.c.b16 %v3165, %v3163
    %v3270 = vpack.c.b16 %v3168, %v3166
    %v3271 = vpack.c.b16 %v3169, %v3167
    %v3272 = vpack.c.b16 %v3172, %v3170
    %v3273 = vpack.c.b16 %v3173, %v3171
    %v3274 = vpack.c.b16 %v3176, %v3174
    %v3275 = vpack.c.b16 %v3177, %v3175
    %v3276 = vpack.c.b16 %v3180, %v3178
    %v3277 = vpack.c.b16 %v3181, %v3179
    %v3278 = vpack.c.b16 %v3184, %v3182
    %v3279 = vpack.c.b16 %v3185, %v3183
    %v3280 = vpack.c.b16 %v3188, %v3186
    %v3281 = vpack.c.b16 %v3189, %v3187
    %v3282 = vpack.c.b16 %v3192, %v3190
    %v3283 = vpack.c.b16 %v3193, %v3191
    %v3284 = vpack.c.b16 %v3196, %v3194
    %v3285 = vpack.c.b16 %v3197, %v3195
    %v3286 = vpack.c.b16 %v3200, %v3198
    %v3287 = vpack.c.b16 %v3201, %v3199
    %v3288 = vpack.c.b16 %v3204, %v3202
    %v3289 = vpack.c.b16 %v3205, %v3203
    %v3290 = vpack.c.b16 %v3208, %v3206
    %v3291 = vpack.c.b16 %v3209, %v3207
    %v3292 = vpack.c.b16 %v3212, %v3210
    %v3293 = vpack.c.b16 %v3213, %v3211
    %v3294 = vpack.c.b16 %v3216, %v3214
    %v3295 = vpack.c.b16 %v3217, %v3215
    %v3296 = vpack.c.b16 %v3220, %v3218
    %v3297 = vpack.c.b16 %v3221, %v3219
    %v3298 = vpack.c.b16 %v3224, %v3222
    %v3299 = vpack.c.b16 %v3225, %v3223
    %v3300 = vpack.c.b16 %v3228, %v3226
    %v3301 = vpack.c.b16 %v3229, %v3227
    %v3302 = vpack.c.b16 %v3232, %v3230
    %v3303 = vpack.c.b16 %v3233, %v3231
    %v3304 = vpack.c.b16 %v3236, %v3234
    %v3305 = vpack.c.b16 %v3237, %v3235
    %v3306 = vpack.c.b16 %v3240, %v3238
    %v3307 = vpack.c.b16 %v3241, %v3239
    %v3308 = vpack.c.b16 %v3244, %v3242
    %v3309 = vpack.c.b16 %v3245, %v3243
    %3374 = vmatprep.subr.bf16.mxu0 %v3247
    %3375 = vmatpush1.bf16.msra.mxu0 %v3246
    %3376 = vmatprep.subr.bf16.mxu0 %v3249
    %3377 = vmatpush1.bf16.msra.mxu0 %v3248
    %3378 = vmatprep.subr.bf16.mxu0 %v3251
    %3379 = vmatpush1.bf16.msra.mxu0 %v3250
    %3380 = vmatprep.subr.bf16.mxu0 %v3253
    %3381 = vmatpush1.bf16.msra.mxu0 %v3252
    %3382 = vmatprep.subr.bf16.mxu0 %v3255
    %3383 = vmatpush1.bf16.msra.mxu0 %v3254
    %3384 = vmatprep.subr.bf16.mxu0 %v3257
    %3385 = vmatpush1.bf16.msra.mxu0 %v3256
    %3386 = vmatprep.subr.bf16.mxu0 %v3259
    %3387 = vmatpush1.bf16.msra.mxu0 %v3258
    %3388 = vmatprep.subr.bf16.mxu0 %v3261
    %3389 = vmatpush1.bf16.msra.mxu0 %v3260
    %3390 = vmatprep.subr.bf16.mxu0 %v3263
    %3391 = vmatpush1.bf16.msra.mxu0 %v3262
    %3392 = vmatprep.subr.bf16.mxu0 %v3265
    %3393 = vmatpush1.bf16.msra.mxu0 %v3264
    %3394 = vmatprep.subr.bf16.mxu0 %v3267
    %3395 = vmatpush1.bf16.msra.mxu0 %v3266
    %3396 = vmatprep.subr.bf16.mxu0 %v3269
    %3397 = vmatpush1.bf16.msra.mxu0 %v3268
    %3398 = vmatprep.subr.bf16.mxu0 %v3271
    %3399 = vmatpush1.bf16.msra.mxu0 %v3270
    %3400 = vmatprep.subr.bf16.mxu0 %v3273
    %3401 = vmatpush1.bf16.msra.mxu0 %v3272
    %3402 = vmatprep.subr.bf16.mxu0 %v3275
    %3403 = vmatpush1.bf16.msra.mxu0 %v3274
    %3404 = vmatprep.subr.bf16.mxu0 %v3277
    %3405 = vmatpush1.bf16.msra.mxu0 %v3276
    %3406 = vmatprep.mubr.bf16.mxu0 %v2975
    %3407 = vmatmul.mubr.bf16.gmra.mrb[0].mxu0 %v2974
    %v3408 = vpop.f32.mrb[0].mxu0
    %v3409 = vadd.f32 %v3047, %v3408
    %v3410 = vpop.f32.mrb[0].mxu0
    %v3411 = vadd.f32 %v3051, %v3410
    %v3412 = vpop.f32.mrb[0].mxu0
    %v3413 = vpop.f32.mrb[0].mxu0
    %3414 = vdwg.mxu0
    %3415 = vmatprep.subr.bf16.mxu0 %v3279
    %3416 = vmatpush1.bf16.msra.mxu0 %v3278
    %3417 = vmatprep.subr.bf16.mxu0 %v3281
    %3418 = vmatpush1.bf16.msra.mxu0 %v3280
    %3419 = vmatprep.subr.bf16.mxu0 %v3283
    %3420 = vmatpush1.bf16.msra.mxu0 %v3282
    %3421 = vmatprep.subr.bf16.mxu0 %v3285
    %3422 = vmatpush1.bf16.msra.mxu0 %v3284
    %3423 = vmatprep.subr.bf16.mxu0 %v3287
    %3424 = vmatpush1.bf16.msra.mxu0 %v3286
    %3425 = vmatprep.subr.bf16.mxu0 %v3289
    %3426 = vmatpush1.bf16.msra.mxu0 %v3288
    %3427 = vmatprep.subr.bf16.mxu0 %v3291
    %3428 = vmatpush1.bf16.msra.mxu0 %v3290
    %3429 = vmatprep.subr.bf16.mxu0 %v3293
    %3430 = vmatpush1.bf16.msra.mxu0 %v3292
    %3431 = vmatprep.subr.bf16.mxu0 %v3295
    %3432 = vmatpush1.bf16.msra.mxu0 %v3294
    %3433 = vmatprep.subr.bf16.mxu0 %v3297
    %3434 = vmatpush1.bf16.msra.mxu0 %v3296
    %3435 = vmatprep.subr.bf16.mxu0 %v3299
    %3436 = vmatpush1.bf16.msra.mxu0 %v3298
    %3437 = vmatprep.subr.bf16.mxu0 %v3301
    %3438 = vmatpush1.bf16.msra.mxu0 %v3300
    %3439 = vmatprep.subr.bf16.mxu0 %v3303
    %3440 = vmatpush1.bf16.msra.mxu0 %v3302
    %3441 = vmatprep.subr.bf16.mxu0 %v3305
    %3442 = vmatpush1.bf16.msra.mxu0 %v3304
    %3443 = vmatprep.subr.bf16.mxu0 %v3307
    %3444 = vmatpush1.bf16.msra.mxu0 %v3306
    %3445 = vmatprep.subr.bf16.mxu0 %v3309
    %3446 = vmatpush1.bf16.msra.mxu0 %v3308
    %3447 = vmatprep.mubr.bf16.mxu0 %v2977
    %3448 = vmatmul.mubr.bf16.gmra.mrb[0].mxu0 %v2976
    %v3449 = vpop.f32.mrb[0].mxu0
    %v3450 = vadd.f32 %v3409, %v3449
    %v3451 = vpop.f32.mrb[0].mxu0
    %v3452 = vadd.f32 %v3411, %v3451
    %v3453 = vpop.f32.mrb[0].mxu0
    %v3454 = vpop.f32.mrb[0].mxu0
    %3455 = vdwg.mxu0
    %v3456 = vmax.f32 %v3450, 0.0
    %v3457 = vmax.f32 %v3452, 0.0
    %v3458 = vpack.c.bf16 %v3456, %v3456
    %v3459 = vpack.c.bf16 %v3457, %v3457
    %v3460 = vld [vmem:[#allocation8] sm:$0xf]
    %v3461 = vld [vmem:[#allocation8 + $0x4] sm:$0xf]
    %v3462 = vld [vmem:[#allocation8 + $0x8] sm:$0xf]
    %v3463 = vld [vmem:[#allocation8 + $0xc] sm:$0xf]
    %v3464 = vld [vmem:[#allocation8 + $0x10] sm:$0xf]
    %v3465 = vld [vmem:[#allocation8 + $0x14] sm:$0xf]
    %v3466 = vld [vmem:[#allocation8 + $0x18] sm:$0xf]
    %v3467 = vld [vmem:[#allocation8 + $0x1c] sm:$0xf]
    %v3468 = vld [vmem:[#allocation8 + $0x20] sm:$0xf]
    %v3469 = vld [vmem:[#allocation8 + $0x24] sm:$0xf]
    %v3470 = vld [vmem:[#allocation8 + $0x28] sm:$0xf]
    %v3471 = vld [vmem:[#allocation8 + $0x2c] sm:$0xf]
    %v3472 = vld [vmem:[#allocation8 + $0x30] sm:$0xf]
    %v3473 = vld [vmem:[#allocation8 + $0x34] sm:$0xf]
    %v3474 = vld [vmem:[#allocation8 + $0x38] sm:$0xf]
    %v3475 = vld [vmem:[#allocation8 + $0x3c] sm:$0xf]
    %v3476 = vld [vmem:[#allocation8 + $0x40] sm:$0xf]
    %v3477 = vld [vmem:[#allocation8 + $0x44] sm:$0xf]
    %v3478 = vld [vmem:[#allocation8 + $0x48] sm:$0xf]
    %v3479 = vld [vmem:[#allocation8 + $0x4c] sm:$0xf]
    %v3480 = vld [vmem:[#allocation8 + $0x50] sm:$0xf]
    %v3481 = vld [vmem:[#allocation8 + $0x54] sm:$0xf]
    %v3482 = vld [vmem:[#allocation8 + $0x58] sm:$0xf]
    %v3483 = vld [vmem:[#allocation8 + $0x5c] sm:$0xf]
    %v3484 = vld [vmem:[#allocation8 + $0x60] sm:$0xf]
    %v3485 = vld [vmem:[#allocation8 + $0x64] sm:$0xf]
    %v3486 = vld [vmem:[#allocation8 + $0x68] sm:$0xf]
    %v3487 = vld [vmem:[#allocation8 + $0x6c] sm:$0xf]
    %v3488 = vld [vmem:[#allocation8 + $0x70] sm:$0xf]
    %v3489 = vld [vmem:[#allocation8 + $0x74] sm:$0xf]
    %v3490 = vld [vmem:[#allocation8 + $0x78] sm:$0xf]
    %v3491 = vld [vmem:[#allocation8 + $0x7c] sm:$0xf]
    %v3492 = vld [vmem:[%s12] sm:$0x1]
    %v3494 = vlaneseq
    %v3495 = vshrl.u32 %v3494, 7
    %v3496 = vsub.s32 0, %v3495
    %v3497 = vrot.slane %v3492, %v3496
    %v3531 = vunpack.c.l.b16 %v3460
    %v3532 = vunpack.c.l.b16 %v3461
    %v3533 = vunpack.c.l.b16 %v3462
    %v3534 = vunpack.c.l.b16 %v3463
    %v3535 = vunpack.c.l.b16 %v3464
    %v3536 = vunpack.c.l.b16 %v3465
    %v3537 = vunpack.c.l.b16 %v3466
    %v3538 = vunpack.c.l.b16 %v3467
    %v3539 = vunpack.c.l.b16 %v3468
    %v3540 = vunpack.c.l.b16 %v3469
    %v3541 = vunpack.c.l.b16 %v3470
    %v3542 = vunpack.c.l.b16 %v3471
    %v3543 = vunpack.c.l.b16 %v3472
    %v3544 = vunpack.c.l.b16 %v3473
    %v3545 = vunpack.c.l.b16 %v3474
    %v3546 = vunpack.c.l.b16 %v3475
    %v3547 = vunpack.c.l.b16 %v3476
    %v3548 = vunpack.c.l.b16 %v3477
    %v3549 = vunpack.c.l.b16 %v3478
    %v3550 = vunpack.c.l.b16 %v3479
    %v3551 = vunpack.c.l.b16 %v3480
    %v3552 = vunpack.c.l.b16 %v3481
    %v3553 = vunpack.c.l.b16 %v3482
    %v3554 = vunpack.c.l.b16 %v3483
    %v3555 = vunpack.c.l.b16 %v3484
    %v3556 = vunpack.c.l.b16 %v3485
    %v3557 = vunpack.c.l.b16 %v3486
    %v3558 = vunpack.c.l.b16 %v3487
    %v3559 = vunpack.c.l.b16 %v3488
    %v3560 = vunpack.c.l.b16 %v3489
    %v3561 = vunpack.c.l.b16 %v3490
    %v3562 = vunpack.c.l.b16 %v3491
    %v3563 = vpack.c.b16 %v3532, %v3531
    %v3564 = vpack.c.b16 %v3534, %v3533
    %v3565 = vpack.c.b16 %v3536, %v3535
    %v3566 = vpack.c.b16 %v3538, %v3537
    %v3567 = vpack.c.b16 %v3540, %v3539
    %v3568 = vpack.c.b16 %v3542, %v3541
    %v3569 = vpack.c.b16 %v3544, %v3543
    %v3570 = vpack.c.b16 %v3546, %v3545
    %v3571 = vpack.c.b16 %v3548, %v3547
    %v3572 = vpack.c.b16 %v3550, %v3549
    %v3573 = vpack.c.b16 %v3552, %v3551
    %v3574 = vpack.c.b16 %v3554, %v3553
    %v3575 = vpack.c.b16 %v3556, %v3555
    %v3576 = vpack.c.b16 %v3558, %v3557
    %v3577 = vpack.c.b16 %v3560, %v3559
    %v3578 = vpack.c.b16 %v3562, %v3561
    %3595 = vmatprep.subr.bf16.mxu0 0
    %3596 = vmatpush1.bf16.msra.mxu0 %v3563
    %3597 = vmatprep.subr.bf16.mxu0 0
    %3598 = vmatpush1.bf16.msra.mxu0 %v3564
    %3599 = vmatprep.subr.bf16.mxu0 0
    %3600 = vmatpush1.bf16.msra.mxu0 %v3565
    %3601 = vmatprep.subr.bf16.mxu0 0
    %3602 = vmatpush1.bf16.msra.mxu0 %v3566
    %3603 = vmatprep.subr.bf16.mxu0 0
    %3604 = vmatpush1.bf16.msra.mxu0 %v3567
    %3605 = vmatprep.subr.bf16.mxu0 0
    %3606 = vmatpush1.bf16.msra.mxu0 %v3568
    %3607 = vmatprep.subr.bf16.mxu0 0
    %3608 = vmatpush1.bf16.msra.mxu0 %v3569
    %3609 = vmatprep.subr.bf16.mxu0 0
    %3610 = vmatpush1.bf16.msra.mxu0 %v3570
    %3611 = vmatprep.subr.bf16.mxu0 0
    %3612 = vmatpush1.bf16.msra.mxu0 %v3571
    %3613 = vmatprep.subr.bf16.mxu0 0
    %3614 = vmatpush1.bf16.msra.mxu0 %v3572
    %3615 = vmatprep.subr.bf16.mxu0 0
    %3616 = vmatpush1.bf16.msra.mxu0 %v3573
    %3617 = vmatprep.subr.bf16.mxu0 0
    %3618 = vmatpush1.bf16.msra.mxu0 %v3574
    %3619 = vmatprep.subr.bf16.mxu0 0
    %3620 = vmatpush1.bf16.msra.mxu0 %v3575
    %3621 = vmatprep.subr.bf16.mxu0 0
    %3622 = vmatpush1.bf16.msra.mxu0 %v3576
    %3623 = vmatprep.subr.bf16.mxu0 0
    %3624 = vmatpush1.bf16.msra.mxu0 %v3577
    %3625 = vmatprep.subr.bf16.mxu0 0
    %3626 = vmatpush1.bf16.msra.mxu0 %v3578
    %3627 = vmatprep.mubr.bf16.mxu0 %v3459
    %3628 = vmatmul.mubr.bf16.gmra.mrb[0].mxu0 %v3458
    %v3629 = vpop.f32.mrb[0].mxu0
    %v3630 = vadd.f32 %v3497, %v3629
    %v3631 = vpop.f32.mrb[0].mxu0
    %v3632 = vpop.f32.mrb[0].mxu0
    %v3633 = vpop.f32.mrb[0].mxu0
    %3634 = vdwg.mxu0
    %v3635 = vld [vmem:[%s13] sm:$0x1]
    %v3637 = vlaneseq
    %v3638 = vshrl.u32 %v3637, 7
    %v3639 = vsub.s32 0, %v3638
    %v3640 = vrot.slane %v3635, %v3639
    %v3642 = vadd.f32 %v3630, %v3640
    %3643 = vst [vmem:[#allocation10] sm:$0x3] %v3642
    // Predicated region
    $region74: #{tpu_custom_call.1} parent=1 // pred_check
      _
    $region75: #{tpu_custom_call.1} parent=1 // pred_check_branch
      %3645 = sbr.rel (0) target = $region77
    $region76: #{tpu_custom_call.1} parent=1 // pred_region
      %s3647 = ssub.s32 32, 32
      %3648 = vsyncadd [#allocation4], %s3647
      %s3650 = sshll.u32 [#allocation10], 4
      %s3651 = int_to_ptr.vmem [resolvable:$true] %s3650
      %3653 = dma.vmem_to_hbm [thread:$0]  %s3651, 32, %s14, [#allocation4]
    $region77: #{tpu_custom_call.1} parent=1 // pred_fallthru
      _
    // Predicated region
    $region78: #{tpu_custom_call.1} parent=1 // pred_check
      _
    $region79: #{tpu_custom_call.1} parent=1 // pred_check_branch
      %3655 = sbr.rel (0) target = $region81
    $region80: #{tpu_custom_call.1} parent=1 // pred_region
      %3656 = dma.done [#allocation4], 32
    $region81: #{tpu_custom_call.1} parent=1 // pred_fallthru
      _
    %3657 = vsyncpa [#allocation3], 1
    %3658 = vsyncpa [#allocation6], 1
    %3659 = vsyncpa [#allocation9], 1
    %3660 = vsyncpa [#allocation4], 1

</llo_original>
